<compile_context>
chip_gen: v7x
topology: tpu7x:2x2x1
jax: 0.10.0
libtpu: 0.0.40
codegen_flags: <defaults>
</compile_context>

<pallas_src>
import functools

import numpy as np

import jax
import jax.numpy as jnp
from jax import lax
from jax.experimental import pallas as pl
from jax.experimental.pallas import tpu as pltpu


PSP_SIZES = (1, 3, 6, 8)
_BN_EPS = 1e-5
_VMEM_LIMIT = 48 * 1024 * 1024  # leaves headroom under v7x's 64 MiB physical VMEM


# ----------------------------------------------------------------------------
# PSP (adaptive avg pool over sizes (1,3,6,8)) expressed as a pooling matrix.
# Returns P^T of shape (S_pad, H*W); row k averages the pixels of pooled bin k.
# Rows [S_real:S_pad) are zero padding (masked out of the softmax in-kernel).
# ----------------------------------------------------------------------------
def psp_pool_matrix_t(H, W, sizes=PSP_SIZES):
    rows = []
    for s in sizes:
        for i in range(s):
            hs, he = (i * H) // s, ((i + 1) * H + s - 1) // s
            for j in range(s):
                ws, we = (j * W) // s, ((j + 1) * W + s - 1) // s
                m = np.zeros((H, W), np.float32)
                m[hs:he, ws:we] = 1.0 / float((he - hs) * (we - ws))
                rows.append(m.reshape(-1))
    pt = np.stack(rows, axis=0)                       # (S, H*W)
    s_real = pt.shape[0]                              # 110 for (1,3,6,8)
    s_pad = max(128, ((s_real + 127) // 128) * 128)   # lane-dense padded size
    if s_pad > s_real:
        pt = np.concatenate(
            [pt, np.zeros((s_pad - s_real, H * W), np.float32)], axis=0)
    return jnp.asarray(pt), s_real, s_pad


def _pick_row_tile(hw):
    # prefer >=2 tiles so both TensorCores on a megacore part get work even at B=1
    for t in (512, 256, 128, 64, 32, 16, 8):
        if hw % t == 0 and hw // t >= 2:
            return t
    return hw


# ----------------------------------------------------------------------------
# Kernel 1: key / value 1x1 convs (BN folded) + PSP pooling, one batch per step.
# Emits concatenated img|lang pooled keys and values in bf16.
# ----------------------------------------------------------------------------
def psp_project_kernel(xi_ref, xl_ref, pt_ref,
                       wki_ref, bki_ref, wkl_ref, bkl_ref,
                       wvi_ref, bvi_ref, wvl_ref, bvl_ref,
                       kcat_ref, vcat_ref):
    f32 = jnp.float32
    xi = xi_ref[0]                     # (HW, C)
    xl = xl_ref[0]                     # (HW, C)
    pt = pt_ref[...]                   # (S_pad, HW)  (P^T, pre-transposed constant)

    # 1x1 convs as fat matmuls over the whole batch-row block (M = HW).
    ki = jnp.maximum(jnp.dot(xi, wki_ref[...], preferred_element_type=f32)
                     + bki_ref[...], 0.0)             # key_img  (HW, Ck)
    kl = jnp.maximum(jnp.dot(xl, wkl_ref[...], preferred_element_type=f32)
                     + bkl_ref[...], 0.0)             # key_lang (HW, Ck)
    vi = jnp.dot(xi, wvi_ref[...], preferred_element_type=f32) + bvi_ref[...]
    vl = jnp.dot(xl, wvl_ref[...], preferred_element_type=f32) + bvl_ref[...]

    # Concatenate img|lang along channels -> one wide pooling matmul each.
    kcat = jnp.concatenate([ki, kl], axis=-1)         # (HW, 2*Ck)
    vcat = jnp.concatenate([vi, vl], axis=-1)         # (HW, 2*Cv)

    # PSP pooling = P^T @ feature (no in-kernel transposes; P^T is a constant).
    kcat_ref[0] = jnp.dot(pt, kcat, preferred_element_type=f32).astype(kcat_ref.dtype)
    vcat_ref[0] = jnp.dot(pt, vcat, preferred_element_type=f32).astype(vcat_ref.dtype)


# ----------------------------------------------------------------------------
# Kernel 2: query 1x1 convs + fused co-attention + output 1x1 convs,
#           one (batch, HW-row-tile) per grid step.
# ----------------------------------------------------------------------------
def make_attention_kernel(s_real, inv_sqrt_key, cv):
    bf16 = jnp.bfloat16

    def kernel(xi_ref, xl_ref, kcat_ref, vcat_ref,
               wqi_ref, bqi_ref, wql_ref, bql_ref,
               woi_ref, boi_ref, wol_ref, bol_ref,
               ocat_ref):
        f32 = jnp.float32
        xi = xi_ref[0]                 # (tm, C)
        xl = xl_ref[0]

        # query projections (conv1x1 + folded BN + ReLU), f32
        qi = jnp.maximum(jnp.dot(xi, wqi_ref[...], preferred_element_type=f32)
                         + bqi_ref[...], 0.0)         # (tm, Ck)
        ql = jnp.maximum(jnp.dot(xl, wql_ref[...], preferred_element_type=f32)
                         + bql_ref[...], 0.0)

        # sim_map = scale * (q_img @ k_img^T + q_lang @ k_lang^T)
        #         = scale * ([q_img | q_lang] @ [k_img | k_lang]^T)    (one matmul)
        qcat = jnp.concatenate([qi, ql], axis=-1).astype(bf16)   # (tm, 2*Ck)
        dn = (((1,), (1,)), ((), ()))                            # contract channels
        sim = lax.dot_general(qcat, kcat_ref[0], dn,
                              preferred_element_type=f32) * inv_sqrt_key  # (tm,S_pad)

        # mask the padded PSP slots, then softmax over the last (lane) axis
        col = lax.broadcasted_iota(jnp.int32, sim.shape, 1)
        sim = jnp.where(col < s_real, sim, -1e30)
        m = jnp.max(sim, axis=-1, keepdims=True)
        e = jnp.exp(sim - m)
        p = (e * pl.reciprocal(jnp.sum(e, axis=-1, keepdims=True),
                               approx=True)).astype(bf16)

        # one context matmul producing [ctx_img | ctx_lang]   (tm, 2*Cv)
        ctx = jnp.dot(p, vcat_ref[0], preferred_element_type=f32)
        ci = ctx[:, :cv]
        cl = ctx[:, cv:]

        # output 1x1 convs (W_img / W_lang), stored as one lane-dense block
        oi = jnp.dot(ci, woi_ref[...], preferred_element_type=f32) + boi_ref[...]
        ol = jnp.dot(cl, wol_ref[...], preferred_element_type=f32) + bol_ref[...]
        ocat_ref[0] = jnp.concatenate([oi, ol], axis=-1).astype(ocat_ref.dtype)

    return kernel


# ----------------------------------------------------------------------------
# Full ACM forward (wrapper: NCHW <-> channels-last glue only)
# ----------------------------------------------------------------------------
def acm_forward(img_feats, lang_feats, params, key_channels, psp_sizes=PSP_SIZES):
    B, C, H, W = img_feats.shape
    HW = H * W
    x_img = jnp.transpose(img_feats, (0, 2, 3, 1)).reshape(B, HW, C)
    x_lang = jnp.transpose(lang_feats, (0, 2, 3, 1)).reshape(B, HW, C)

    pt, s_real, s_pad = psp_pool_matrix_t(H, W, psp_sizes)
    ck = params["wk_img"].shape[1]
    cv = params["wv_img"].shape[1]
    cout = params["wo_img"].shape[1]

    # ---- kernel 1: key/value projections + PSP pooling -----------------------
    kv_dtype = jnp.bfloat16
    kp_cat, vp_cat = pl.pallas_call(
        psp_project_kernel,
        out_shape=(jax.ShapeDtypeStruct((B, s_pad, 2 * ck), kv_dtype),
                   jax.ShapeDtypeStruct((B, s_pad, 2 * cv), kv_dtype)),
        grid_spec=pltpu.PrefetchScalarGridSpec(
            num_scalar_prefetch=0,
            grid=(B,),
            in_specs=[
                pl.BlockSpec((1, HW, C), lambda b: (b, 0, 0)),
                pl.BlockSpec((1, HW, C), lambda b: (b, 0, 0)),
                pl.BlockSpec((s_pad, HW), lambda b: (0, 0)),
                pl.BlockSpec((C, ck), lambda b: (0, 0)),
                pl.BlockSpec((1, ck), lambda b: (0, 0)),
                pl.BlockSpec((C, ck), lambda b: (0, 0)),
                pl.BlockSpec((1, ck), lambda b: (0, 0)),
                pl.BlockSpec((C, cv), lambda b: (0, 0)),
                pl.BlockSpec((1, cv), lambda b: (0, 0)),
                pl.BlockSpec((C, cv), lambda b: (0, 0)),
                pl.BlockSpec((1, cv), lambda b: (0, 0)),
            ],
            out_specs=[
                pl.BlockSpec((1, s_pad, 2 * ck), lambda b: (b, 0, 0)),
                pl.BlockSpec((1, s_pad, 2 * cv), lambda b: (b, 0, 0)),
            ],
        ),
        compiler_params=pltpu.CompilerParams(
            dimension_semantics=("parallel",),
            vmem_limit_bytes=_VMEM_LIMIT),
    )(x_img, x_lang, pt,
      params["wk_img"], params["bk_img"], params["wk_lang"], params["bk_lang"],
      params["wv_img"], params["bv_img"], params["wv_lang"], params["bv_lang"])

    # ---- kernel 2: query projection + co-attention + output convs ------------
    tm = _pick_row_tile(HW)
    attn_kernel = make_attention_kernel(s_real, float(key_channels) ** (-0.5), cv)
    out_cat = pl.pallas_call(
        attn_kernel,
        out_shape=jax.ShapeDtypeStruct((B, HW, 2 * cout), jnp.float32),
        grid_spec=pltpu.PrefetchScalarGridSpec(
            num_scalar_prefetch=0,
            grid=(B, HW // tm),
            in_specs=[
                pl.BlockSpec((1, tm, C), lambda b, m: (b, m, 0)),
                pl.BlockSpec((1, tm, C), lambda b, m: (b, m, 0)),
                pl.BlockSpec((1, s_pad, 2 * ck), lambda b, m: (b, 0, 0)),
                pl.BlockSpec((1, s_pad, 2 * cv), lambda b, m: (b, 0, 0)),
                pl.BlockSpec((C, ck), lambda b, m: (0, 0)),
                pl.BlockSpec((1, ck), lambda b, m: (0, 0)),
                pl.BlockSpec((C, ck), lambda b, m: (0, 0)),
                pl.BlockSpec((1, ck), lambda b, m: (0, 0)),
                pl.BlockSpec((cv, cout), lambda b, m: (0, 0)),
                pl.BlockSpec((1, cout), lambda b, m: (0, 0)),
                pl.BlockSpec((cv, cout), lambda b, m: (0, 0)),
                pl.BlockSpec((1, cout), lambda b, m: (0, 0)),
            ],
            out_specs=pl.BlockSpec((1, tm, 2 * cout), lambda b, m: (b, m, 0)),
        ),
        compiler_params=pltpu.CompilerParams(
            dimension_semantics=("parallel", "parallel"),
            vmem_limit_bytes=_VMEM_LIMIT),
    )(x_img, x_lang, kp_cat, vp_cat,
      params["wq_img"], params["bq_img"], params["wq_lang"], params["bq_lang"],
      params["wo_img"], params["bo_img"], params["wo_lang"], params["bo_lang"])

    out_img = jnp.transpose(out_cat[..., :cout].reshape(B, H, W, cout), (0, 3, 1, 2))
    out_lang = jnp.transpose(out_cat[..., cout:].reshape(B, H, W, cout), (0, 3, 1, 2))
    return out_img, out_lang


# ----------------------------------------------------------------------------
# Parameter init (torch-style shapes) + BN folding into channels-last weights
# ----------------------------------------------------------------------------
def init_params(key, c_low, c_high, ck, cv, cout, eps=_BN_EPS):
    ks = list(jax.random.split(key, 40))

    def nk():
        return ks.pop()

    def conv(cin, cout_):
        w = jax.random.normal(nk(), (cout_, cin), jnp.float32) / np.sqrt(cin)
        b = 0.1 * jax.random.normal(nk(), (cout_,), jnp.float32)
        return w, b

    def bn(c):
        gamma = 1.0 + 0.2 * jax.random.normal(nk(), (c,), jnp.float32)
        beta = 0.1 * jax.random.normal(nk(), (c,), jnp.float32)
        mean = 0.1 * jax.random.normal(nk(), (c,), jnp.float32)
        var = 0.5 + jax.random.uniform(nk(), (c,), jnp.float32)
        return gamma, beta, mean, var

    tw = {}
    tw["wk_img"], tw["bk_img"] = conv(c_low, ck);   tw["bn_k_img"] = bn(ck)
    tw["wk_lang"], tw["bk_lang"] = conv(c_low, ck); tw["bn_k_lang"] = bn(ck)
    tw["wq_img"], tw["bq_img"] = conv(c_high, ck);  tw["bn_q_img"] = bn(ck)
    tw["wq_lang"], tw["bq_lang"] = conv(c_high, ck); tw["bn_q_lang"] = bn(ck)
    tw["wv_img"], tw["bv_img"] = conv(c_low, cv)
    tw["wv_lang"], tw["bv_lang"] = conv(c_low, cv)
    tw["wo_img"], tw["bo_img"] = conv(cv, cout)
    tw["wo_lang"], tw["bo_lang"] = conv(cv, cout)

    def fold(w, b, bnp):
        gamma, beta, mean, var = bnp
        s = gamma / jnp.sqrt(var + eps)
        wf = (w * s[:, None]).T            # (cin, cout)
        bf = ((b - mean) * s + beta)[None, :]
        return wf, bf

    p = {}
    p["wk_img"], p["bk_img"] = fold(tw["wk_img"], tw["bk_img"], tw["bn_k_img"])
    p["wk_lang"], p["bk_lang"] = fold(tw["wk_lang"], tw["bk_lang"], tw["bn_k_lang"])
    p["wq_img"], p["bq_img"] = fold(tw["wq_img"], tw["bq_img"], tw["bn_q_img"])
    p["wq_lang"], p["bq_lang"] = fold(tw["wq_lang"], tw["bq_lang"], tw["bn_q_lang"])
    p["wv_img"], p["bv_img"] = tw["wv_img"].T, tw["bv_img"][None, :]
    p["wv_lang"], p["bv_lang"] = tw["wv_lang"].T, tw["bv_lang"][None, :]
    p["wo_img"], p["bo_img"] = tw["wo_img"].T, tw["bo_img"][None, :]
    p["wo_lang"], p["bo_lang"] = tw["wo_lang"].T, tw["bo_lang"][None, :]
    return p, tw


# ----------------------------------------------------------------------------
# Pure numpy reference replicating the PyTorch forward (inference-mode BN)
# ----------------------------------------------------------------------------
def acm_reference(img, lang, tw, key_channels, psp_sizes=PSP_SIZES, eps=_BN_EPS):
    img = np.asarray(img, np.float32)
    lang = np.asarray(lang, np.float32)
    B, C, H, W = img.shape

    def conv1x1(x, w, b):
        return (np.einsum("oc,bchw->bohw", np.asarray(w), x)
                + np.asarray(b)[None, :, None, None])

    def bn(x, bnp):
        g, bt, m, v = (np.asarray(t) for t in bnp)
        return (g[None, :, None, None] * (x - m[None, :, None, None])
                / np.sqrt(v[None, :, None, None] + eps) + bt[None, :, None, None])

    def relu(x):
        return np.maximum(x, 0.0)

    def psp(x):
        b_, c_, h_, w_ = x.shape
        outs = []
        for s in psp_sizes:
            o = np.zeros((b_, c_, s, s), np.float32)
            for i in range(s):
                hs, he = (i * h_) // s, ((i + 1) * h_ + s - 1) // s
                for j in range(s):
                    ws, we = (j * w_) // s, ((j + 1) * w_ + s - 1) // s
                    o[:, :, i, j] = x[:, :, hs:he, ws:we].mean(axis=(2, 3))
            outs.append(o.reshape(b_, c_, -1))
        return np.concatenate(outs, axis=-1)          # (B, C, S)

    value_img = np.transpose(psp(conv1x1(img, tw["wv_img"], tw["bv_img"])), (0, 2, 1))
    value_lang = np.transpose(psp(conv1x1(lang, tw["wv_lang"], tw["bv_lang"])), (0, 2, 1))

    q_img = relu(bn(conv1x1(img, tw["wq_img"], tw["bq_img"]), tw["bn_q_img"]))
    q_img = q_img.reshape(B, -1, H * W).transpose(0, 2, 1)
    q_lang = relu(bn(conv1x1(lang, tw["wq_lang"], tw["bq_lang"]), tw["bn_q_lang"]))
    q_lang = q_lang.reshape(B, -1, H * W).transpose(0, 2, 1)

    k_img = psp(relu(bn(conv1x1(img, tw["wk_img"], tw["bk_img"]), tw["bn_k_img"])))
    k_lang = psp(relu(bn(conv1x1(lang, tw["wk_lang"], tw["bk_lang"]), tw["bn_k_lang"])))

    scale = key_channels ** (-0.5)
    sim = scale * np.matmul(q_img, k_img) + scale * np.matmul(q_lang, k_lang)
    sim = sim - sim.max(axis=-1, keepdims=True)
    e = np.exp(sim)
    sm = e / e.sum(axis=-1, keepdims=True)

    ctx_img = np.matmul(sm, value_img).transpose(0, 2, 1).reshape(B, -1, H, W)
    ctx_lang = np.matmul(sm, value_lang).transpose(0, 2, 1).reshape(B, -1, H, W)
    out_img = conv1x1(ctx_img, tw["wo_img"], tw["bo_img"])
    out_lang = conv1x1(ctx_lang, tw["wo_lang"], tw["bo_lang"])
    return out_img, out_lang


if __name__ == "__main__":
    # Small shapes consistent with the module (low_in == high_in so the forward
    # type-checks, as in CEFNet usage).
    B, C_LOW, C_HIGH = 2, 64, 64
    CK, CV, COUT = 32, 64, 64
    H = W = 16

    key = jax.random.PRNGKey(0)
    kp, ki, kl = jax.random.split(key, 3)
    params, torch_style = init_params(kp, C_LOW, C_HIGH, CK, CV, COUT)
    img_feats = jax.random.normal(ki, (B, C_LOW, H, W), jnp.float32)
    lang_feats = jax.random.normal(kl, (B, C_LOW, H, W), jnp.float32)

    fwd = jax.jit(functools.partial(acm_forward, key_channels=CK))
    out_img, out_lang = fwd(img_feats, lang_feats, params)
    out_img = jax.block_until_ready(out_img)
    out_lang = jax.block_until_ready(out_lang)

    ref_img, ref_lang = acm_reference(img_feats, lang_feats, torch_style, CK)

    assert out_img.shape == (B, COUT, H, W)
    assert out_lang.shape == (B, COUT, H, W)

    def check(a, b, name):
        a = np.asarray(a)
        b = np.asarray(b)
        err = float(np.max(np.abs(a - b)))
        scale = float(np.max(np.abs(b))) + 1e-6
        assert err <= 3e-2 * scale, f"{name}: relative error {err / scale:.5f}"

    check(out_img, ref_img, "context_img")
    check(out_lang, ref_lang, "context_lang")

    print("KERNEL_OK")
</pallas_src>

<mosaic_0001>
module attributes {stable_mosaic.version = 11 : i64} {
  func.func @psp_project_kernel(%arg0: i32, %arg1: memref<1x256x64xf32, #tpu.memory_space<vmem>>, %arg2: memref<1x256x64xf32, #tpu.memory_space<vmem>>, %arg3: memref<128x256xf32, #tpu.memory_space<vmem>>, %arg4: memref<64x32xf32, #tpu.memory_space<vmem>>, %arg5: memref<1x32xf32, #tpu.memory_space<vmem>>, %arg6: memref<64x32xf32, #tpu.memory_space<vmem>>, %arg7: memref<1x32xf32, #tpu.memory_space<vmem>>, %arg8: memref<64x64xf32, #tpu.memory_space<vmem>>, %arg9: memref<1x64xf32, #tpu.memory_space<vmem>>, %arg10: memref<64x64xf32, #tpu.memory_space<vmem>>, %arg11: memref<1x64xf32, #tpu.memory_space<vmem>>, %arg12: memref<1x128x64xbf16, #tpu.memory_space<vmem>>, %arg13: memref<1x128x128xbf16, #tpu.memory_space<vmem>>) attributes {dimension_semantics = [#tpu.dimension_semantics<parallel>], iteration_bounds = array<i64: 2>, scalar_prefetch = 0 : i64, scratch_operands = 0 : i64, tpu.core_type = #tpu.core_type<tc>, window_params = [{transform_indices = @transform_0, window_bounds = array<i64: 1, 256, 64>}, {transform_indices = @transform_1, window_bounds = array<i64: 1, 256, 64>}, {pipeline_mode = #tpu.pipeline_mode<synchronous>, transform_indices = @transform_2, window_bounds = array<i64: 128, 256>}, {pipeline_mode = #tpu.pipeline_mode<synchronous>, transform_indices = @transform_3, window_bounds = array<i64: 64, 32>}, {pipeline_mode = #tpu.pipeline_mode<synchronous>, transform_indices = @transform_4, window_bounds = array<i64: 1, 32>}, {pipeline_mode = #tpu.pipeline_mode<synchronous>, transform_indices = @transform_5, window_bounds = array<i64: 64, 32>}, {pipeline_mode = #tpu.pipeline_mode<synchronous>, transform_indices = @transform_6, window_bounds = array<i64: 1, 32>}, {pipeline_mode = #tpu.pipeline_mode<synchronous>, transform_indices = @transform_7, window_bounds = array<i64: 64, 64>}, {pipeline_mode = #tpu.pipeline_mode<synchronous>, transform_indices = @transform_8, window_bounds = array<i64: 1, 64>}, {pipeline_mode = #tpu.pipeline_mode<synchronous>, transform_indices = @transform_9, window_bounds = array<i64: 64, 64>}, {pipeline_mode = #tpu.pipeline_mode<synchronous>, transform_indices = @transform_10, window_bounds = array<i64: 1, 64>}, {transform_indices = @transform_11, window_bounds = array<i64: 1, 128, 64>}, {transform_indices = @transform_12, window_bounds = array<i64: 1, 128, 128>}]} {
    %c0 = arith.constant 0 : index
    %c0_0 = arith.constant 0 : index
    %c0_1 = arith.constant 0 : index
    %0 = vector.load %arg1[%c0, %c0_0, %c0_1] : memref<1x256x64xf32, #tpu.memory_space<vmem>>, vector<1x256x64xf32>
    %1 = vector.shape_cast %0 : vector<1x256x64xf32> to vector<256x64xf32>
    %c0_2 = arith.constant 0 : index
    %c0_3 = arith.constant 0 : index
    %c0_4 = arith.constant 0 : index
    %2 = vector.load %arg2[%c0_2, %c0_3, %c0_4] : memref<1x256x64xf32, #tpu.memory_space<vmem>>, vector<1x256x64xf32>
    %3 = vector.shape_cast %2 : vector<1x256x64xf32> to vector<256x64xf32>
    %c0_5 = arith.constant 0 : index
    %c0_6 = arith.constant 0 : index
    %4 = vector.load %arg3[%c0_5, %c0_6] : memref<128x256xf32, #tpu.memory_space<vmem>>, vector<128x256xf32>
    %c0_7 = arith.constant 0 : index
    %c0_8 = arith.constant 0 : index
    %5 = vector.load %arg4[%c0_7, %c0_8] : memref<64x32xf32, #tpu.memory_space<vmem>>, vector<64x32xf32>
    %cst = arith.constant dense<0.000000e+00> : vector<256x32xf32>
    %6 = tpu.matmul %1, %5, %cst {dimension_numbers = #tpu.dot_dimension_numbers<[1], [0], [0], [1], [0, 0, 1, 1], [], []>} : vector<256x64xf32>, vector<64x32xf32>, vector<256x32xf32> -> vector<256x32xf32>
    %c0_9 = arith.constant 0 : index
    %c0_10 = arith.constant 0 : index
    %7 = vector.load %arg5[%c0_9, %c0_10] : memref<1x32xf32, #tpu.memory_space<vmem>>, vector<1x32xf32>
    %8 = vector.broadcast %7 : vector<1x32xf32> to vector<256x32xf32>
    %9 = arith.addf %6, %8 : vector<256x32xf32>
    %cst_11 = arith.constant 0.000000e+00 : f32
    %10 = vector.broadcast %cst_11 : f32 to vector<256x32xf32>
    %11 = arith.maximumf %9, %10 : vector<256x32xf32>
    %c0_12 = arith.constant 0 : index
    %c0_13 = arith.constant 0 : index
    %12 = vector.load %arg6[%c0_12, %c0_13] : memref<64x32xf32, #tpu.memory_space<vmem>>, vector<64x32xf32>
    %cst_14 = arith.constant dense<0.000000e+00> : vector<256x32xf32>
    %13 = tpu.matmul %3, %12, %cst_14 {dimension_numbers = #tpu.dot_dimension_numbers<[1], [0], [0], [1], [0, 0, 1, 1], [], []>} : vector<256x64xf32>, vector<64x32xf32>, vector<256x32xf32> -> vector<256x32xf32>
    %c0_15 = arith.constant 0 : index
    %c0_16 = arith.constant 0 : index
    %14 = vector.load %arg7[%c0_15, %c0_16] : memref<1x32xf32, #tpu.memory_space<vmem>>, vector<1x32xf32>
    %15 = vector.broadcast %14 : vector<1x32xf32> to vector<256x32xf32>
    %16 = arith.addf %13, %15 : vector<256x32xf32>
    %cst_17 = arith.constant 0.000000e+00 : f32
    %17 = vector.broadcast %cst_17 : f32 to vector<256x32xf32>
    %18 = arith.maximumf %16, %17 : vector<256x32xf32>
    %c0_18 = arith.constant 0 : index
    %c0_19 = arith.constant 0 : index
    %19 = vector.load %arg8[%c0_18, %c0_19] : memref<64x64xf32, #tpu.memory_space<vmem>>, vector<64x64xf32>
    %cst_20 = arith.constant dense<0.000000e+00> : vector<256x64xf32>
    %20 = tpu.matmul %1, %19, %cst_20 {dimension_numbers = #tpu.dot_dimension_numbers<[1], [0], [0], [1], [0, 0, 1, 1], [], []>} : vector<256x64xf32>, vector<64x64xf32>, vector<256x64xf32> -> vector<256x64xf32>
    %c0_21 = arith.constant 0 : index
    %c0_22 = arith.constant 0 : index
    %21 = vector.load %arg9[%c0_21, %c0_22] : memref<1x64xf32, #tpu.memory_space<vmem>>, vector<1x64xf32>
    %22 = vector.broadcast %21 : vector<1x64xf32> to vector<256x64xf32>
    %23 = arith.addf %20, %22 : vector<256x64xf32>
    %c0_23 = arith.constant 0 : index
    %c0_24 = arith.constant 0 : index
    %24 = vector.load %arg10[%c0_23, %c0_24] : memref<64x64xf32, #tpu.memory_space<vmem>>, vector<64x64xf32>
    %cst_25 = arith.constant dense<0.000000e+00> : vector<256x64xf32>
    %25 = tpu.matmul %3, %24, %cst_25 {dimension_numbers = #tpu.dot_dimension_numbers<[1], [0], [0], [1], [0, 0, 1, 1], [], []>} : vector<256x64xf32>, vector<64x64xf32>, vector<256x64xf32> -> vector<256x64xf32>
    %c0_26 = arith.constant 0 : index
    %c0_27 = arith.constant 0 : index
    %26 = vector.load %arg11[%c0_26, %c0_27] : memref<1x64xf32, #tpu.memory_space<vmem>>, vector<1x64xf32>
    %27 = vector.broadcast %26 : vector<1x64xf32> to vector<256x64xf32>
    %28 = arith.addf %25, %27 : vector<256x64xf32>
    %29 = tpu.concatenate %11, %18 in 1 : vector<256x32xf32>, vector<256x32xf32> -> vector<256x64xf32>
    %30 = tpu.concatenate %23, %28 in 1 : vector<256x64xf32>, vector<256x64xf32> -> vector<256x128xf32>
    %cst_28 = arith.constant dense<0.000000e+00> : vector<128x64xf32>
    %31 = tpu.matmul %4, %29, %cst_28 {dimension_numbers = #tpu.dot_dimension_numbers<[1], [0], [0], [1], [0, 0, 1, 1], [], []>} : vector<128x256xf32>, vector<256x64xf32>, vector<128x64xf32> -> vector<128x64xf32>
    %32 = arith.truncf %31 : vector<128x64xf32> to vector<128x64xbf16>
    %c0_29 = arith.constant 0 : index
    %c0_30 = arith.constant 0 : index
    %c0_31 = arith.constant 0 : index
    %33 = vector.load %arg12[%c0_29, %c0_30, %c0_31] : memref<1x128x64xbf16, #tpu.memory_space<vmem>>, vector<1x128x64xbf16>
    %34 = vector.shape_cast %33 : vector<1x128x64xbf16> to vector<128x64xbf16>
    %35 = vector.shape_cast %32 : vector<128x64xbf16> to vector<1x128x64xbf16>
    tpu.vector_store %arg12[%c0_29, %c0_30, %c0_31], %35 {strides = array<i32>} : memref<1x128x64xbf16, #tpu.memory_space<vmem>>, vector<1x128x64xbf16>,
    %cst_32 = arith.constant dense<0.000000e+00> : vector<128x128xf32>
    %36 = tpu.matmul %4, %30, %cst_32 {dimension_numbers = #tpu.dot_dimension_numbers<[1], [0], [0], [1], [0, 0, 1, 1], [], []>} : vector<128x256xf32>, vector<256x128xf32>, vector<128x128xf32> -> vector<128x128xf32>
    %37 = arith.truncf %36 : vector<128x128xf32> to vector<128x128xbf16>
    %c0_33 = arith.constant 0 : index
    %c0_34 = arith.constant 0 : index
    %c0_35 = arith.constant 0 : index
    %38 = vector.load %arg13[%c0_33, %c0_34, %c0_35] : memref<1x128x128xbf16, #tpu.memory_space<vmem>>, vector<1x128x128xbf16>
    %39 = vector.shape_cast %38 : vector<1x128x128xbf16> to vector<128x128xbf16>
    %40 = vector.shape_cast %37 : vector<128x128xbf16> to vector<1x128x128xbf16>
    tpu.vector_store %arg13[%c0_33, %c0_34, %c0_35], %40 {strides = array<i32>} : memref<1x128x128xbf16, #tpu.memory_space<vmem>>, vector<1x128x128xbf16>,
    return
  }
  func.func @transform_0(%arg0: i32) -> (i32, i32, i32) {
    %c0_i32 = arith.constant 0 : i32
    %c0_i32_0 = arith.constant 0 : i32
    %c0_i32_1 = arith.constant 0 : i32
    return %arg0, %c0_i32, %c0_i32_0 : i32, i32, i32
  }
  func.func @transform_1(%arg0: i32) -> (i32, i32, i32) {
    %c0_i32 = arith.constant 0 : i32
    %c0_i32_0 = arith.constant 0 : i32
    %c0_i32_1 = arith.constant 0 : i32
    return %arg0, %c0_i32, %c0_i32_0 : i32, i32, i32
  }
  func.func @transform_2(%arg0: i32) -> (i32, i32) {
    %c0_i32 = arith.constant 0 : i32
    %c0_i32_0 = arith.constant 0 : i32
    %c0_i32_1 = arith.constant 0 : i32
    return %c0_i32, %c0_i32_0 : i32, i32
  }
  func.func @transform_3(%arg0: i32) -> (i32, i32) {
    %c0_i32 = arith.constant 0 : i32
    %c0_i32_0 = arith.constant 0 : i32
    %c0_i32_1 = arith.constant 0 : i32
    return %c0_i32, %c0_i32_0 : i32, i32
  }
  func.func @transform_4(%arg0: i32) -> (i32, i32) {
    %c0_i32 = arith.constant 0 : i32
    %c0_i32_0 = arith.constant 0 : i32
    %c0_i32_1 = arith.constant 0 : i32
    return %c0_i32, %c0_i32_0 : i32, i32
  }
  func.func @transform_5(%arg0: i32) -> (i32, i32) {
    %c0_i32 = arith.constant 0 : i32
    %c0_i32_0 = arith.constant 0 : i32
    %c0_i32_1 = arith.constant 0 : i32
    return %c0_i32, %c0_i32_0 : i32, i32
  }
  func.func @transform_6(%arg0: i32) -> (i32, i32) {
    %c0_i32 = arith.constant 0 : i32
    %c0_i32_0 = arith.constant 0 : i32
    %c0_i32_1 = arith.constant 0 : i32
    return %c0_i32, %c0_i32_0 : i32, i32
  }
  func.func @transform_7(%arg0: i32) -> (i32, i32) {
    %c0_i32 = arith.constant 0 : i32
    %c0_i32_0 = arith.constant 0 : i32
    %c0_i32_1 = arith.constant 0 : i32
    return %c0_i32, %c0_i32_0 : i32, i32
  }
  func.func @transform_8(%arg0: i32) -> (i32, i32) {
    %c0_i32 = arith.constant 0 : i32
    %c0_i32_0 = arith.constant 0 : i32
    %c0_i32_1 = arith.constant 0 : i32
    return %c0_i32, %c0_i32_0 : i32, i32
  }
  func.func @transform_9(%arg0: i32) -> (i32, i32) {
    %c0_i32 = arith.constant 0 : i32
    %c0_i32_0 = arith.constant 0 : i32
    %c0_i32_1 = arith.constant 0 : i32
    return %c0_i32, %c0_i32_0 : i32, i32
  }
  func.func @transform_10(%arg0: i32) -> (i32, i32) {
    %c0_i32 = arith.constant 0 : i32
    %c0_i32_0 = arith.constant 0 : i32
    %c0_i32_1 = arith.constant 0 : i32
    return %c0_i32, %c0_i32_0 : i32, i32
  }
  func.func @transform_11(%arg0: i32) -> (i32, i32, i32) {
    %c0_i32 = arith.constant 0 : i32
    %c0_i32_0 = arith.constant 0 : i32
    %c0_i32_1 = arith.constant 0 : i32
    return %arg0, %c0_i32, %c0_i32_0 : i32, i32, i32
  }
  func.func @transform_12(%arg0: i32) -> (i32, i32, i32) {
    %c0_i32 = arith.constant 0 : i32
    %c0_i32_0 = arith.constant 0 : i32
    %c0_i32_1 = arith.constant 0 : i32
    return %arg0, %c0_i32, %c0_i32_0 : i32, i32, i32
  }
}

module attributes {stable_mosaic.version = 11 : i64} {
  func.func @kernel(%arg0: i32, %arg1: i32, %arg2: memref<1x128x64xf32, #tpu.memory_space<vmem>>, %arg3: memref<1x128x64xf32, #tpu.memory_space<vmem>>, %arg4: memref<1x128x64xbf16, #tpu.memory_space<vmem>>, %arg5: memref<1x128x128xbf16, #tpu.memory_space<vmem>>, %arg6: memref<64x32xf32, #tpu.memory_space<vmem>>, %arg7: memref<1x32xf32, #tpu.memory_space<vmem>>, %arg8: memref<64x32xf32, #tpu.memory_space<vmem>>, %arg9: memref<1x32xf32, #tpu.memory_space<vmem>>, %arg10: memref<64x64xf32, #tpu.memory_space<vmem>>, %arg11: memref<1x64xf32, #tpu.memory_space<vmem>>, %arg12: memref<64x64xf32, #tpu.memory_space<vmem>>, %arg13: memref<1x64xf32, #tpu.memory_space<vmem>>, %arg14: memref<1x128x128xf32, #tpu.memory_space<vmem>>) attributes {dimension_semantics = [#tpu.dimension_semantics<parallel>, #tpu.dimension_semantics<parallel>], iteration_bounds = array<i64: 2, 2>, scalar_prefetch = 0 : i64, scratch_operands = 0 : i64, tpu.core_type = #tpu.core_type<tc>, window_params = [{transform_indices = @transform_0, window_bounds = array<i64: 1, 128, 64>}, {transform_indices = @transform_1, window_bounds = array<i64: 1, 128, 64>}, {transform_indices = @transform_2, window_bounds = array<i64: 1, 128, 64>}, {transform_indices = @transform_3, window_bounds = array<i64: 1, 128, 128>}, {pipeline_mode = #tpu.pipeline_mode<synchronous>, transform_indices = @transform_4, window_bounds = array<i64: 64, 32>}, {pipeline_mode = #tpu.pipeline_mode<synchronous>, transform_indices = @transform_5, window_bounds = array<i64: 1, 32>}, {pipeline_mode = #tpu.pipeline_mode<synchronous>, transform_indices = @transform_6, window_bounds = array<i64: 64, 32>}, {pipeline_mode = #tpu.pipeline_mode<synchronous>, transform_indices = @transform_7, window_bounds = array<i64: 1, 32>}, {pipeline_mode = #tpu.pipeline_mode<synchronous>, transform_indices = @transform_8, window_bounds = array<i64: 64, 64>}, {pipeline_mode = #tpu.pipeline_mode<synchronous>, transform_indices = @transform_9, window_bounds = array<i64: 1, 64>}, {pipeline_mode = #tpu.pipeline_mode<synchronous>, transform_indices = @transform_10, window_bounds = array<i64: 64, 64>}, {pipeline_mode = #tpu.pipeline_mode<synchronous>, transform_indices = @transform_11, window_bounds = array<i64: 1, 64>}, {transform_indices = @transform_12, window_bounds = array<i64: 1, 128, 128>}]} {
    %c0 = arith.constant 0 : index
    %c0_0 = arith.constant 0 : index
    %c0_1 = arith.constant 0 : index
    %0 = vector.load %arg2[%c0, %c0_0, %c0_1] : memref<1x128x64xf32, #tpu.memory_space<vmem>>, vector<1x128x64xf32>
    %1 = vector.shape_cast %0 : vector<1x128x64xf32> to vector<128x64xf32>
    %c0_2 = arith.constant 0 : index
    %c0_3 = arith.constant 0 : index
    %c0_4 = arith.constant 0 : index
    %2 = vector.load %arg3[%c0_2, %c0_3, %c0_4] : memref<1x128x64xf32, #tpu.memory_space<vmem>>, vector<1x128x64xf32>
    %3 = vector.shape_cast %2 : vector<1x128x64xf32> to vector<128x64xf32>
    %c0_5 = arith.constant 0 : index
    %c0_6 = arith.constant 0 : index
    %4 = vector.load %arg6[%c0_5, %c0_6] : memref<64x32xf32, #tpu.memory_space<vmem>>, vector<64x32xf32>
    %cst = arith.constant dense<0.000000e+00> : vector<128x32xf32>
    %5 = tpu.matmul %1, %4, %cst {dimension_numbers = #tpu.dot_dimension_numbers<[1], [0], [0], [1], [0, 0, 1, 1], [], []>} : vector<128x64xf32>, vector<64x32xf32>, vector<128x32xf32> -> vector<128x32xf32>
    %c0_7 = arith.constant 0 : index
    %c0_8 = arith.constant 0 : index
    %6 = vector.load %arg7[%c0_7, %c0_8] : memref<1x32xf32, #tpu.memory_space<vmem>>, vector<1x32xf32>
    %7 = vector.broadcast %6 : vector<1x32xf32> to vector<128x32xf32>
    %8 = arith.addf %5, %7 : vector<128x32xf32>
    %cst_9 = arith.constant 0.000000e+00 : f32
    %9 = vector.broadcast %cst_9 : f32 to vector<128x32xf32>
    %10 = arith.maximumf %8, %9 : vector<128x32xf32>
    %c0_10 = arith.constant 0 : index
    %c0_11 = arith.constant 0 : index
    %11 = vector.load %arg8[%c0_10, %c0_11] : memref<64x32xf32, #tpu.memory_space<vmem>>, vector<64x32xf32>
    %cst_12 = arith.constant dense<0.000000e+00> : vector<128x32xf32>
    %12 = tpu.matmul %3, %11, %cst_12 {dimension_numbers = #tpu.dot_dimension_numbers<[1], [0], [0], [1], [0, 0, 1, 1], [], []>} : vector<128x64xf32>, vector<64x32xf32>, vector<128x32xf32> -> vector<128x32xf32>
    %c0_13 = arith.constant 0 : index
    %c0_14 = arith.constant 0 : index
    %13 = vector.load %arg9[%c0_13, %c0_14] : memref<1x32xf32, #tpu.memory_space<vmem>>, vector<1x32xf32>
    %14 = vector.broadcast %13 : vector<1x32xf32> to vector<128x32xf32>
    %15 = arith.addf %12, %14 : vector<128x32xf32>
    %cst_15 = arith.constant 0.000000e+00 : f32
    %16 = vector.broadcast %cst_15 : f32 to vector<128x32xf32>
    %17 = arith.maximumf %15, %16 : vector<128x32xf32>
    %18 = tpu.concatenate %10, %17 in 1 : vector<128x32xf32>, vector<128x32xf32> -> vector<128x64xf32>
    %19 = arith.truncf %18 : vector<128x64xf32> to vector<128x64xbf16>
    %c0_16 = arith.constant 0 : index
    %c0_17 = arith.constant 0 : index
    %c0_18 = arith.constant 0 : index
    %20 = vector.load %arg4[%c0_16, %c0_17, %c0_18] : memref<1x128x64xbf16, #tpu.memory_space<vmem>>, vector<1x128x64xbf16>
    %21 = vector.shape_cast %20 : vector<1x128x64xbf16> to vector<128x64xbf16>
    %cst_19 = arith.constant dense<0.000000e+00> : vector<128x128xf32>
    %22 = tpu.matmul %19, %21, %cst_19 {dimension_numbers = #tpu.dot_dimension_numbers<[1], [1], [0], [0], [0, 0, 1, 0], [], []>} : vector<128x64xbf16>, vector<128x64xbf16>, vector<128x128xf32> -> vector<128x128xf32>
    %cst_20 = arith.constant 0.176776692 : f32
    %23 = vector.broadcast %cst_20 : f32 to vector<128x128xf32>
    %24 = arith.mulf %22, %23 : vector<128x128xf32>
    %25 = tpu.iota {dimensions = array<i32: 1>} : vector<128x128xi32>
    %c110_i32 = arith.constant 110 : i32
    %26 = vector.broadcast %c110_i32 : i32 to vector<128x128xi32>
    %27 = arith.cmpi slt, %25, %26 : vector<128x128xi32>
    %cst_21 = arith.constant -1.000000e+30 : f32
    %28 = vector.broadcast %cst_21 : f32 to vector<128x128xf32>
    %29 = arith.select %27, %24, %28 : vector<128x128xi1>, vector<128x128xf32>
    %cst_22 = arith.constant dense<0xFF800000> : vector<128xf32>
    %30 = vector.multi_reduction <maximumf>, %29, %cst_22 [1] : vector<128x128xf32> to vector<128xf32>
    %31 = vector.shape_cast %30 : vector<128xf32> to vector<128x1xf32>
    %32 = vector.broadcast %31 : vector<128x1xf32> to vector<128x128xf32>
    %33 = arith.subf %29, %32 : vector<128x128xf32>
    %34 = math.exp %33 : vector<128x128xf32>
    %cst_23 = arith.constant dense<0.000000e+00> : vector<128xf32>
    %35 = vector.multi_reduction <add>, %34, %cst_23 [1] : vector<128x128xf32> to vector<128xf32>
    %36 = vector.shape_cast %35 : vector<128xf32> to vector<128x1xf32>
    %37 = tpu.reciprocal %36 {approx = true} : vector<128x1xf32> -> vector<128x1xf32>
    %38 = vector.broadcast %37 : vector<128x1xf32> to vector<128x128xf32>
    %39 = arith.mulf %34, %38 : vector<128x128xf32>
    %40 = arith.truncf %39 : vector<128x128xf32> to vector<128x128xbf16>
    %c0_24 = arith.constant 0 : index
    %c0_25 = arith.constant 0 : index
    %c0_26 = arith.constant 0 : index
    %41 = vector.load %arg5[%c0_24, %c0_25, %c0_26] : memref<1x128x128xbf16, #tpu.memory_space<vmem>>, vector<1x128x128xbf16>
    %42 = vector.shape_cast %41 : vector<1x128x128xbf16> to vector<128x128xbf16>
    %cst_27 = arith.constant dense<0.000000e+00> : vector<128x128xf32>
    %43 = tpu.matmul %40, %42, %cst_27 {dimension_numbers = #tpu.dot_dimension_numbers<[1], [0], [0], [1], [0, 0, 1, 1], [], []>} : vector<128x128xbf16>, vector<128x128xbf16>, vector<128x128xf32> -> vector<128x128xf32>
    %44 = vector.extract_strided_slice %43 {offsets = [0, 0], sizes = [128, 64], strides = [1, 1]} : vector<128x128xf32> to vector<128x64xf32>
    %45 = vector.extract_strided_slice %43 {offsets = [0, 64], sizes = [128, 64], strides = [1, 1]} : vector<128x128xf32> to vector<128x64xf32>
    %c0_28 = arith.constant 0 : index
    %c0_29 = arith.constant 0 : index
    %46 = vector.load %arg10[%c0_28, %c0_29] : memref<64x64xf32, #tpu.memory_space<vmem>>, vector<64x64xf32>
    %cst_30 = arith.constant dense<0.000000e+00> : vector<128x64xf32>
    %47 = tpu.matmul %44, %46, %cst_30 {dimension_numbers = #tpu.dot_dimension_numbers<[1], [0], [0], [1], [0, 0, 1, 1], [], []>} : vector<128x64xf32>, vector<64x64xf32>, vector<128x64xf32> -> vector<128x64xf32>
    %c0_31 = arith.constant 0 : index
    %c0_32 = arith.constant 0 : index
    %48 = vector.load %arg11[%c0_31, %c0_32] : memref<1x64xf32, #tpu.memory_space<vmem>>, vector<1x64xf32>
    %49 = vector.broadcast %48 : vector<1x64xf32> to vector<128x64xf32>
    %50 = arith.addf %47, %49 : vector<128x64xf32>
    %c0_33 = arith.constant 0 : index
    %c0_34 = arith.constant 0 : index
    %51 = vector.load %arg12[%c0_33, %c0_34] : memref<64x64xf32, #tpu.memory_space<vmem>>, vector<64x64xf32>
    %cst_35 = arith.constant dense<0.000000e+00> : vector<128x64xf32>
    %52 = tpu.matmul %45, %51, %cst_35 {dimension_numbers = #tpu.dot_dimension_numbers<[1], [0], [0], [1], [0, 0, 1, 1], [], []>} : vector<128x64xf32>, vector<64x64xf32>, vector<128x64xf32> -> vector<128x64xf32>
    %c0_36 = arith.constant 0 : index
    %c0_37 = arith.constant 0 : index
    %53 = vector.load %arg13[%c0_36, %c0_37] : memref<1x64xf32, #tpu.memory_space<vmem>>, vector<1x64xf32>
    %54 = vector.broadcast %53 : vector<1x64xf32> to vector<128x64xf32>
    %55 = arith.addf %52, %54 : vector<128x64xf32>
    %56 = tpu.concatenate %50, %55 in 1 : vector<128x64xf32>, vector<128x64xf32> -> vector<128x128xf32>
    %c0_38 = arith.constant 0 : index
    %c0_39 = arith.constant 0 : index
    %c0_40 = arith.constant 0 : index
    %57 = vector.load %arg14[%c0_38, %c0_39, %c0_40] : memref<1x128x128xf32, #tpu.memory_space<vmem>>, vector<1x128x128xf32>
    %58 = vector.shape_cast %57 : vector<1x128x128xf32> to vector<128x128xf32>
    %59 = vector.shape_cast %56 : vector<128x128xf32> to vector<1x128x128xf32>
    tpu.vector_store %arg14[%c0_38, %c0_39, %c0_40], %59 {strides = array<i32>} : memref<1x128x128xf32, #tpu.memory_space<vmem>>, vector<1x128x128xf32>,
    return
  }
  func.func @transform_0(%arg0: i32, %arg1: i32) -> (i32, i32, i32) {
    %c0_i32 = arith.constant 0 : i32
    %c0_i32_0 = arith.constant 0 : i32
    return %arg0, %arg1, %c0_i32 : i32, i32, i32
  }
  func.func @transform_1(%arg0: i32, %arg1: i32) -> (i32, i32, i32) {
    %c0_i32 = arith.constant 0 : i32
    %c0_i32_0 = arith.constant 0 : i32
    return %arg0, %arg1, %c0_i32 : i32, i32, i32
  }
  func.func @transform_2(%arg0: i32, %arg1: i32) -> (i32, i32, i32) {
    %c0_i32 = arith.constant 0 : i32
    %c0_i32_0 = arith.constant 0 : i32
    %c0_i32_1 = arith.constant 0 : i32
    return %arg0, %c0_i32, %c0_i32_0 : i32, i32, i32
  }
  func.func @transform_3(%arg0: i32, %arg1: i32) -> (i32, i32, i32) {
    %c0_i32 = arith.constant 0 : i32
    %c0_i32_0 = arith.constant 0 : i32
    %c0_i32_1 = arith.constant 0 : i32
    return %arg0, %c0_i32, %c0_i32_0 : i32, i32, i32
  }
  func.func @transform_4(%arg0: i32, %arg1: i32) -> (i32, i32) {
    %c0_i32 = arith.constant 0 : i32
    %c0_i32_0 = arith.constant 0 : i32
    %c0_i32_1 = arith.constant 0 : i32
    return %c0_i32, %c0_i32_0 : i32, i32
  }
  func.func @transform_5(%arg0: i32, %arg1: i32) -> (i32, i32) {
    %c0_i32 = arith.constant 0 : i32
    %c0_i32_0 = arith.constant 0 : i32
    %c0_i32_1 = arith.constant 0 : i32
    return %c0_i32, %c0_i32_0 : i32, i32
  }
  func.func @transform_6(%arg0: i32, %arg1: i32) -> (i32, i32) {
    %c0_i32 = arith.constant 0 : i32
    %c0_i32_0 = arith.constant 0 : i32
    %c0_i32_1 = arith.constant 0 : i32
    return %c0_i32, %c0_i32_0 : i32, i32
  }
  func.func @transform_7(%arg0: i32, %arg1: i32) -> (i32, i32) {
    %c0_i32 = arith.constant 0 : i32
    %c0_i32_0 = arith.constant 0 : i32
    %c0_i32_1 = arith.constant 0 : i32
    return %c0_i32, %c0_i32_0 : i32, i32
  }
  func.func @transform_8(%arg0: i32, %arg1: i32) -> (i32, i32) {
    %c0_i32 = arith.constant 0 : i32
    %c0_i32_0 = arith.constant 0 : i32
    %c0_i32_1 = arith.constant 0 : i32
    return %c0_i32, %c0_i32_0 : i32, i32
  }
  func.func @transform_9(%arg0: i32, %arg1: i32) -> (i32, i32) {
    %c0_i32 = arith.constant 0 : i32
    %c0_i32_0 = arith.constant 0 : i32
    %c0_i32_1 = arith.constant 0 : i32
    return %c0_i32, %c0_i32_0 : i32, i32
  }
  func.func @transform_10(%arg0: i32, %arg1: i32) -> (i32, i32) {
    %c0_i32 = arith.constant 0 : i32
    %c0_i32_0 = arith.constant 0 : i32
    %c0_i32_1 = arith.constant 0 : i32
    return %c0_i32, %c0_i32_0 : i32, i32
  }
  func.func @transform_11(%arg0: i32, %arg1: i32) -> (i32, i32) {
    %c0_i32 = arith.constant 0 : i32
    %c0_i32_0 = arith.constant 0 : i32
    %c0_i32_1 = arith.constant 0 : i32
    return %c0_i32, %c0_i32_0 : i32, i32
  }
  func.func @transform_12(%arg0: i32, %arg1: i32) -> (i32, i32, i32) {
    %c0_i32 = arith.constant 0 : i32
    %c0_i32_0 = arith.constant 0 : i32
    return %arg0, %arg1, %c0_i32 : i32, i32, i32
  }
}

</mosaic_0001>

<llo_original>
// kernel: acm_forward.2
$region0: #{acm_forward.2}
  #allocation0 [shape = 'u32[]', space=smem, size = 0x4, offset = 0x4, fixed_abs, tag = 'smem constant byte address 0x4 - core index']
  #allocation1 [shape = 'u32[144,128]{1,0:T(1,128)}', space=vmem, size = 0x12000, scoped, tag = 'internal scratch']
  %s0 = inlined_call_operand.hbm [shape: f32[2,256,64], index: 0, kind: input, shape index: {}]
  %s1 = inlined_call_operand.hbm [shape: f32[2,256,64], index: 1, kind: input, shape index: {}]
  %s2 = inlined_call_operand.vmem [shape: f32[128,256], index: 2, kind: input, shape index: {}]
  %s3 = inlined_call_operand.vmem [shape: f32[64,32], index: 3, kind: input, shape index: {}]
  %s4 = inlined_call_operand.vmem [shape: f32[1,32], index: 4, kind: input, shape index: {}]
  %s5 = inlined_call_operand.vmem [shape: f32[64,32], index: 5, kind: input, shape index: {}]
  %s6 = inlined_call_operand.vmem [shape: f32[1,32], index: 6, kind: input, shape index: {}]
  %s7 = inlined_call_operand.vmem [shape: f32[64,64], index: 7, kind: input, shape index: {}]
  %s8 = inlined_call_operand.vmem [shape: f32[1,64], index: 8, kind: input, shape index: {}]
  %s9 = inlined_call_operand.vmem [shape: f32[64,64], index: 9, kind: input, shape index: {}]
  %s10 = inlined_call_operand.vmem [shape: f32[1,64], index: 10, kind: input, shape index: {}]
  %s11 = inlined_call_operand.vmem [shape: bf16[2,128,64], index: 11, kind: output, shape index: {0}]
  %s12 = inlined_call_operand.vmem [shape: bf16[2,128,128], index: 12, kind: output, shape index: {1}]
  %13 = xla_tuple %s11, %s12
  %s14 = sld [smem:[#allocation0]]
  $region93: #{acm_forward.2} parent=0
    _
  %s16 = ssub.s32 1, %s14
  %s17 = scalar_select 0, %s16, %s14
  $region1: #{acm_forward.2} parent=0
    #allocation2 [shape = 'u8[262144]{0}', space=vmem, size = 0x40000, scoped, tag = 'input window, operand 0']
    #allocation3 [shape = 's32[2]{0}', space=sflag, size = 0x8, scoped, tag = 'scoped memory for acm_forward.2']
    #allocation4 [shape = 'u8[262144]{0}', space=vmem, size = 0x40000, scoped, tag = 'input window, operand 1']
    #allocation5 [shape = 's32[2]{0}', space=sflag, size = 0x8, scoped, tag = 'scoped memory for acm_forward.2']
    %18 = vsyncpa [#allocation3], 0
    %s19 = scalar_lea.sflag [#allocation3], 1
    %20 = vsyncpa %s19, 0
    %21 = vsyncpa [#allocation5], 0
    %s22 = scalar_lea.sflag [#allocation5], 1
    %23 = vsyncpa %s22, 0
    loop: start=0, step=1, limit=4
    $region2: #{acm_forward.2} parent=1 // loop_pre_header
      _
    $region3: #{acm_forward.2} parent=1 // loop_header
      %s25 = sphi 0, %s29
      %p26 = scmp.ge.s32.totalorder %s25, 4
      %s35 = sphi 0, %s37
      %s38 = sphi 0, %s35
      %s39 = sphi 0, %s38
      %s55 = sphi 0, %s39
      %s61 = sphi 0, %s63
      %s64 = sphi 0, %s61
      %s65 = sphi 0, %s64
      %s81 = sphi 0, %s65
      %s85 = sphi 0, %s85
      %s87 = sphi 0, %s85
      %s88 = sphi 0, %s87
      %s102 = sphi 0, %s88
      %s106 = sphi 0, %s106
      %s108 = sphi 0, %s106
      %s109 = sphi 0, %s108
      %s123 = sphi 0, %s109
      %s127 = sphi 0, %s127
      %s129 = sphi 0, %s127
      %s130 = sphi 0, %s129
      %s144 = sphi 0, %s130
      %s148 = sphi 0, %s148
      %s150 = sphi 0, %s148
      %s151 = sphi 0, %s150
      %s165 = sphi 0, %s151
      %s169 = sphi 0, %s169
      %s171 = sphi 0, %s169
      %s172 = sphi 0, %s171
      %s186 = sphi 0, %s172
      %s190 = sphi 0, %s190
      %s192 = sphi 0, %s190
      %s193 = sphi 0, %s192
      %s207 = sphi 0, %s193
      %s211 = sphi 0, %s211
      %s213 = sphi 0, %s211
      %s214 = sphi 0, %s213
      %s228 = sphi 0, %s214
      %s232 = sphi 0, %s232
      %s234 = sphi 0, %s232
      %s235 = sphi 0, %s234
      %s249 = sphi 0, %s235
      %s253 = sphi 0, %s253
      %s255 = sphi 0, %s253
      %s256 = sphi 0, %s255
      %s270 = sphi 0, %s256
      %s276 = sphi 0, %s278
      %s279 = sphi 0, %s276
      %s280 = sphi 0, %s279
      %s296 = sphi 0, %s280
      %s302 = sphi 0, %s304
      %s305 = sphi 0, %s302
      %s306 = sphi 0, %s305
      %s322 = sphi 0, %s306
    $region4: #{acm_forward.2} parent=1 // loop_header_branch
      %28 = sbr.rel (%p26) target = $region8
    $region5: #{acm_forward.2} parent=1 // loop_body
      %s30 = ssub.s32 %s25, 1
      %s31 = ssub.s32 %s25, 2
      %s32 = sadd.s32 %s25, 1
      %s33 = ssub.s32 %s25, %s32
      %p34 = scmp.eq.s32.totalorder %s33, 0
      %s36 = sadd.s32 %s35, 1
      %s37 = scalar_select %p34, %s35, %s36
      %p40 = pneg %p34
      %p41 = scmp.eq.s32.totalorder %s25, 1
      %p42 = por %p40, %p41
      %p43 = scmp.ne.s32.totalorder %s35, %s38
      %p44 = scmp.eq.s32.totalorder %s25, 0
      %p45 = por %p43, %p44
      %p46 = scmp.ne.s32.totalorder %s35, %s38
      %p47 = scmp.eq.s32.totalorder %s30, 1
      %p48 = por %p46, %p47
      %p49 = scmp.ne.s32.totalorder %s38, %s39
      %p50 = scmp.eq.s32.totalorder %s30, 0
      %p51 = por %p49, %p50
      %p52 = scmp.ne.s32.totalorder %s38, %s39
      %p53 = scmp.eq.s32.totalorder %s31, 1
      %p54 = por %p52, %p53
      %p56 = scmp.ne.s32.totalorder %s39, %s55
      %p57 = scmp.eq.s32.totalorder %s31, 0
      %p58 = por %p56, %p57
      %s59 = ssub.s32 %s25, %s32
      %p60 = scmp.eq.s32.totalorder %s59, 0
      %s62 = sadd.s32 %s61, 1
      %s63 = scalar_select %p60, %s61, %s62
      %p66 = pneg %p60
      %p67 = scmp.eq.s32.totalorder %s25, 1
      %p68 = por %p66, %p67
      %p69 = scmp.ne.s32.totalorder %s61, %s64
      %p70 = scmp.eq.s32.totalorder %s25, 0
      %p71 = por %p69, %p70
      %p72 = scmp.ne.s32.totalorder %s61, %s64
      %p73 = scmp.eq.s32.totalorder %s30, 1
      %p74 = por %p72, %p73
      %p75 = scmp.ne.s32.totalorder %s64, %s65
      %p76 = scmp.eq.s32.totalorder %s30, 0
      %p77 = por %p75, %p76
      %p78 = scmp.ne.s32.totalorder %s64, %s65
      %p79 = scmp.eq.s32.totalorder %s31, 1
      %p80 = por %p78, %p79
      %p82 = scmp.ne.s32.totalorder %s65, %s81
      %p83 = scmp.eq.s32.totalorder %s31, 0
      %p84 = por %p82, %p83
      %s86 = sadd.s32 %s85, 1
      %p89 = scmp.eq.s32.totalorder %s25, 1
      %p90 = scmp.ne.s32.totalorder %s85, %s87
      %p91 = scmp.eq.s32.totalorder %s25, 0
      %p92 = por %p90, %p91
      %p93 = scmp.ne.s32.totalorder %s85, %s87
      %p94 = scmp.eq.s32.totalorder %s30, 1
      %p95 = por %p93, %p94
      %p96 = scmp.ne.s32.totalorder %s87, %s88
      %p97 = scmp.eq.s32.totalorder %s30, 0
      %p98 = por %p96, %p97
      %p99 = scmp.ne.s32.totalorder %s87, %s88
      %p100 = scmp.eq.s32.totalorder %s31, 1
      %p101 = por %p99, %p100
      %p103 = scmp.ne.s32.totalorder %s88, %s102
      %p104 = scmp.eq.s32.totalorder %s31, 0
      %p105 = por %p103, %p104
      %s107 = sadd.s32 %s106, 1
      %p110 = scmp.eq.s32.totalorder %s25, 1
      %p111 = scmp.ne.s32.totalorder %s106, %s108
      %p112 = scmp.eq.s32.totalorder %s25, 0
      %p113 = por %p111, %p112
      %p114 = scmp.ne.s32.totalorder %s106, %s108
      %p115 = scmp.eq.s32.totalorder %s30, 1
      %p116 = por %p114, %p115
      %p117 = scmp.ne.s32.totalorder %s108, %s109
      %p118 = scmp.eq.s32.totalorder %s30, 0
      %p119 = por %p117, %p118
      %p120 = scmp.ne.s32.totalorder %s108, %s109
      %p121 = scmp.eq.s32.totalorder %s31, 1
      %p122 = por %p120, %p121
      %p124 = scmp.ne.s32.totalorder %s109, %s123
      %p125 = scmp.eq.s32.totalorder %s31, 0
      %p126 = por %p124, %p125
      %s128 = sadd.s32 %s127, 1
      %p131 = scmp.eq.s32.totalorder %s25, 1
      %p132 = scmp.ne.s32.totalorder %s127, %s129
      %p133 = scmp.eq.s32.totalorder %s25, 0
      %p134 = por %p132, %p133
      %p135 = scmp.ne.s32.totalorder %s127, %s129
      %p136 = scmp.eq.s32.totalorder %s30, 1
      %p137 = por %p135, %p136
      %p138 = scmp.ne.s32.totalorder %s129, %s130
      %p139 = scmp.eq.s32.totalorder %s30, 0
      %p140 = por %p138, %p139
      %p141 = scmp.ne.s32.totalorder %s129, %s130
      %p142 = scmp.eq.s32.totalorder %s31, 1
      %p143 = por %p141, %p142
      %p145 = scmp.ne.s32.totalorder %s130, %s144
      %p146 = scmp.eq.s32.totalorder %s31, 0
      %p147 = por %p145, %p146
      %s149 = sadd.s32 %s148, 1
      %p152 = scmp.eq.s32.totalorder %s25, 1
      %p153 = scmp.ne.s32.totalorder %s148, %s150
      %p154 = scmp.eq.s32.totalorder %s25, 0
      %p155 = por %p153, %p154
      %p156 = scmp.ne.s32.totalorder %s148, %s150
      %p157 = scmp.eq.s32.totalorder %s30, 1
      %p158 = por %p156, %p157
      %p159 = scmp.ne.s32.totalorder %s150, %s151
      %p160 = scmp.eq.s32.totalorder %s30, 0
      %p161 = por %p159, %p160
      %p162 = scmp.ne.s32.totalorder %s150, %s151
      %p163 = scmp.eq.s32.totalorder %s31, 1
      %p164 = por %p162, %p163
      %p166 = scmp.ne.s32.totalorder %s151, %s165
      %p167 = scmp.eq.s32.totalorder %s31, 0
      %p168 = por %p166, %p167
      %s170 = sadd.s32 %s169, 1
      %p173 = scmp.eq.s32.totalorder %s25, 1
      %p174 = scmp.ne.s32.totalorder %s169, %s171
      %p175 = scmp.eq.s32.totalorder %s25, 0
      %p176 = por %p174, %p175
      %p177 = scmp.ne.s32.totalorder %s169, %s171
      %p178 = scmp.eq.s32.totalorder %s30, 1
      %p179 = por %p177, %p178
      %p180 = scmp.ne.s32.totalorder %s171, %s172
      %p181 = scmp.eq.s32.totalorder %s30, 0
      %p182 = por %p180, %p181
      %p183 = scmp.ne.s32.totalorder %s171, %s172
      %p184 = scmp.eq.s32.totalorder %s31, 1
      %p185 = por %p183, %p184
      %p187 = scmp.ne.s32.totalorder %s172, %s186
      %p188 = scmp.eq.s32.totalorder %s31, 0
      %p189 = por %p187, %p188
      %s191 = sadd.s32 %s190, 1
      %p194 = scmp.eq.s32.totalorder %s25, 1
      %p195 = scmp.ne.s32.totalorder %s190, %s192
      %p196 = scmp.eq.s32.totalorder %s25, 0
      %p197 = por %p195, %p196
      %p198 = scmp.ne.s32.totalorder %s190, %s192
      %p199 = scmp.eq.s32.totalorder %s30, 1
      %p200 = por %p198, %p199
      %p201 = scmp.ne.s32.totalorder %s192, %s193
      %p202 = scmp.eq.s32.totalorder %s30, 0
      %p203 = por %p201, %p202
      %p204 = scmp.ne.s32.totalorder %s192, %s193
      %p205 = scmp.eq.s32.totalorder %s31, 1
      %p206 = por %p204, %p205
      %p208 = scmp.ne.s32.totalorder %s193, %s207
      %p209 = scmp.eq.s32.totalorder %s31, 0
      %p210 = por %p208, %p209
      %s212 = sadd.s32 %s211, 1
      %p215 = scmp.eq.s32.totalorder %s25, 1
      %p216 = scmp.ne.s32.totalorder %s211, %s213
      %p217 = scmp.eq.s32.totalorder %s25, 0
      %p218 = por %p216, %p217
      %p219 = scmp.ne.s32.totalorder %s211, %s213
      %p220 = scmp.eq.s32.totalorder %s30, 1
      %p221 = por %p219, %p220
      %p222 = scmp.ne.s32.totalorder %s213, %s214
      %p223 = scmp.eq.s32.totalorder %s30, 0
      %p224 = por %p222, %p223
      %p225 = scmp.ne.s32.totalorder %s213, %s214
      %p226 = scmp.eq.s32.totalorder %s31, 1
      %p227 = por %p225, %p226
      %p229 = scmp.ne.s32.totalorder %s214, %s228
      %p230 = scmp.eq.s32.totalorder %s31, 0
      %p231 = por %p229, %p230
      %s233 = sadd.s32 %s232, 1
      %p236 = scmp.eq.s32.totalorder %s25, 1
      %p237 = scmp.ne.s32.totalorder %s232, %s234
      %p238 = scmp.eq.s32.totalorder %s25, 0
      %p239 = por %p237, %p238
      %p240 = scmp.ne.s32.totalorder %s232, %s234
      %p241 = scmp.eq.s32.totalorder %s30, 1
      %p242 = por %p240, %p241
      %p243 = scmp.ne.s32.totalorder %s234, %s235
      %p244 = scmp.eq.s32.totalorder %s30, 0
      %p245 = por %p243, %p244
      %p246 = scmp.ne.s32.totalorder %s234, %s235
      %p247 = scmp.eq.s32.totalorder %s31, 1
      %p248 = por %p246, %p247
      %p250 = scmp.ne.s32.totalorder %s235, %s249
      %p251 = scmp.eq.s32.totalorder %s31, 0
      %p252 = por %p250, %p251
      %s254 = sadd.s32 %s253, 1
      %p257 = scmp.eq.s32.totalorder %s25, 1
      %p258 = scmp.ne.s32.totalorder %s253, %s255
      %p259 = scmp.eq.s32.totalorder %s25, 0
      %p260 = por %p258, %p259
      %p261 = scmp.ne.s32.totalorder %s253, %s255
      %p262 = scmp.eq.s32.totalorder %s30, 1
      %p263 = por %p261, %p262
      %p264 = scmp.ne.s32.totalorder %s255, %s256
      %p265 = scmp.eq.s32.totalorder %s30, 0
      %p266 = por %p264, %p265
      %p267 = scmp.ne.s32.totalorder %s255, %s256
      %p268 = scmp.eq.s32.totalorder %s31, 1
      %p269 = por %p267, %p268
      %p271 = scmp.ne.s32.totalorder %s256, %s270
      %p272 = scmp.eq.s32.totalorder %s31, 0
      %p273 = por %p271, %p272
      %s274 = ssub.s32 %s25, %s32
      %p275 = scmp.eq.s32.totalorder %s274, 0
      %s277 = sadd.s32 %s276, 1
      %s278 = scalar_select %p275, %s276, %s277
      %p281 = pneg %p275
      %p282 = scmp.eq.s32.totalorder %s25, 1
      %p283 = por %p281, %p282
      %p284 = scmp.ne.s32.totalorder %s276, %s279
      %p285 = scmp.eq.s32.totalorder %s25, 0
      %p286 = por %p284, %p285
      %p287 = scmp.ne.s32.totalorder %s276, %s279
      %p288 = scmp.eq.s32.totalorder %s30, 1
      %p289 = por %p287, %p288
      %p290 = scmp.ne.s32.totalorder %s279, %s280
      %p291 = scmp.eq.s32.totalorder %s30, 0
      %p292 = por %p290, %p291
      %p293 = scmp.ne.s32.totalorder %s279, %s280
      %p294 = scmp.eq.s32.totalorder %s31, 1
      %p295 = por %p293, %p294
      %p297 = scmp.ne.s32.totalorder %s280, %s296
      %p298 = scmp.eq.s32.totalorder %s31, 0
      %p299 = por %p297, %p298
      %s300 = ssub.s32 %s25, %s32
      %p301 = scmp.eq.s32.totalorder %s300, 0
      %s303 = sadd.s32 %s302, 1
      %s304 = scalar_select %p301, %s302, %s303
      %p307 = pneg %p301
      %p308 = scmp.eq.s32.totalorder %s25, 1
      %p309 = por %p307, %p308
      %p310 = scmp.ne.s32.totalorder %s302, %s305
      %p311 = scmp.eq.s32.totalorder %s25, 0
      %p312 = por %p310, %p311
      %p313 = scmp.ne.s32.totalorder %s302, %s305
      %p314 = scmp.eq.s32.totalorder %s30, 1
      %p315 = por %p313, %p314
      %p316 = scmp.ne.s32.totalorder %s305, %s306
      %p317 = scmp.eq.s32.totalorder %s30, 0
      %p318 = por %p316, %p317
      %p319 = scmp.ne.s32.totalorder %s305, %s306
      %p320 = scmp.eq.s32.totalorder %s31, 1
      %p321 = por %p319, %p320
      %p323 = scmp.ne.s32.totalorder %s306, %s322
      %p324 = scmp.eq.s32.totalorder %s31, 0
      %p325 = por %p323, %p324
      %p326 = scmp.le.s32.totalorder 1, %s25
      %p327 = scmp.lt.s32.totalorder %s25, 3
      %p328 = pnand %p326, %p327
      %p329 = pneg %p328
      // Predicated region
      $region9: #{acm_forward.2} parent=5 // pred_check
        _
      $region10: #{acm_forward.2} parent=5 // pred_check_branch
        %331 = sbr.rel (%p328) target = $region12
      $region11: #{acm_forward.2} parent=5 // pred_region
        %s332 = ssub.s32 %s25, 1
        // Predicated region
        $region13: #{acm_forward.2} parent=11 // pred_check
          %p333 = pneg %p98
        $region14: #{acm_forward.2} parent=11 // pred_check_branch
          %335 = sbr.rel (%p333) target = $region16
        $region15: #{acm_forward.2} parent=11 // pred_region
          _
        $region16: #{acm_forward.2} parent=11 // pred_fallthru
          _
        // Predicated region
        $region17: #{acm_forward.2} parent=11 // pred_check
          %p336 = pneg %p119
        $region18: #{acm_forward.2} parent=11 // pred_check_branch
          %338 = sbr.rel (%p336) target = $region20
        $region19: #{acm_forward.2} parent=11 // pred_region
          _
        $region20: #{acm_forward.2} parent=11 // pred_fallthru
          _
        // Predicated region
        $region21: #{acm_forward.2} parent=11 // pred_check
          %p339 = pneg %p140
        $region22: #{acm_forward.2} parent=11 // pred_check_branch
          %341 = sbr.rel (%p339) target = $region24
        $region23: #{acm_forward.2} parent=11 // pred_region
          _
        $region24: #{acm_forward.2} parent=11 // pred_fallthru
          _
        // Predicated region
        $region25: #{acm_forward.2} parent=11 // pred_check
          %p342 = pneg %p161
        $region26: #{acm_forward.2} parent=11 // pred_check_branch
          %344 = sbr.rel (%p342) target = $region28
        $region27: #{acm_forward.2} parent=11 // pred_region
          _
        $region28: #{acm_forward.2} parent=11 // pred_fallthru
          _
        // Predicated region
        $region29: #{acm_forward.2} parent=11 // pred_check
          %p345 = pneg %p182
        $region30: #{acm_forward.2} parent=11 // pred_check_branch
          %347 = sbr.rel (%p345) target = $region32
        $region31: #{acm_forward.2} parent=11 // pred_region
          _
        $region32: #{acm_forward.2} parent=11 // pred_fallthru
          _
        // Predicated region
        $region33: #{acm_forward.2} parent=11 // pred_check
          %p348 = pneg %p203
        $region34: #{acm_forward.2} parent=11 // pred_check_branch
          %350 = sbr.rel (%p348) target = $region36
        $region35: #{acm_forward.2} parent=11 // pred_region
          _
        $region36: #{acm_forward.2} parent=11 // pred_fallthru
          _
        // Predicated region
        $region37: #{acm_forward.2} parent=11 // pred_check
          %p351 = pneg %p224
        $region38: #{acm_forward.2} parent=11 // pred_check_branch
          %353 = sbr.rel (%p351) target = $region40
        $region39: #{acm_forward.2} parent=11 // pred_region
          _
        $region40: #{acm_forward.2} parent=11 // pred_fallthru
          _
        // Predicated region
        $region41: #{acm_forward.2} parent=11 // pred_check
          %p354 = pneg %p245
        $region42: #{acm_forward.2} parent=11 // pred_check_branch
          %356 = sbr.rel (%p354) target = $region44
        $region43: #{acm_forward.2} parent=11 // pred_region
          _
        $region44: #{acm_forward.2} parent=11 // pred_fallthru
          _
        // Predicated region
        $region45: #{acm_forward.2} parent=11 // pred_check
          %p357 = pneg %p266
        $region46: #{acm_forward.2} parent=11 // pred_check_branch
          %359 = sbr.rel (%p357) target = $region48
        $region47: #{acm_forward.2} parent=11 // pred_region
          _
        $region48: #{acm_forward.2} parent=11 // pred_fallthru
          _
      $region12: #{acm_forward.2} parent=5 // pred_fallthru
        _
      %p360 = scmp.lt.s32.totalorder %s25, 2
      // Predicated region
      $region49: #{acm_forward.2} parent=5 // pred_check
        %p361 = pneg %p360
      $region50: #{acm_forward.2} parent=5 // pred_check_branch
        %363 = sbr.rel (%p361) target = $region52
      $region51: #{acm_forward.2} parent=5 // pred_region
        // Predicated region
        $region53: #{acm_forward.2} parent=51 // pred_check
          %p364 = pneg %p45
        $region54: #{acm_forward.2} parent=51 // pred_check_branch
          %366 = sbr.rel (%p364) target = $region56
        $region55: #{acm_forward.2} parent=51 // pred_region
          %s367 = sand.u32 %s35, 1
          %s368 = scalar_lea.sflag [#allocation3], %s367
          %s369 = sand.u32 %s35, 1
          %s370 = smul.addr %s369, 256
          %s371 = scalar_lea.vmem [#allocation2], %s370
          %s373 = ssub.s32 4096, 4096
          %374 = vsyncadd %s368, %s373
          %s375 = smul.addr %s25, 32
          %s376 = smul.addr %s375, 128
          %s377 = scalar_lea.hbm %s0, %s376
          %s378 = sshll.u32 %s371, 4
          %s379 = int_to_ptr.vmem [resolvable:$true] %s378
          %384 = dma.hbm_to_vmem [thread:$0]  %s377, 4096, %s379, %s368, 128, 128, 8
        $region56: #{acm_forward.2} parent=51 // pred_fallthru
          _
        // Predicated region
        $region57: #{acm_forward.2} parent=51 // pred_check
          %p385 = pneg %p71
        $region58: #{acm_forward.2} parent=51 // pred_check_branch
          %387 = sbr.rel (%p385) target = $region60
        $region59: #{acm_forward.2} parent=51 // pred_region
          %s388 = sand.u32 %s61, 1
          %s389 = scalar_lea.sflag [#allocation5], %s388
          %s390 = sand.u32 %s61, 1
          %s391 = smul.addr %s390, 256
          %s392 = scalar_lea.vmem [#allocation4], %s391
          %s394 = ssub.s32 4096, 4096
          %395 = vsyncadd %s389, %s394
          %s396 = smul.addr %s25, 32
          %s397 = smul.addr %s396, 128
          %s398 = scalar_lea.hbm %s1, %s397
          %s399 = sshll.u32 %s392, 4
          %s400 = int_to_ptr.vmem [resolvable:$true] %s399
          %405 = dma.hbm_to_vmem [thread:$0]  %s398, 4096, %s400, %s389, 128, 128, 8
        $region60: #{acm_forward.2} parent=51 // pred_fallthru
          _
      $region52: #{acm_forward.2} parent=5 // pred_fallthru
        _
      %p406 = scmp.le.s32.totalorder 1, %s25
      %p407 = scmp.lt.s32.totalorder %s25, 3
      %p408 = pnand %p406, %p407
      %p409 = pneg %p408
      // Predicated region
      $region61: #{acm_forward.2} parent=5 // pred_check
        _
      $region62: #{acm_forward.2} parent=5 // pred_check_branch
        %411 = sbr.rel (%p408) target = $region64
      $region63: #{acm_forward.2} parent=5 // pred_region
        %s412 = ssub.s32 %s25, 1
        %s413 = sand.u32 %s38, 1
        %s414 = scalar_lea.sflag [#allocation3], %s413
        %s415 = sand.u32 %s38, 1
        %s416 = smul.addr %s415, 256
        %s417 = scalar_lea.vmem [#allocation2], %s416
        // Predicated region
        $region65: #{acm_forward.2} parent=63 // pred_check
          %p418 = pneg %p51
        $region66: #{acm_forward.2} parent=63 // pred_check_branch
          %420 = sbr.rel (%p418) target = $region68
        $region67: #{acm_forward.2} parent=63 // pred_region
          %421 = dma.done %s414, 4096
        $region68: #{acm_forward.2} parent=63 // pred_fallthru
          _
        %s422 = sand.u32 %s64, 1
        %s423 = scalar_lea.sflag [#allocation5], %s422
        %s424 = sand.u32 %s64, 1
        %s425 = smul.addr %s424, 256
        %s426 = scalar_lea.vmem [#allocation4], %s425
        // Predicated region
        $region69: #{acm_forward.2} parent=63 // pred_check
          %p427 = pneg %p77
        $region70: #{acm_forward.2} parent=63 // pred_check_branch
          %429 = sbr.rel (%p427) target = $region72
        $region71: #{acm_forward.2} parent=63 // pred_region
          %430 = dma.done %s423, 4096
        $region72: #{acm_forward.2} parent=63 // pred_fallthru
          _
        %s431 = sand.u32 %s38, 1
        %s432 = scalar_lea.sflag [#allocation3], %s431
        %s433 = sand.u32 %s38, 1
        %s434 = smul.addr %s433, 256
        %s435 = scalar_lea.vmem [#allocation2], %s434
        %p436 = pneg %p51
        %p437 = pneg %p48
        %s438 = sand.u32 %s64, 1
        %s439 = scalar_lea.sflag [#allocation5], %s438
        %s440 = sand.u32 %s64, 1
        %s441 = smul.addr %s440, 256
        %s442 = scalar_lea.vmem [#allocation4], %s441
        %p443 = pneg %p77
        %p444 = pneg %p74
        %p445 = pneg %p98
        %p446 = pneg %p95
        %p447 = pneg %p119
        %p448 = pneg %p116
        %p449 = pneg %p140
        %p450 = pneg %p137
        %p451 = pneg %p161
        %p452 = pneg %p158
        %p453 = pneg %p182
        %p454 = pneg %p179
        %p455 = pneg %p203
        %p456 = pneg %p200
        %p457 = pneg %p224
        %p458 = pneg %p221
        %p459 = pneg %p245
        %p460 = pneg %p242
        %p461 = pneg %p266
        %p462 = pneg %p263
        %p463 = pneg %p292
        %p464 = pneg %p289
        %p465 = scmp.lt.s32.totalorder %s30, 1
        %s466 = scalar_select %p465, %s30, 1
        %s467 = smul.addr %s466, 16
        %s468 = smul.addr %s467, 4
        %s469 = scalar_lea.vmem %s11, %s468
        %p470 = pneg %p318
        %p471 = pneg %p315
        %p472 = scmp.lt.s32.totalorder %s30, 1
        %s473 = scalar_select %p472, %s30, 1
        %s474 = smul.addr %s473, 16
        %s475 = smul.addr %s474, 4
        %s476 = scalar_lea.vmem %s12, %s475
        %p477 = scmp.lt.s32.totalorder %s30, 1
        %s478 = scalar_select %p477, %s30, 1
        %s479 = smul.addr %s478, 16
        %s480 = smul.addr %s479, 4
        %s481 = scalar_lea.vmem %s11, %s480
        %p482 = scmp.lt.s32.totalorder %s30, 1
        %s483 = scalar_select %p482, %s30, 1
        %s484 = smul.addr %s483, 16
        %s485 = smul.addr %s484, 4
        %s486 = scalar_lea.vmem %s12, %s485
        %v487 = vld [vmem:[%s417] sm:$0xff]
        %v488 = vld [vmem:[%s417 + $0x8] sm:$0xff]
        %v489 = vld [vmem:[%s417 + $0x10] sm:$0xff]
        %v490 = vld [vmem:[%s417 + $0x18] sm:$0xff]
        %v491 = vld [vmem:[%s417 + $0x20] sm:$0xff]
        %v492 = vld [vmem:[%s417 + $0x28] sm:$0xff]
        %v493 = vld [vmem:[%s417 + $0x30] sm:$0xff]
        %v494 = vld [vmem:[%s417 + $0x38] sm:$0xff]
        %v495 = vld [vmem:[%s417 + $0x40] sm:$0xff]
        %v496 = vld [vmem:[%s417 + $0x48] sm:$0xff]
        %v497 = vld [vmem:[%s417 + $0x50] sm:$0xff]
        %v498 = vld [vmem:[%s417 + $0x58] sm:$0xff]
        %v499 = vld [vmem:[%s417 + $0x60] sm:$0xff]
        %v500 = vld [vmem:[%s417 + $0x68] sm:$0xff]
        %v501 = vld [vmem:[%s417 + $0x70] sm:$0xff]
        %v502 = vld [vmem:[%s417 + $0x78] sm:$0xff]
        %v503 = vld [vmem:[%s417 + $0x80] sm:$0xff]
        %v504 = vld [vmem:[%s417 + $0x88] sm:$0xff]
        %v505 = vld [vmem:[%s417 + $0x90] sm:$0xff]
        %v506 = vld [vmem:[%s417 + $0x98] sm:$0xff]
        %v507 = vld [vmem:[%s417 + $0xa0] sm:$0xff]
        %v508 = vld [vmem:[%s417 + $0xa8] sm:$0xff]
        %v509 = vld [vmem:[%s417 + $0xb0] sm:$0xff]
        %v510 = vld [vmem:[%s417 + $0xb8] sm:$0xff]
        %v511 = vld [vmem:[%s417 + $0xc0] sm:$0xff]
        %v512 = vld [vmem:[%s417 + $0xc8] sm:$0xff]
        %v513 = vld [vmem:[%s417 + $0xd0] sm:$0xff]
        %v514 = vld [vmem:[%s417 + $0xd8] sm:$0xff]
        %v515 = vld [vmem:[%s417 + $0xe0] sm:$0xff]
        %v516 = vld [vmem:[%s417 + $0xe8] sm:$0xff]
        %v517 = vld [vmem:[%s417 + $0xf0] sm:$0xff]
        %v518 = vld [vmem:[%s417 + $0xf8] sm:$0xff]
        %v519 = vld [vmem:[%s426] sm:$0xff]
        %v520 = vld [vmem:[%s426 + $0x8] sm:$0xff]
        %v521 = vld [vmem:[%s426 + $0x10] sm:$0xff]
        %v522 = vld [vmem:[%s426 + $0x18] sm:$0xff]
        %v523 = vld [vmem:[%s426 + $0x20] sm:$0xff]
        %v524 = vld [vmem:[%s426 + $0x28] sm:$0xff]
        %v525 = vld [vmem:[%s426 + $0x30] sm:$0xff]
        %v526 = vld [vmem:[%s426 + $0x38] sm:$0xff]
        %v527 = vld [vmem:[%s426 + $0x40] sm:$0xff]
        %v528 = vld [vmem:[%s426 + $0x48] sm:$0xff]
        %v529 = vld [vmem:[%s426 + $0x50] sm:$0xff]
        %v530 = vld [vmem:[%s426 + $0x58] sm:$0xff]
        %v531 = vld [vmem:[%s426 + $0x60] sm:$0xff]
        %v532 = vld [vmem:[%s426 + $0x68] sm:$0xff]
        %v533 = vld [vmem:[%s426 + $0x70] sm:$0xff]
        %v534 = vld [vmem:[%s426 + $0x78] sm:$0xff]
        %v535 = vld [vmem:[%s426 + $0x80] sm:$0xff]
        %v536 = vld [vmem:[%s426 + $0x88] sm:$0xff]
        %v537 = vld [vmem:[%s426 + $0x90] sm:$0xff]
        %v538 = vld [vmem:[%s426 + $0x98] sm:$0xff]
        %v539 = vld [vmem:[%s426 + $0xa0] sm:$0xff]
        %v540 = vld [vmem:[%s426 + $0xa8] sm:$0xff]
        %v541 = vld [vmem:[%s426 + $0xb0] sm:$0xff]
        %v542 = vld [vmem:[%s426 + $0xb8] sm:$0xff]
        %v543 = vld [vmem:[%s426 + $0xc0] sm:$0xff]
        %v544 = vld [vmem:[%s426 + $0xc8] sm:$0xff]
        %v545 = vld [vmem:[%s426 + $0xd0] sm:$0xff]
        %v546 = vld [vmem:[%s426 + $0xd8] sm:$0xff]
        %v547 = vld [vmem:[%s426 + $0xe0] sm:$0xff]
        %v548 = vld [vmem:[%s426 + $0xe8] sm:$0xff]
        %v549 = vld [vmem:[%s426 + $0xf0] sm:$0xff]
        %v550 = vld [vmem:[%s426 + $0xf8] sm:$0xff]
        %v551 = vld [vmem:[%s2] sm:$0xff]
        %v552 = vld [vmem:[%s2 + $0x8] sm:$0xff]
        %v553 = vld [vmem:[%s2 + $0x10] sm:$0xff]
        %v554 = vld [vmem:[%s2 + $0x18] sm:$0xff]
        %v555 = vld [vmem:[%s2 + $0x20] sm:$0xff]
        %v556 = vld [vmem:[%s2 + $0x28] sm:$0xff]
        %v557 = vld [vmem:[%s2 + $0x30] sm:$0xff]
        %v558 = vld [vmem:[%s2 + $0x38] sm:$0xff]
        %v559 = vld [vmem:[%s2 + $0x40] sm:$0xff]
        %v560 = vld [vmem:[%s2 + $0x48] sm:$0xff]
        %v561 = vld [vmem:[%s2 + $0x50] sm:$0xff]
        %v562 = vld [vmem:[%s2 + $0x58] sm:$0xff]
        %v563 = vld [vmem:[%s2 + $0x60] sm:$0xff]
        %v564 = vld [vmem:[%s2 + $0x68] sm:$0xff]
        %v565 = vld [vmem:[%s2 + $0x70] sm:$0xff]
        %v566 = vld [vmem:[%s2 + $0x78] sm:$0xff]
        %v567 = vld [vmem:[%s2 + $0x80] sm:$0xff]
        %v568 = vld [vmem:[%s2 + $0x88] sm:$0xff]
        %v569 = vld [vmem:[%s2 + $0x90] sm:$0xff]
        %v570 = vld [vmem:[%s2 + $0x98] sm:$0xff]
        %v571 = vld [vmem:[%s2 + $0xa0] sm:$0xff]
        %v572 = vld [vmem:[%s2 + $0xa8] sm:$0xff]
        %v573 = vld [vmem:[%s2 + $0xb0] sm:$0xff]
        %v574 = vld [vmem:[%s2 + $0xb8] sm:$0xff]
        %v575 = vld [vmem:[%s2 + $0xc0] sm:$0xff]
        %v576 = vld [vmem:[%s2 + $0xc8] sm:$0xff]
        %v577 = vld [vmem:[%s2 + $0xd0] sm:$0xff]
        %v578 = vld [vmem:[%s2 + $0xd8] sm:$0xff]
        %v579 = vld [vmem:[%s2 + $0xe0] sm:$0xff]
        %v580 = vld [vmem:[%s2 + $0xe8] sm:$0xff]
        %v581 = vld [vmem:[%s2 + $0xf0] sm:$0xff]
        %v582 = vld [vmem:[%s2 + $0xf8] sm:$0xff]
        %v583 = vld [vmem:[%s3] sm:$0xff]
        %v584 = vld [vmem:[%s3 + $0x8] sm:$0xff]
        %v585 = vld [vmem:[%s3 + $0x10] sm:$0xff]
        %v586 = vld [vmem:[%s3 + $0x18] sm:$0xff]
        %v587 = vld [vmem:[%s3 + $0x20] sm:$0xff]
        %v588 = vld [vmem:[%s3 + $0x28] sm:$0xff]
        %v589 = vld [vmem:[%s3 + $0x30] sm:$0xff]
        %v590 = vld [vmem:[%s3 + $0x38] sm:$0xff]
        %v591 = vld [vmem:[%s4] sm:$0x1]
        %v593 = vlaneseq
        %v594 = vshrl.u32 %v593, 7
        %v595 = vsub.s32 0, %v594
        %v596 = vrot.slane %v591, %v595
        %vm598 = vcmask 523264
        %v600 = vsel %vm598, %v487, 0
        %v603 = vsel %vm598, %v488, 0
        %v606 = vsel %vm598, %v489, 0
        %v609 = vsel %vm598, %v490, 0
        %v612 = vsel %vm598, %v491, 0
        %v615 = vsel %vm598, %v492, 0
        %v618 = vsel %vm598, %v493, 0
        %v621 = vsel %vm598, %v494, 0
        %v624 = vsel %vm598, %v495, 0
        %v627 = vsel %vm598, %v496, 0
        %v630 = vsel %vm598, %v497, 0
        %v633 = vsel %vm598, %v498, 0
        %v636 = vsel %vm598, %v499, 0
        %v639 = vsel %vm598, %v500, 0
        %v642 = vsel %vm598, %v501, 0
        %v645 = vsel %vm598, %v502, 0
        %v648 = vsel %vm598, %v503, 0
        %v651 = vsel %vm598, %v504, 0
        %v654 = vsel %vm598, %v505, 0
        %v657 = vsel %vm598, %v506, 0
        %v660 = vsel %vm598, %v507, 0
        %v663 = vsel %vm598, %v508, 0
        %v666 = vsel %vm598, %v509, 0
        %v669 = vsel %vm598, %v510, 0
        %v672 = vsel %vm598, %v511, 0
        %v675 = vsel %vm598, %v512, 0
        %v678 = vsel %vm598, %v513, 0
        %v681 = vsel %vm598, %v514, 0
        %v684 = vsel %vm598, %v515, 0
        %v687 = vsel %vm598, %v516, 0
        %v690 = vsel %vm598, %v517, 0
        %v693 = vsel %vm598, %v518, 0
        %695 = vmatprep.subr.mxu0 0.0
        %696 = vmatpush1.msra.mxu0 %v583
        %697 = vmatprep.subr.mxu0 0.0
        %698 = vmatpush1.msra.mxu0 %v584
        %699 = vmatprep.subr.mxu0 0.0
        %700 = vmatpush1.msra.mxu0 %v585
        %701 = vmatprep.subr.mxu0 0.0
        %702 = vmatpush1.msra.mxu0 %v586
        %703 = vmatprep.subr.mxu0 0.0
        %704 = vmatpush1.msra.mxu0 %v587
        %705 = vmatprep.subr.mxu0 0.0
        %706 = vmatpush1.msra.mxu0 %v588
        %707 = vmatprep.subr.mxu0 0.0
        %708 = vmatpush1.msra.mxu0 %v589
        %709 = vmatprep.subr.mxu0 0.0
        %710 = vmatpush1.msra.mxu0 %v590
        %711 = vmatprep.subr.mxu0 0.0
        %712 = vmatpush1.msra.mxu0 0.0
        %713 = vmatprep.subr.mxu0 0.0
        %714 = vmatpush1.msra.mxu0 0.0
        %715 = vmatprep.subr.mxu0 0.0
        %716 = vmatpush1.msra.mxu0 0.0
        %717 = vmatprep.subr.mxu0 0.0
        %718 = vmatpush1.msra.mxu0 0.0
        %719 = vmatprep.subr.mxu0 0.0
        %720 = vmatpush1.msra.mxu0 0.0
        %721 = vmatprep.subr.mxu0 0.0
        %722 = vmatpush1.msra.mxu0 0.0
        %723 = vmatprep.subr.mxu0 0.0
        %724 = vmatpush1.msra.mxu0 0.0
        %725 = vmatprep.subr.mxu0 0.0
        %726 = vmatpush1.msra.mxu0 0.0
        %727 = vmatprep.subr.mxu0 0.0
        %728 = vmatpush1.msra.mxu0 0.0
        %729 = vmatprep.subr.mxu0 0.0
        %730 = vmatpush1.msra.mxu0 0.0
        %731 = vmatprep.subr.mxu0 0.0
        %732 = vmatpush1.msra.mxu0 0.0
        %733 = vmatprep.subr.mxu0 0.0
        %734 = vmatpush1.msra.mxu0 0.0
        %735 = vmatprep.subr.mxu0 0.0
        %736 = vmatpush1.msra.mxu0 0.0
        %737 = vmatprep.subr.mxu0 0.0
        %738 = vmatpush1.msra.mxu0 0.0
        %739 = vmatprep.subr.mxu0 0.0
        %740 = vmatpush1.msra.mxu0 0.0
        %741 = vmatprep.subr.mxu0 0.0
        %742 = vmatpush1.msra.mxu0 0.0
        %743 = vmatprep.subr.mxu0 0.0
        %744 = vmatpush1.msra.mxu0 0.0
        %745 = vmatprep.subr.mxu0 0.0
        %746 = vmatpush1.msra.mxu0 0.0
        %747 = vmatprep.subr.mxu0 0.0
        %748 = vmatpush1.msra.mxu0 0.0
        %749 = vmatprep.subr.mxu0 0.0
        %750 = vmatpush1.msra.mxu0 0.0
        %751 = vmatprep.subr.mxu0 0.0
        %752 = vmatpush1.msra.mxu0 0.0
        %753 = vmatprep.subr.mxu0 0.0
        %754 = vmatpush1.msra.mxu0 0.0
        %755 = vmatprep.subr.mxu0 0.0
        %756 = vmatpush1.msra.mxu0 0.0
        %757 = vmatprep.subr.mxu0 0.0
        %758 = vmatpush1.msra.mxu0 0.0
        %759 = vmatprep.mubr.f32.mxu0 0.0
        %760 = vmatmul.mubr.f32.gmra.mrb[0].mxu0 %v600
        %v761 = vpop.f32.mrb[0].mxu0
        %v762 = vadd.f32 %v596, %v761
        %v763 = vpop.f32.mrb[0].mxu0
        %764 = vmatprep.mubr.f32.mxu0 0.0
        %765 = vmatmul.mubr.f32.gmra.mrb[0].mxu0 %v603
        %v766 = vpop.f32.mrb[0].mxu0
        %v767 = vadd.f32 %v596, %v766
        %v768 = vpop.f32.mrb[0].mxu0
        %769 = vmatprep.mubr.f32.mxu0 0.0
        %770 = vmatmul.mubr.f32.gmra.mrb[0].mxu0 %v606
        %v771 = vpop.f32.mrb[0].mxu0
        %v772 = vadd.f32 %v596, %v771
        %v773 = vpop.f32.mrb[0].mxu0
        %774 = vmatprep.mubr.f32.mxu0 0.0
        %775 = vmatmul.mubr.f32.gmra.mrb[0].mxu0 %v609
        %v776 = vpop.f32.mrb[0].mxu0
        %v777 = vadd.f32 %v596, %v776
        %v778 = vpop.f32.mrb[0].mxu0
        %779 = vmatprep.mubr.f32.mxu0 0.0
        %780 = vmatmul.mubr.f32.gmra.mrb[0].mxu0 %v612
        %v781 = vpop.f32.mrb[0].mxu0
        %v782 = vadd.f32 %v596, %v781
        %v783 = vpop.f32.mrb[0].mxu0
        %784 = vmatprep.mubr.f32.mxu0 0.0
        %785 = vmatmul.mubr.f32.gmra.mrb[0].mxu0 %v615
        %v786 = vpop.f32.mrb[0].mxu0
        %v787 = vadd.f32 %v596, %v786
        %v788 = vpop.f32.mrb[0].mxu0
        %789 = vmatprep.mubr.f32.mxu0 0.0
        %790 = vmatmul.mubr.f32.gmra.mrb[0].mxu0 %v618
        %v791 = vpop.f32.mrb[0].mxu0
        %v792 = vadd.f32 %v596, %v791
        %v793 = vpop.f32.mrb[0].mxu0
        %794 = vmatprep.mubr.f32.mxu0 0.0
        %795 = vmatmul.mubr.f32.gmra.mrb[0].mxu0 %v621
        %v796 = vpop.f32.mrb[0].mxu0
        %v797 = vadd.f32 %v596, %v796
        %v798 = vpop.f32.mrb[0].mxu0
        %799 = vmatprep.mubr.f32.mxu0 0.0
        %800 = vmatmul.mubr.f32.gmra.mrb[0].mxu0 %v624
        %v801 = vpop.f32.mrb[0].mxu0
        %v802 = vadd.f32 %v596, %v801
        %v803 = vpop.f32.mrb[0].mxu0
        %804 = vmatprep.mubr.f32.mxu0 0.0
        %805 = vmatmul.mubr.f32.gmra.mrb[0].mxu0 %v627
        %v806 = vpop.f32.mrb[0].mxu0
        %v807 = vadd.f32 %v596, %v806
        %v808 = vpop.f32.mrb[0].mxu0
        %809 = vmatprep.mubr.f32.mxu0 0.0
        %810 = vmatmul.mubr.f32.gmra.mrb[0].mxu0 %v630
        %v811 = vpop.f32.mrb[0].mxu0
        %v812 = vadd.f32 %v596, %v811
        %v813 = vpop.f32.mrb[0].mxu0
        %814 = vmatprep.mubr.f32.mxu0 0.0
        %815 = vmatmul.mubr.f32.gmra.mrb[0].mxu0 %v633
        %v816 = vpop.f32.mrb[0].mxu0
        %v817 = vadd.f32 %v596, %v816
        %v818 = vpop.f32.mrb[0].mxu0
        %819 = vmatprep.mubr.f32.mxu0 0.0
        %820 = vmatmul.mubr.f32.gmra.mrb[0].mxu0 %v636
        %v821 = vpop.f32.mrb[0].mxu0
        %v822 = vadd.f32 %v596, %v821
        %v823 = vpop.f32.mrb[0].mxu0
        %824 = vmatprep.mubr.f32.mxu0 0.0
        %825 = vmatmul.mubr.f32.gmra.mrb[0].mxu0 %v639
        %v826 = vpop.f32.mrb[0].mxu0
        %v827 = vadd.f32 %v596, %v826
        %v828 = vpop.f32.mrb[0].mxu0
        %829 = vmatprep.mubr.f32.mxu0 0.0
        %830 = vmatmul.mubr.f32.gmra.mrb[0].mxu0 %v642
        %v831 = vpop.f32.mrb[0].mxu0
        %v832 = vadd.f32 %v596, %v831
        %v833 = vpop.f32.mrb[0].mxu0
        %834 = vmatprep.mubr.f32.mxu0 0.0
        %835 = vmatmul.mubr.f32.gmra.mrb[0].mxu0 %v645
        %v836 = vpop.f32.mrb[0].mxu0
        %v837 = vadd.f32 %v596, %v836
        %v838 = vpop.f32.mrb[0].mxu0
        %839 = vmatprep.mubr.f32.mxu0 0.0
        %840 = vmatmul.mubr.f32.gmra.mrb[0].mxu0 %v648
        %v841 = vpop.f32.mrb[0].mxu0
        %v842 = vadd.f32 %v596, %v841
        %v843 = vpop.f32.mrb[0].mxu0
        %844 = vmatprep.mubr.f32.mxu0 0.0
        %845 = vmatmul.mubr.f32.gmra.mrb[0].mxu0 %v651
        %v846 = vpop.f32.mrb[0].mxu0
        %v847 = vadd.f32 %v596, %v846
        %v848 = vpop.f32.mrb[0].mxu0
        %849 = vmatprep.mubr.f32.mxu0 0.0
        %850 = vmatmul.mubr.f32.gmra.mrb[0].mxu0 %v654
        %v851 = vpop.f32.mrb[0].mxu0
        %v852 = vadd.f32 %v596, %v851
        %v853 = vpop.f32.mrb[0].mxu0
        %854 = vmatprep.mubr.f32.mxu0 0.0
        %855 = vmatmul.mubr.f32.gmra.mrb[0].mxu0 %v657
        %v856 = vpop.f32.mrb[0].mxu0
        %v857 = vadd.f32 %v596, %v856
        %v858 = vpop.f32.mrb[0].mxu0
        %859 = vmatprep.mubr.f32.mxu0 0.0
        %860 = vmatmul.mubr.f32.gmra.mrb[0].mxu0 %v660
        %v861 = vpop.f32.mrb[0].mxu0
        %v862 = vadd.f32 %v596, %v861
        %v863 = vpop.f32.mrb[0].mxu0
        %864 = vmatprep.mubr.f32.mxu0 0.0
        %865 = vmatmul.mubr.f32.gmra.mrb[0].mxu0 %v663
        %v866 = vpop.f32.mrb[0].mxu0
        %v867 = vadd.f32 %v596, %v866
        %v868 = vpop.f32.mrb[0].mxu0
        %869 = vmatprep.mubr.f32.mxu0 0.0
        %870 = vmatmul.mubr.f32.gmra.mrb[0].mxu0 %v666
        %v871 = vpop.f32.mrb[0].mxu0
        %v872 = vadd.f32 %v596, %v871
        %v873 = vpop.f32.mrb[0].mxu0
        %874 = vmatprep.mubr.f32.mxu0 0.0
        %875 = vmatmul.mubr.f32.gmra.mrb[0].mxu0 %v669
        %v876 = vpop.f32.mrb[0].mxu0
        %v877 = vadd.f32 %v596, %v876
        %v878 = vpop.f32.mrb[0].mxu0
        %879 = vmatprep.mubr.f32.mxu0 0.0
        %880 = vmatmul.mubr.f32.gmra.mrb[0].mxu0 %v672
        %v881 = vpop.f32.mrb[0].mxu0
        %v882 = vadd.f32 %v596, %v881
        %v883 = vpop.f32.mrb[0].mxu0
        %884 = vmatprep.mubr.f32.mxu0 0.0
        %885 = vmatmul.mubr.f32.gmra.mrb[0].mxu0 %v675
        %v886 = vpop.f32.mrb[0].mxu0
        %v887 = vadd.f32 %v596, %v886
        %v888 = vpop.f32.mrb[0].mxu0
        %889 = vmatprep.mubr.f32.mxu0 0.0
        %890 = vmatmul.mubr.f32.gmra.mrb[0].mxu0 %v678
        %v891 = vpop.f32.mrb[0].mxu0
        %v892 = vadd.f32 %v596, %v891
        %v893 = vpop.f32.mrb[0].mxu0
        %894 = vmatprep.mubr.f32.mxu0 0.0
        %895 = vmatmul.mubr.f32.gmra.mrb[0].mxu0 %v681
        %v896 = vpop.f32.mrb[0].mxu0
        %v897 = vadd.f32 %v596, %v896
        %v898 = vpop.f32.mrb[0].mxu0
        %899 = vmatprep.mubr.f32.mxu0 0.0
        %900 = vmatmul.mubr.f32.gmra.mrb[0].mxu0 %v684
        %v901 = vpop.f32.mrb[0].mxu0
        %v902 = vadd.f32 %v596, %v901
        %v903 = vpop.f32.mrb[0].mxu0
        %904 = vmatprep.mubr.f32.mxu0 0.0
        %905 = vmatmul.mubr.f32.gmra.mrb[0].mxu0 %v687
        %v906 = vpop.f32.mrb[0].mxu0
        %v907 = vadd.f32 %v596, %v906
        %v908 = vpop.f32.mrb[0].mxu0
        %909 = vmatprep.mubr.f32.mxu0 0.0
        %910 = vmatmul.mubr.f32.gmra.mrb[0].mxu0 %v690
        %v911 = vpop.f32.mrb[0].mxu0
        %v912 = vadd.f32 %v596, %v911
        %v913 = vpop.f32.mrb[0].mxu0
        %914 = vmatprep.mubr.f32.mxu0 0.0
        %915 = vmatmul.mubr.f32.gmra.mrb[0].mxu0 %v693
        %v916 = vpop.f32.mrb[0].mxu0
        %v917 = vadd.f32 %v596, %v916
        %v918 = vpop.f32.mrb[0].mxu0
        %919 = vdwg.mxu0
        %v920 = vmax.f32 %v762, 0.0
        %v921 = vmax.f32 %v767, 0.0
        %v922 = vmax.f32 %v772, 0.0
        %v923 = vmax.f32 %v777, 0.0
        %v924 = vmax.f32 %v782, 0.0
        %v925 = vmax.f32 %v787, 0.0
        %v926 = vmax.f32 %v792, 0.0
        %v927 = vmax.f32 %v797, 0.0
        %v928 = vmax.f32 %v802, 0.0
        %v929 = vmax.f32 %v807, 0.0
        %v930 = vmax.f32 %v812, 0.0
        %v931 = vmax.f32 %v817, 0.0
        %v932 = vmax.f32 %v822, 0.0
        %v933 = vmax.f32 %v827, 0.0
        %v934 = vmax.f32 %v832, 0.0
        %v935 = vmax.f32 %v837, 0.0
        %v936 = vmax.f32 %v842, 0.0
        %v937 = vmax.f32 %v847, 0.0
        %v938 = vmax.f32 %v852, 0.0
        %v939 = vmax.f32 %v857, 0.0
        %v940 = vmax.f32 %v862, 0.0
        %v941 = vmax.f32 %v867, 0.0
        %v942 = vmax.f32 %v872, 0.0
        %v943 = vmax.f32 %v877, 0.0
        %v944 = vmax.f32 %v882, 0.0
        %v945 = vmax.f32 %v887, 0.0
        %v946 = vmax.f32 %v892, 0.0
        %v947 = vmax.f32 %v897, 0.0
        %v948 = vmax.f32 %v902, 0.0
        %v949 = vmax.f32 %v907, 0.0
        %v950 = vmax.f32 %v912, 0.0
        %v951 = vmax.f32 %v917, 0.0
        %v952 = vld [vmem:[%s5] sm:$0xff]
        %v953 = vld [vmem:[%s5 + $0x8] sm:$0xff]
        %v954 = vld [vmem:[%s5 + $0x10] sm:$0xff]
        %v955 = vld [vmem:[%s5 + $0x18] sm:$0xff]
        %v956 = vld [vmem:[%s5 + $0x20] sm:$0xff]
        %v957 = vld [vmem:[%s5 + $0x28] sm:$0xff]
        %v958 = vld [vmem:[%s5 + $0x30] sm:$0xff]
        %v959 = vld [vmem:[%s5 + $0x38] sm:$0xff]
        %v960 = vld [vmem:[%s6] sm:$0x1]
        %v962 = vlaneseq
        %v963 = vshrl.u32 %v962, 7
        %v964 = vsub.s32 0, %v963
        %v965 = vrot.slane %v960, %v964
        %v968 = vsel %vm598, %v519, 0
        %v971 = vsel %vm598, %v520, 0
        %v974 = vsel %vm598, %v521, 0
        %v977 = vsel %vm598, %v522, 0
        %v980 = vsel %vm598, %v523, 0
        %v983 = vsel %vm598, %v524, 0
        %v986 = vsel %vm598, %v525, 0
        %v989 = vsel %vm598, %v526, 0
        %v992 = vsel %vm598, %v527, 0
        %v995 = vsel %vm598, %v528, 0
        %v998 = vsel %vm598, %v529, 0
        %v1001 = vsel %vm598, %v530, 0
        %v1004 = vsel %vm598, %v531, 0
        %v1007 = vsel %vm598, %v532, 0
        %v1010 = vsel %vm598, %v533, 0
        %v1013 = vsel %vm598, %v534, 0
        %v1016 = vsel %vm598, %v535, 0
        %v1019 = vsel %vm598, %v536, 0
        %v1022 = vsel %vm598, %v537, 0
        %v1025 = vsel %vm598, %v538, 0
        %v1028 = vsel %vm598, %v539, 0
        %v1031 = vsel %vm598, %v540, 0
        %v1034 = vsel %vm598, %v541, 0
        %v1037 = vsel %vm598, %v542, 0
        %v1040 = vsel %vm598, %v543, 0
        %v1043 = vsel %vm598, %v544, 0
        %v1046 = vsel %vm598, %v545, 0
        %v1049 = vsel %vm598, %v546, 0
        %v1052 = vsel %vm598, %v547, 0
        %v1055 = vsel %vm598, %v548, 0
        %v1058 = vsel %vm598, %v549, 0
        %v1061 = vsel %vm598, %v550, 0
        %1063 = vmatprep.subr.mxu0 0.0
        %1064 = vmatpush1.msra.mxu0 %v952
        %1065 = vmatprep.subr.mxu0 0.0
        %1066 = vmatpush1.msra.mxu0 %v953
        %1067 = vmatprep.subr.mxu0 0.0
        %1068 = vmatpush1.msra.mxu0 %v954
        %1069 = vmatprep.subr.mxu0 0.0
        %1070 = vmatpush1.msra.mxu0 %v955
        %1071 = vmatprep.subr.mxu0 0.0
        %1072 = vmatpush1.msra.mxu0 %v956
        %1073 = vmatprep.subr.mxu0 0.0
        %1074 = vmatpush1.msra.mxu0 %v957
        %1075 = vmatprep.subr.mxu0 0.0
        %1076 = vmatpush1.msra.mxu0 %v958
        %1077 = vmatprep.subr.mxu0 0.0
        %1078 = vmatpush1.msra.mxu0 %v959
        %1079 = vmatprep.subr.mxu0 0.0
        %1080 = vmatpush1.msra.mxu0 0.0
        %1081 = vmatprep.subr.mxu0 0.0
        %1082 = vmatpush1.msra.mxu0 0.0
        %1083 = vmatprep.subr.mxu0 0.0
        %1084 = vmatpush1.msra.mxu0 0.0
        %1085 = vmatprep.subr.mxu0 0.0
        %1086 = vmatpush1.msra.mxu0 0.0
        %1087 = vmatprep.subr.mxu0 0.0
        %1088 = vmatpush1.msra.mxu0 0.0
        %1089 = vmatprep.subr.mxu0 0.0
        %1090 = vmatpush1.msra.mxu0 0.0
        %1091 = vmatprep.subr.mxu0 0.0
        %1092 = vmatpush1.msra.mxu0 0.0
        %1093 = vmatprep.subr.mxu0 0.0
        %1094 = vmatpush1.msra.mxu0 0.0
        %1095 = vmatprep.subr.mxu0 0.0
        %1096 = vmatpush1.msra.mxu0 0.0
        %1097 = vmatprep.subr.mxu0 0.0
        %1098 = vmatpush1.msra.mxu0 0.0
        %1099 = vmatprep.subr.mxu0 0.0
        %1100 = vmatpush1.msra.mxu0 0.0
        %1101 = vmatprep.subr.mxu0 0.0
        %1102 = vmatpush1.msra.mxu0 0.0
        %1103 = vmatprep.subr.mxu0 0.0
        %1104 = vmatpush1.msra.mxu0 0.0
        %1105 = vmatprep.subr.mxu0 0.0
        %1106 = vmatpush1.msra.mxu0 0.0
        %1107 = vmatprep.subr.mxu0 0.0
        %1108 = vmatpush1.msra.mxu0 0.0
        %1109 = vmatprep.subr.mxu0 0.0
        %1110 = vmatpush1.msra.mxu0 0.0
        %1111 = vmatprep.subr.mxu0 0.0
        %1112 = vmatpush1.msra.mxu0 0.0
        %1113 = vmatprep.subr.mxu0 0.0
        %1114 = vmatpush1.msra.mxu0 0.0
        %1115 = vmatprep.subr.mxu0 0.0
        %1116 = vmatpush1.msra.mxu0 0.0
        %1117 = vmatprep.subr.mxu0 0.0
        %1118 = vmatpush1.msra.mxu0 0.0
        %1119 = vmatprep.subr.mxu0 0.0
        %1120 = vmatpush1.msra.mxu0 0.0
        %1121 = vmatprep.subr.mxu0 0.0
        %1122 = vmatpush1.msra.mxu0 0.0
        %1123 = vmatprep.subr.mxu0 0.0
        %1124 = vmatpush1.msra.mxu0 0.0
        %1125 = vmatprep.subr.mxu0 0.0
        %1126 = vmatpush1.msra.mxu0 0.0
        %1127 = vmatprep.mubr.f32.mxu0 0.0
        %1128 = vmatmul.mubr.f32.gmra.mrb[0].mxu0 %v968
        %v1129 = vpop.f32.mrb[0].mxu0
        %v1130 = vadd.f32 %v965, %v1129
        %v1131 = vpop.f32.mrb[0].mxu0
        %1132 = vmatprep.mubr.f32.mxu0 0.0
        %1133 = vmatmul.mubr.f32.gmra.mrb[0].mxu0 %v971
        %v1134 = vpop.f32.mrb[0].mxu0
        %v1135 = vadd.f32 %v965, %v1134
        %v1136 = vpop.f32.mrb[0].mxu0
        %1137 = vmatprep.mubr.f32.mxu0 0.0
        %1138 = vmatmul.mubr.f32.gmra.mrb[0].mxu0 %v974
        %v1139 = vpop.f32.mrb[0].mxu0
        %v1140 = vadd.f32 %v965, %v1139
        %v1141 = vpop.f32.mrb[0].mxu0
        %1142 = vmatprep.mubr.f32.mxu0 0.0
        %1143 = vmatmul.mubr.f32.gmra.mrb[0].mxu0 %v977
        %v1144 = vpop.f32.mrb[0].mxu0
        %v1145 = vadd.f32 %v965, %v1144
        %v1146 = vpop.f32.mrb[0].mxu0
        %1147 = vmatprep.mubr.f32.mxu0 0.0
        %1148 = vmatmul.mubr.f32.gmra.mrb[0].mxu0 %v980
        %v1149 = vpop.f32.mrb[0].mxu0
        %v1150 = vadd.f32 %v965, %v1149
        %v1151 = vpop.f32.mrb[0].mxu0
        %1152 = vmatprep.mubr.f32.mxu0 0.0
        %1153 = vmatmul.mubr.f32.gmra.mrb[0].mxu0 %v983
        %v1154 = vpop.f32.mrb[0].mxu0
        %v1155 = vadd.f32 %v965, %v1154
        %v1156 = vpop.f32.mrb[0].mxu0
        %1157 = vmatprep.mubr.f32.mxu0 0.0
        %1158 = vmatmul.mubr.f32.gmra.mrb[0].mxu0 %v986
        %v1159 = vpop.f32.mrb[0].mxu0
        %v1160 = vadd.f32 %v965, %v1159
        %v1161 = vpop.f32.mrb[0].mxu0
        %1162 = vmatprep.mubr.f32.mxu0 0.0
        %1163 = vmatmul.mubr.f32.gmra.mrb[0].mxu0 %v989
        %v1164 = vpop.f32.mrb[0].mxu0
        %v1165 = vadd.f32 %v965, %v1164
        %v1166 = vpop.f32.mrb[0].mxu0
        %1167 = vmatprep.mubr.f32.mxu0 0.0
        %1168 = vmatmul.mubr.f32.gmra.mrb[0].mxu0 %v992
        %v1169 = vpop.f32.mrb[0].mxu0
        %v1170 = vadd.f32 %v965, %v1169
        %v1171 = vpop.f32.mrb[0].mxu0
        %1172 = vmatprep.mubr.f32.mxu0 0.0
        %1173 = vmatmul.mubr.f32.gmra.mrb[0].mxu0 %v995
        %v1174 = vpop.f32.mrb[0].mxu0
        %v1175 = vadd.f32 %v965, %v1174
        %v1176 = vpop.f32.mrb[0].mxu0
        %1177 = vmatprep.mubr.f32.mxu0 0.0
        %1178 = vmatmul.mubr.f32.gmra.mrb[0].mxu0 %v998
        %v1179 = vpop.f32.mrb[0].mxu0
        %v1180 = vadd.f32 %v965, %v1179
        %v1181 = vpop.f32.mrb[0].mxu0
        %1182 = vmatprep.mubr.f32.mxu0 0.0
        %1183 = vmatmul.mubr.f32.gmra.mrb[0].mxu0 %v1001
        %v1184 = vpop.f32.mrb[0].mxu0
        %v1185 = vadd.f32 %v965, %v1184
        %v1186 = vpop.f32.mrb[0].mxu0
        %1187 = vmatprep.mubr.f32.mxu0 0.0
        %1188 = vmatmul.mubr.f32.gmra.mrb[0].mxu0 %v1004
        %v1189 = vpop.f32.mrb[0].mxu0
        %v1190 = vadd.f32 %v965, %v1189
        %v1191 = vpop.f32.mrb[0].mxu0
        %1192 = vmatprep.mubr.f32.mxu0 0.0
        %1193 = vmatmul.mubr.f32.gmra.mrb[0].mxu0 %v1007
        %v1194 = vpop.f32.mrb[0].mxu0
        %v1195 = vadd.f32 %v965, %v1194
        %v1196 = vpop.f32.mrb[0].mxu0
        %1197 = vmatprep.mubr.f32.mxu0 0.0
        %1198 = vmatmul.mubr.f32.gmra.mrb[0].mxu0 %v1010
        %v1199 = vpop.f32.mrb[0].mxu0
        %v1200 = vadd.f32 %v965, %v1199
        %v1201 = vpop.f32.mrb[0].mxu0
        %1202 = vmatprep.mubr.f32.mxu0 0.0
        %1203 = vmatmul.mubr.f32.gmra.mrb[0].mxu0 %v1013
        %v1204 = vpop.f32.mrb[0].mxu0
        %v1205 = vadd.f32 %v965, %v1204
        %v1206 = vpop.f32.mrb[0].mxu0
        %1207 = vmatprep.mubr.f32.mxu0 0.0
        %1208 = vmatmul.mubr.f32.gmra.mrb[0].mxu0 %v1016
        %v1209 = vpop.f32.mrb[0].mxu0
        %v1210 = vadd.f32 %v965, %v1209
        %v1211 = vpop.f32.mrb[0].mxu0
        %1212 = vmatprep.mubr.f32.mxu0 0.0
        %1213 = vmatmul.mubr.f32.gmra.mrb[0].mxu0 %v1019
        %v1214 = vpop.f32.mrb[0].mxu0
        %v1215 = vadd.f32 %v965, %v1214
        %v1216 = vpop.f32.mrb[0].mxu0
        %1217 = vmatprep.mubr.f32.mxu0 0.0
        %1218 = vmatmul.mubr.f32.gmra.mrb[0].mxu0 %v1022
        %v1219 = vpop.f32.mrb[0].mxu0
        %v1220 = vadd.f32 %v965, %v1219
        %v1221 = vpop.f32.mrb[0].mxu0
        %1222 = vmatprep.mubr.f32.mxu0 0.0
        %1223 = vmatmul.mubr.f32.gmra.mrb[0].mxu0 %v1025
        %v1224 = vpop.f32.mrb[0].mxu0
        %v1225 = vadd.f32 %v965, %v1224
        %v1226 = vpop.f32.mrb[0].mxu0
        %1227 = vmatprep.mubr.f32.mxu0 0.0
        %1228 = vmatmul.mubr.f32.gmra.mrb[0].mxu0 %v1028
        %v1229 = vpop.f32.mrb[0].mxu0
        %v1230 = vadd.f32 %v965, %v1229
        %v1231 = vpop.f32.mrb[0].mxu0
        %1232 = vmatprep.mubr.f32.mxu0 0.0
        %1233 = vmatmul.mubr.f32.gmra.mrb[0].mxu0 %v1031
        %v1234 = vpop.f32.mrb[0].mxu0
        %v1235 = vadd.f32 %v965, %v1234
        %v1236 = vpop.f32.mrb[0].mxu0
        %1237 = vmatprep.mubr.f32.mxu0 0.0
        %1238 = vmatmul.mubr.f32.gmra.mrb[0].mxu0 %v1034
        %v1239 = vpop.f32.mrb[0].mxu0
        %v1240 = vadd.f32 %v965, %v1239
        %v1241 = vpop.f32.mrb[0].mxu0
        %1242 = vmatprep.mubr.f32.mxu0 0.0
        %1243 = vmatmul.mubr.f32.gmra.mrb[0].mxu0 %v1037
        %v1244 = vpop.f32.mrb[0].mxu0
        %v1245 = vadd.f32 %v965, %v1244
        %v1246 = vpop.f32.mrb[0].mxu0
        %1247 = vmatprep.mubr.f32.mxu0 0.0
        %1248 = vmatmul.mubr.f32.gmra.mrb[0].mxu0 %v1040
        %v1249 = vpop.f32.mrb[0].mxu0
        %v1250 = vadd.f32 %v965, %v1249
        %v1251 = vpop.f32.mrb[0].mxu0
        %1252 = vmatprep.mubr.f32.mxu0 0.0
        %1253 = vmatmul.mubr.f32.gmra.mrb[0].mxu0 %v1043
        %v1254 = vpop.f32.mrb[0].mxu0
        %v1255 = vadd.f32 %v965, %v1254
        %v1256 = vpop.f32.mrb[0].mxu0
        %1257 = vmatprep.mubr.f32.mxu0 0.0
        %1258 = vmatmul.mubr.f32.gmra.mrb[0].mxu0 %v1046
        %v1259 = vpop.f32.mrb[0].mxu0
        %v1260 = vadd.f32 %v965, %v1259
        %v1261 = vpop.f32.mrb[0].mxu0
        %1262 = vmatprep.mubr.f32.mxu0 0.0
        %1263 = vmatmul.mubr.f32.gmra.mrb[0].mxu0 %v1049
        %v1264 = vpop.f32.mrb[0].mxu0
        %v1265 = vadd.f32 %v965, %v1264
        %v1266 = vpop.f32.mrb[0].mxu0
        %1267 = vmatprep.mubr.f32.mxu0 0.0
        %1268 = vmatmul.mubr.f32.gmra.mrb[0].mxu0 %v1052
        %v1269 = vpop.f32.mrb[0].mxu0
        %v1270 = vadd.f32 %v965, %v1269
        %v1271 = vpop.f32.mrb[0].mxu0
        %1272 = vmatprep.mubr.f32.mxu0 0.0
        %1273 = vmatmul.mubr.f32.gmra.mrb[0].mxu0 %v1055
        %v1274 = vpop.f32.mrb[0].mxu0
        %v1275 = vadd.f32 %v965, %v1274
        %v1276 = vpop.f32.mrb[0].mxu0
        %1277 = vmatprep.mubr.f32.mxu0 0.0
        %1278 = vmatmul.mubr.f32.gmra.mrb[0].mxu0 %v1058
        %v1279 = vpop.f32.mrb[0].mxu0
        %v1280 = vadd.f32 %v965, %v1279
        %v1281 = vpop.f32.mrb[0].mxu0
        %1282 = vmatprep.mubr.f32.mxu0 0.0
        %1283 = vmatmul.mubr.f32.gmra.mrb[0].mxu0 %v1061
        %v1284 = vpop.f32.mrb[0].mxu0
        %v1285 = vadd.f32 %v965, %v1284
        %v1286 = vpop.f32.mrb[0].mxu0
        %1287 = vdwg.mxu0
        %v1288 = vmax.f32 %v1130, 0.0
        %v1289 = vmax.f32 %v1135, 0.0
        %v1290 = vmax.f32 %v1140, 0.0
        %v1291 = vmax.f32 %v1145, 0.0
        %v1292 = vmax.f32 %v1150, 0.0
        %v1293 = vmax.f32 %v1155, 0.0
        %v1294 = vmax.f32 %v1160, 0.0
        %v1295 = vmax.f32 %v1165, 0.0
        %v1296 = vmax.f32 %v1170, 0.0
        %v1297 = vmax.f32 %v1175, 0.0
        %v1298 = vmax.f32 %v1180, 0.0
        %v1299 = vmax.f32 %v1185, 0.0
        %v1300 = vmax.f32 %v1190, 0.0
        %v1301 = vmax.f32 %v1195, 0.0
        %v1302 = vmax.f32 %v1200, 0.0
        %v1303 = vmax.f32 %v1205, 0.0
        %v1304 = vmax.f32 %v1210, 0.0
        %v1305 = vmax.f32 %v1215, 0.0
        %v1306 = vmax.f32 %v1220, 0.0
        %v1307 = vmax.f32 %v1225, 0.0
        %v1308 = vmax.f32 %v1230, 0.0
        %v1309 = vmax.f32 %v1235, 0.0
        %v1310 = vmax.f32 %v1240, 0.0
        %v1311 = vmax.f32 %v1245, 0.0
        %v1312 = vmax.f32 %v1250, 0.0
        %v1313 = vmax.f32 %v1255, 0.0
        %v1314 = vmax.f32 %v1260, 0.0
        %v1315 = vmax.f32 %v1265, 0.0
        %v1316 = vmax.f32 %v1270, 0.0
        %v1317 = vmax.f32 %v1275, 0.0
        %v1318 = vmax.f32 %v1280, 0.0
        %v1319 = vmax.f32 %v1285, 0.0
        %v1320 = vld [vmem:[%s7] sm:$0xff]
        %v1321 = vld [vmem:[%s7 + $0x8] sm:$0xff]
        %v1322 = vld [vmem:[%s7 + $0x10] sm:$0xff]
        %v1323 = vld [vmem:[%s7 + $0x18] sm:$0xff]
        %v1324 = vld [vmem:[%s7 + $0x20] sm:$0xff]
        %v1325 = vld [vmem:[%s7 + $0x28] sm:$0xff]
        %v1326 = vld [vmem:[%s7 + $0x30] sm:$0xff]
        %v1327 = vld [vmem:[%s7 + $0x38] sm:$0xff]
        %v1328 = vld [vmem:[%s8] sm:$0x1]
        %v1330 = vlaneseq
        %v1331 = vshrl.u32 %v1330, 7
        %v1332 = vsub.s32 0, %v1331
        %v1333 = vrot.slane %v1328, %v1332
        %1335 = vmatprep.subr.mxu0 0.0
        %1336 = vmatpush1.msra.mxu0 %v1320
        %1337 = vmatprep.subr.mxu0 0.0
        %1338 = vmatpush1.msra.mxu0 %v1321
        %1339 = vmatprep.subr.mxu0 0.0
        %1340 = vmatpush1.msra.mxu0 %v1322
        %1341 = vmatprep.subr.mxu0 0.0
        %1342 = vmatpush1.msra.mxu0 %v1323
        %1343 = vmatprep.subr.mxu0 0.0
        %1344 = vmatpush1.msra.mxu0 %v1324
        %1345 = vmatprep.subr.mxu0 0.0
        %1346 = vmatpush1.msra.mxu0 %v1325
        %1347 = vmatprep.subr.mxu0 0.0
        %1348 = vmatpush1.msra.mxu0 %v1326
        %1349 = vmatprep.subr.mxu0 0.0
        %1350 = vmatpush1.msra.mxu0 %v1327
        %1351 = vmatprep.subr.mxu0 0.0
        %1352 = vmatpush1.msra.mxu0 0.0
        %1353 = vmatprep.subr.mxu0 0.0
        %1354 = vmatpush1.msra.mxu0 0.0
        %1355 = vmatprep.subr.mxu0 0.0
        %1356 = vmatpush1.msra.mxu0 0.0
        %1357 = vmatprep.subr.mxu0 0.0
        %1358 = vmatpush1.msra.mxu0 0.0
        %1359 = vmatprep.subr.mxu0 0.0
        %1360 = vmatpush1.msra.mxu0 0.0
        %1361 = vmatprep.subr.mxu0 0.0
        %1362 = vmatpush1.msra.mxu0 0.0
        %1363 = vmatprep.subr.mxu0 0.0
        %1364 = vmatpush1.msra.mxu0 0.0
        %1365 = vmatprep.subr.mxu0 0.0
        %1366 = vmatpush1.msra.mxu0 0.0
        %1367 = vmatprep.subr.mxu0 0.0
        %1368 = vmatpush1.msra.mxu0 0.0
        %1369 = vmatprep.subr.mxu0 0.0
        %1370 = vmatpush1.msra.mxu0 0.0
        %1371 = vmatprep.subr.mxu0 0.0
        %1372 = vmatpush1.msra.mxu0 0.0
        %1373 = vmatprep.subr.mxu0 0.0
        %1374 = vmatpush1.msra.mxu0 0.0
        %1375 = vmatprep.subr.mxu0 0.0
        %1376 = vmatpush1.msra.mxu0 0.0
        %1377 = vmatprep.subr.mxu0 0.0
        %1378 = vmatpush1.msra.mxu0 0.0
        %1379 = vmatprep.subr.mxu0 0.0
        %1380 = vmatpush1.msra.mxu0 0.0
        %1381 = vmatprep.subr.mxu0 0.0
        %1382 = vmatpush1.msra.mxu0 0.0
        %1383 = vmatprep.subr.mxu0 0.0
        %1384 = vmatpush1.msra.mxu0 0.0
        %1385 = vmatprep.subr.mxu0 0.0
        %1386 = vmatpush1.msra.mxu0 0.0
        %1387 = vmatprep.subr.mxu0 0.0
        %1388 = vmatpush1.msra.mxu0 0.0
        %1389 = vmatprep.subr.mxu0 0.0
        %1390 = vmatpush1.msra.mxu0 0.0
        %1391 = vmatprep.subr.mxu0 0.0
        %1392 = vmatpush1.msra.mxu0 0.0
        %1393 = vmatprep.subr.mxu0 0.0
        %1394 = vmatpush1.msra.mxu0 0.0
        %1395 = vmatprep.subr.mxu0 0.0
        %1396 = vmatpush1.msra.mxu0 0.0
        %1397 = vmatprep.subr.mxu0 0.0
        %1398 = vmatpush1.msra.mxu0 0.0
        %1399 = vmatprep.mubr.f32.mxu0 0.0
        %1400 = vmatmul.mubr.f32.gmra.mrb[0].mxu0 %v600
        %v1401 = vpop.f32.mrb[0].mxu0
        %v1402 = vadd.f32 %v1333, %v1401
        %v1403 = vpop.f32.mrb[0].mxu0
        %1404 = vmatprep.mubr.f32.mxu0 0.0
        %1405 = vmatmul.mubr.f32.gmra.mrb[0].mxu0 %v603
        %v1406 = vpop.f32.mrb[0].mxu0
        %v1407 = vadd.f32 %v1333, %v1406
        %v1408 = vpop.f32.mrb[0].mxu0
        %1409 = vmatprep.mubr.f32.mxu0 0.0
        %1410 = vmatmul.mubr.f32.gmra.mrb[0].mxu0 %v606
        %v1411 = vpop.f32.mrb[0].mxu0
        %v1412 = vadd.f32 %v1333, %v1411
        %v1413 = vpop.f32.mrb[0].mxu0
        %1414 = vmatprep.mubr.f32.mxu0 0.0
        %1415 = vmatmul.mubr.f32.gmra.mrb[0].mxu0 %v609
        %v1416 = vpop.f32.mrb[0].mxu0
        %v1417 = vadd.f32 %v1333, %v1416
        %v1418 = vpop.f32.mrb[0].mxu0
        %1419 = vmatprep.mubr.f32.mxu0 0.0
        %1420 = vmatmul.mubr.f32.gmra.mrb[0].mxu0 %v612
        %v1421 = vpop.f32.mrb[0].mxu0
        %v1422 = vadd.f32 %v1333, %v1421
        %v1423 = vpop.f32.mrb[0].mxu0
        %1424 = vmatprep.mubr.f32.mxu0 0.0
        %1425 = vmatmul.mubr.f32.gmra.mrb[0].mxu0 %v615
        %v1426 = vpop.f32.mrb[0].mxu0
        %v1427 = vadd.f32 %v1333, %v1426
        %v1428 = vpop.f32.mrb[0].mxu0
        %1429 = vmatprep.mubr.f32.mxu0 0.0
        %1430 = vmatmul.mubr.f32.gmra.mrb[0].mxu0 %v618
        %v1431 = vpop.f32.mrb[0].mxu0
        %v1432 = vadd.f32 %v1333, %v1431
        %v1433 = vpop.f32.mrb[0].mxu0
        %1434 = vmatprep.mubr.f32.mxu0 0.0
        %1435 = vmatmul.mubr.f32.gmra.mrb[0].mxu0 %v621
        %v1436 = vpop.f32.mrb[0].mxu0
        %v1437 = vadd.f32 %v1333, %v1436
        %v1438 = vpop.f32.mrb[0].mxu0
        %1439 = vmatprep.mubr.f32.mxu0 0.0
        %1440 = vmatmul.mubr.f32.gmra.mrb[0].mxu0 %v624
        %v1441 = vpop.f32.mrb[0].mxu0
        %v1442 = vadd.f32 %v1333, %v1441
        %v1443 = vpop.f32.mrb[0].mxu0
        %1444 = vmatprep.mubr.f32.mxu0 0.0
        %1445 = vmatmul.mubr.f32.gmra.mrb[0].mxu0 %v627
        %v1446 = vpop.f32.mrb[0].mxu0
        %v1447 = vadd.f32 %v1333, %v1446
        %v1448 = vpop.f32.mrb[0].mxu0
        %1449 = vmatprep.mubr.f32.mxu0 0.0
        %1450 = vmatmul.mubr.f32.gmra.mrb[0].mxu0 %v630
        %v1451 = vpop.f32.mrb[0].mxu0
        %v1452 = vadd.f32 %v1333, %v1451
        %v1453 = vpop.f32.mrb[0].mxu0
        %1454 = vmatprep.mubr.f32.mxu0 0.0
        %1455 = vmatmul.mubr.f32.gmra.mrb[0].mxu0 %v633
        %v1456 = vpop.f32.mrb[0].mxu0
        %v1457 = vadd.f32 %v1333, %v1456
        %v1458 = vpop.f32.mrb[0].mxu0
        %1459 = vmatprep.mubr.f32.mxu0 0.0
        %1460 = vmatmul.mubr.f32.gmra.mrb[0].mxu0 %v636
        %v1461 = vpop.f32.mrb[0].mxu0
        %v1462 = vadd.f32 %v1333, %v1461
        %v1463 = vpop.f32.mrb[0].mxu0
        %1464 = vmatprep.mubr.f32.mxu0 0.0
        %1465 = vmatmul.mubr.f32.gmra.mrb[0].mxu0 %v639
        %v1466 = vpop.f32.mrb[0].mxu0
        %v1467 = vadd.f32 %v1333, %v1466
        %v1468 = vpop.f32.mrb[0].mxu0
        %1469 = vmatprep.mubr.f32.mxu0 0.0
        %1470 = vmatmul.mubr.f32.gmra.mrb[0].mxu0 %v642
        %v1471 = vpop.f32.mrb[0].mxu0
        %v1472 = vadd.f32 %v1333, %v1471
        %v1473 = vpop.f32.mrb[0].mxu0
        %1474 = vmatprep.mubr.f32.mxu0 0.0
        %1475 = vmatmul.mubr.f32.gmra.mrb[0].mxu0 %v645
        %v1476 = vpop.f32.mrb[0].mxu0
        %v1477 = vadd.f32 %v1333, %v1476
        %v1478 = vpop.f32.mrb[0].mxu0
        %1479 = vmatprep.mubr.f32.mxu0 0.0
        %1480 = vmatmul.mubr.f32.gmra.mrb[0].mxu0 %v648
        %v1481 = vpop.f32.mrb[0].mxu0
        %v1482 = vadd.f32 %v1333, %v1481
        %v1483 = vpop.f32.mrb[0].mxu0
        %1484 = vmatprep.mubr.f32.mxu0 0.0
        %1485 = vmatmul.mubr.f32.gmra.mrb[0].mxu0 %v651
        %v1486 = vpop.f32.mrb[0].mxu0
        %v1487 = vadd.f32 %v1333, %v1486
        %v1488 = vpop.f32.mrb[0].mxu0
        %1489 = vmatprep.mubr.f32.mxu0 0.0
        %1490 = vmatmul.mubr.f32.gmra.mrb[0].mxu0 %v654
        %v1491 = vpop.f32.mrb[0].mxu0
        %v1492 = vadd.f32 %v1333, %v1491
        %v1493 = vpop.f32.mrb[0].mxu0
        %1494 = vmatprep.mubr.f32.mxu0 0.0
        %1495 = vmatmul.mubr.f32.gmra.mrb[0].mxu0 %v657
        %v1496 = vpop.f32.mrb[0].mxu0
        %v1497 = vadd.f32 %v1333, %v1496
        %v1498 = vpop.f32.mrb[0].mxu0
        %1499 = vmatprep.mubr.f32.mxu0 0.0
        %1500 = vmatmul.mubr.f32.gmra.mrb[0].mxu0 %v660
        %v1501 = vpop.f32.mrb[0].mxu0
        %v1502 = vadd.f32 %v1333, %v1501
        %v1503 = vpop.f32.mrb[0].mxu0
        %1504 = vmatprep.mubr.f32.mxu0 0.0
        %1505 = vmatmul.mubr.f32.gmra.mrb[0].mxu0 %v663
        %v1506 = vpop.f32.mrb[0].mxu0
        %v1507 = vadd.f32 %v1333, %v1506
        %v1508 = vpop.f32.mrb[0].mxu0
        %1509 = vmatprep.mubr.f32.mxu0 0.0
        %1510 = vmatmul.mubr.f32.gmra.mrb[0].mxu0 %v666
        %v1511 = vpop.f32.mrb[0].mxu0
        %v1512 = vadd.f32 %v1333, %v1511
        %v1513 = vpop.f32.mrb[0].mxu0
        %1514 = vmatprep.mubr.f32.mxu0 0.0
        %1515 = vmatmul.mubr.f32.gmra.mrb[0].mxu0 %v669
        %v1516 = vpop.f32.mrb[0].mxu0
        %v1517 = vadd.f32 %v1333, %v1516
        %v1518 = vpop.f32.mrb[0].mxu0
        %1519 = vmatprep.mubr.f32.mxu0 0.0
        %1520 = vmatmul.mubr.f32.gmra.mrb[0].mxu0 %v672
        %v1521 = vpop.f32.mrb[0].mxu0
        %v1522 = vadd.f32 %v1333, %v1521
        %v1523 = vpop.f32.mrb[0].mxu0
        %1524 = vmatprep.mubr.f32.mxu0 0.0
        %1525 = vmatmul.mubr.f32.gmra.mrb[0].mxu0 %v675
        %v1526 = vpop.f32.mrb[0].mxu0
        %v1527 = vadd.f32 %v1333, %v1526
        %v1528 = vpop.f32.mrb[0].mxu0
        %1529 = vmatprep.mubr.f32.mxu0 0.0
        %1530 = vmatmul.mubr.f32.gmra.mrb[0].mxu0 %v678
        %v1531 = vpop.f32.mrb[0].mxu0
        %v1532 = vadd.f32 %v1333, %v1531
        %v1533 = vpop.f32.mrb[0].mxu0
        %1534 = vmatprep.mubr.f32.mxu0 0.0
        %1535 = vmatmul.mubr.f32.gmra.mrb[0].mxu0 %v681
        %v1536 = vpop.f32.mrb[0].mxu0
        %v1537 = vadd.f32 %v1333, %v1536
        %v1538 = vpop.f32.mrb[0].mxu0
        %1539 = vmatprep.mubr.f32.mxu0 0.0
        %1540 = vmatmul.mubr.f32.gmra.mrb[0].mxu0 %v684
        %v1541 = vpop.f32.mrb[0].mxu0
        %v1542 = vadd.f32 %v1333, %v1541
        %v1543 = vpop.f32.mrb[0].mxu0
        %1544 = vmatprep.mubr.f32.mxu0 0.0
        %1545 = vmatmul.mubr.f32.gmra.mrb[0].mxu0 %v687
        %v1546 = vpop.f32.mrb[0].mxu0
        %v1547 = vadd.f32 %v1333, %v1546
        %v1548 = vpop.f32.mrb[0].mxu0
        %1549 = vmatprep.mubr.f32.mxu0 0.0
        %1550 = vmatmul.mubr.f32.gmra.mrb[0].mxu0 %v690
        %v1551 = vpop.f32.mrb[0].mxu0
        %v1552 = vadd.f32 %v1333, %v1551
        %v1553 = vpop.f32.mrb[0].mxu0
        %1554 = vmatprep.mubr.f32.mxu0 0.0
        %1555 = vmatmul.mubr.f32.gmra.mrb[0].mxu0 %v693
        %v1556 = vpop.f32.mrb[0].mxu0
        %v1557 = vadd.f32 %v1333, %v1556
        %v1558 = vpop.f32.mrb[0].mxu0
        %1559 = vdwg.mxu0
        %v1560 = vld [vmem:[%s9] sm:$0xff]
        %v1561 = vld [vmem:[%s9 + $0x8] sm:$0xff]
        %v1562 = vld [vmem:[%s9 + $0x10] sm:$0xff]
        %v1563 = vld [vmem:[%s9 + $0x18] sm:$0xff]
        %v1564 = vld [vmem:[%s9 + $0x20] sm:$0xff]
        %v1565 = vld [vmem:[%s9 + $0x28] sm:$0xff]
        %v1566 = vld [vmem:[%s9 + $0x30] sm:$0xff]
        %v1567 = vld [vmem:[%s9 + $0x38] sm:$0xff]
        %v1568 = vld [vmem:[%s10] sm:$0x1]
        %v1570 = vlaneseq
        %v1571 = vshrl.u32 %v1570, 7
        %v1572 = vsub.s32 0, %v1571
        %v1573 = vrot.slane %v1568, %v1572
        %1575 = vmatprep.subr.mxu0 0.0
        %1576 = vmatpush1.msra.mxu0 %v1560
        %1577 = vmatprep.subr.mxu0 0.0
        %1578 = vmatpush1.msra.mxu0 %v1561
        %1579 = vmatprep.subr.mxu0 0.0
        %1580 = vmatpush1.msra.mxu0 %v1562
        %1581 = vmatprep.subr.mxu0 0.0
        %1582 = vmatpush1.msra.mxu0 %v1563
        %1583 = vmatprep.subr.mxu0 0.0
        %1584 = vmatpush1.msra.mxu0 %v1564
        %1585 = vmatprep.subr.mxu0 0.0
        %1586 = vmatpush1.msra.mxu0 %v1565
        %1587 = vmatprep.subr.mxu0 0.0
        %1588 = vmatpush1.msra.mxu0 %v1566
        %1589 = vmatprep.subr.mxu0 0.0
        %1590 = vmatpush1.msra.mxu0 %v1567
        %1591 = vmatprep.subr.mxu0 0.0
        %1592 = vmatpush1.msra.mxu0 0.0
        %1593 = vmatprep.subr.mxu0 0.0
        %1594 = vmatpush1.msra.mxu0 0.0
        %1595 = vmatprep.subr.mxu0 0.0
        %1596 = vmatpush1.msra.mxu0 0.0
        %1597 = vmatprep.subr.mxu0 0.0
        %1598 = vmatpush1.msra.mxu0 0.0
        %1599 = vmatprep.subr.mxu0 0.0
        %1600 = vmatpush1.msra.mxu0 0.0
        %1601 = vmatprep.subr.mxu0 0.0
        %1602 = vmatpush1.msra.mxu0 0.0
        %1603 = vmatprep.subr.mxu0 0.0
        %1604 = vmatpush1.msra.mxu0 0.0
        %1605 = vmatprep.subr.mxu0 0.0
        %1606 = vmatpush1.msra.mxu0 0.0
        %1607 = vmatprep.subr.mxu0 0.0
        %1608 = vmatpush1.msra.mxu0 0.0
        %1609 = vmatprep.subr.mxu0 0.0
        %1610 = vmatpush1.msra.mxu0 0.0
        %1611 = vmatprep.subr.mxu0 0.0
        %1612 = vmatpush1.msra.mxu0 0.0
        %1613 = vmatprep.subr.mxu0 0.0
        %1614 = vmatpush1.msra.mxu0 0.0
        %1615 = vmatprep.subr.mxu0 0.0
        %1616 = vmatpush1.msra.mxu0 0.0
        %1617 = vmatprep.subr.mxu0 0.0
        %1618 = vmatpush1.msra.mxu0 0.0
        %1619 = vmatprep.subr.mxu0 0.0
        %1620 = vmatpush1.msra.mxu0 0.0
        %1621 = vmatprep.subr.mxu0 0.0
        %1622 = vmatpush1.msra.mxu0 0.0
        %1623 = vmatprep.subr.mxu0 0.0
        %1624 = vmatpush1.msra.mxu0 0.0
        %1625 = vmatprep.subr.mxu0 0.0
        %1626 = vmatpush1.msra.mxu0 0.0
        %1627 = vmatprep.subr.mxu0 0.0
        %1628 = vmatpush1.msra.mxu0 0.0
        %1629 = vmatprep.subr.mxu0 0.0
        %1630 = vmatpush1.msra.mxu0 0.0
        %1631 = vmatprep.subr.mxu0 0.0
        %1632 = vmatpush1.msra.mxu0 0.0
        %1633 = vmatprep.subr.mxu0 0.0
        %1634 = vmatpush1.msra.mxu0 0.0
        %1635 = vmatprep.subr.mxu0 0.0
        %1636 = vmatpush1.msra.mxu0 0.0
        %1637 = vmatprep.subr.mxu0 0.0
        %1638 = vmatpush1.msra.mxu0 0.0
        %1639 = vmatprep.mubr.f32.mxu0 0.0
        %1640 = vmatmul.mubr.f32.gmra.mrb[0].mxu0 %v968
        %v1641 = vpop.f32.mrb[0].mxu0
        %v1642 = vadd.f32 %v1573, %v1641
        %v1643 = vpop.f32.mrb[0].mxu0
        %1644 = vmatprep.mubr.f32.mxu0 0.0
        %1645 = vmatmul.mubr.f32.gmra.mrb[0].mxu0 %v971
        %v1646 = vpop.f32.mrb[0].mxu0
        %v1647 = vadd.f32 %v1573, %v1646
        %v1648 = vpop.f32.mrb[0].mxu0
        %1649 = vmatprep.mubr.f32.mxu0 0.0
        %1650 = vmatmul.mubr.f32.gmra.mrb[0].mxu0 %v974
        %v1651 = vpop.f32.mrb[0].mxu0
        %v1652 = vadd.f32 %v1573, %v1651
        %v1653 = vpop.f32.mrb[0].mxu0
        %1654 = vmatprep.mubr.f32.mxu0 0.0
        %1655 = vmatmul.mubr.f32.gmra.mrb[0].mxu0 %v977
        %v1656 = vpop.f32.mrb[0].mxu0
        %v1657 = vadd.f32 %v1573, %v1656
        %v1658 = vpop.f32.mrb[0].mxu0
        %1659 = vmatprep.mubr.f32.mxu0 0.0
        %1660 = vmatmul.mubr.f32.gmra.mrb[0].mxu0 %v980
        %v1661 = vpop.f32.mrb[0].mxu0
        %v1662 = vadd.f32 %v1573, %v1661
        %v1663 = vpop.f32.mrb[0].mxu0
        %1664 = vmatprep.mubr.f32.mxu0 0.0
        %1665 = vmatmul.mubr.f32.gmra.mrb[0].mxu0 %v983
        %v1666 = vpop.f32.mrb[0].mxu0
        %v1667 = vadd.f32 %v1573, %v1666
        %v1668 = vpop.f32.mrb[0].mxu0
        %1669 = vmatprep.mubr.f32.mxu0 0.0
        %1670 = vmatmul.mubr.f32.gmra.mrb[0].mxu0 %v986
        %v1671 = vpop.f32.mrb[0].mxu0
        %v1672 = vadd.f32 %v1573, %v1671
        %v1673 = vpop.f32.mrb[0].mxu0
        %1674 = vmatprep.mubr.f32.mxu0 0.0
        %1675 = vmatmul.mubr.f32.gmra.mrb[0].mxu0 %v989
        %v1676 = vpop.f32.mrb[0].mxu0
        %v1677 = vadd.f32 %v1573, %v1676
        %v1678 = vpop.f32.mrb[0].mxu0
        %1679 = vmatprep.mubr.f32.mxu0 0.0
        %1680 = vmatmul.mubr.f32.gmra.mrb[0].mxu0 %v992
        %v1681 = vpop.f32.mrb[0].mxu0
        %v1682 = vadd.f32 %v1573, %v1681
        %v1683 = vpop.f32.mrb[0].mxu0
        %1684 = vmatprep.mubr.f32.mxu0 0.0
        %1685 = vmatmul.mubr.f32.gmra.mrb[0].mxu0 %v995
        %v1686 = vpop.f32.mrb[0].mxu0
        %v1687 = vadd.f32 %v1573, %v1686
        %v1688 = vpop.f32.mrb[0].mxu0
        %1689 = vmatprep.mubr.f32.mxu0 0.0
        %1690 = vmatmul.mubr.f32.gmra.mrb[0].mxu0 %v998
        %v1691 = vpop.f32.mrb[0].mxu0
        %v1692 = vadd.f32 %v1573, %v1691
        %v1693 = vpop.f32.mrb[0].mxu0
        %1694 = vmatprep.mubr.f32.mxu0 0.0
        %1695 = vmatmul.mubr.f32.gmra.mrb[0].mxu0 %v1001
        %v1696 = vpop.f32.mrb[0].mxu0
        %v1697 = vadd.f32 %v1573, %v1696
        %v1698 = vpop.f32.mrb[0].mxu0
        %1699 = vmatprep.mubr.f32.mxu0 0.0
        %1700 = vmatmul.mubr.f32.gmra.mrb[0].mxu0 %v1004
        %v1701 = vpop.f32.mrb[0].mxu0
        %v1702 = vadd.f32 %v1573, %v1701
        %v1703 = vpop.f32.mrb[0].mxu0
        %1704 = vmatprep.mubr.f32.mxu0 0.0
        %1705 = vmatmul.mubr.f32.gmra.mrb[0].mxu0 %v1007
        %v1706 = vpop.f32.mrb[0].mxu0
        %v1707 = vadd.f32 %v1573, %v1706
        %v1708 = vpop.f32.mrb[0].mxu0
        %1709 = vmatprep.mubr.f32.mxu0 0.0
        %1710 = vmatmul.mubr.f32.gmra.mrb[0].mxu0 %v1010
        %v1711 = vpop.f32.mrb[0].mxu0
        %v1712 = vadd.f32 %v1573, %v1711
        %v1713 = vpop.f32.mrb[0].mxu0
        %1714 = vmatprep.mubr.f32.mxu0 0.0
        %1715 = vmatmul.mubr.f32.gmra.mrb[0].mxu0 %v1013
        %v1716 = vpop.f32.mrb[0].mxu0
        %v1717 = vadd.f32 %v1573, %v1716
        %v1718 = vpop.f32.mrb[0].mxu0
        %1719 = vmatprep.mubr.f32.mxu0 0.0
        %1720 = vmatmul.mubr.f32.gmra.mrb[0].mxu0 %v1016
        %v1721 = vpop.f32.mrb[0].mxu0
        %v1722 = vadd.f32 %v1573, %v1721
        %v1723 = vpop.f32.mrb[0].mxu0
        %1724 = vmatprep.mubr.f32.mxu0 0.0
        %1725 = vmatmul.mubr.f32.gmra.mrb[0].mxu0 %v1019
        %v1726 = vpop.f32.mrb[0].mxu0
        %v1727 = vadd.f32 %v1573, %v1726
        %v1728 = vpop.f32.mrb[0].mxu0
        %1729 = vmatprep.mubr.f32.mxu0 0.0
        %1730 = vmatmul.mubr.f32.gmra.mrb[0].mxu0 %v1022
        %v1731 = vpop.f32.mrb[0].mxu0
        %v1732 = vadd.f32 %v1573, %v1731
        %v1733 = vpop.f32.mrb[0].mxu0
        %1734 = vmatprep.mubr.f32.mxu0 0.0
        %1735 = vmatmul.mubr.f32.gmra.mrb[0].mxu0 %v1025
        %v1736 = vpop.f32.mrb[0].mxu0
        %v1737 = vadd.f32 %v1573, %v1736
        %v1738 = vpop.f32.mrb[0].mxu0
        %1739 = vmatprep.mubr.f32.mxu0 0.0
        %1740 = vmatmul.mubr.f32.gmra.mrb[0].mxu0 %v1028
        %v1741 = vpop.f32.mrb[0].mxu0
        %v1742 = vadd.f32 %v1573, %v1741
        %v1743 = vpop.f32.mrb[0].mxu0
        %1744 = vmatprep.mubr.f32.mxu0 0.0
        %1745 = vmatmul.mubr.f32.gmra.mrb[0].mxu0 %v1031
        %v1746 = vpop.f32.mrb[0].mxu0
        %v1747 = vadd.f32 %v1573, %v1746
        %v1748 = vpop.f32.mrb[0].mxu0
        %1749 = vmatprep.mubr.f32.mxu0 0.0
        %1750 = vmatmul.mubr.f32.gmra.mrb[0].mxu0 %v1034
        %v1751 = vpop.f32.mrb[0].mxu0
        %v1752 = vadd.f32 %v1573, %v1751
        %v1753 = vpop.f32.mrb[0].mxu0
        %1754 = vmatprep.mubr.f32.mxu0 0.0
        %1755 = vmatmul.mubr.f32.gmra.mrb[0].mxu0 %v1037
        %v1756 = vpop.f32.mrb[0].mxu0
        %v1757 = vadd.f32 %v1573, %v1756
        %v1758 = vpop.f32.mrb[0].mxu0
        %1759 = vmatprep.mubr.f32.mxu0 0.0
        %1760 = vmatmul.mubr.f32.gmra.mrb[0].mxu0 %v1040
        %v1761 = vpop.f32.mrb[0].mxu0
        %v1762 = vadd.f32 %v1573, %v1761
        %v1763 = vpop.f32.mrb[0].mxu0
        %1764 = vmatprep.mubr.f32.mxu0 0.0
        %1765 = vmatmul.mubr.f32.gmra.mrb[0].mxu0 %v1043
        %v1766 = vpop.f32.mrb[0].mxu0
        %v1767 = vadd.f32 %v1573, %v1766
        %v1768 = vpop.f32.mrb[0].mxu0
        %1769 = vmatprep.mubr.f32.mxu0 0.0
        %1770 = vmatmul.mubr.f32.gmra.mrb[0].mxu0 %v1046
        %v1771 = vpop.f32.mrb[0].mxu0
        %v1772 = vadd.f32 %v1573, %v1771
        %v1773 = vpop.f32.mrb[0].mxu0
        %1774 = vmatprep.mubr.f32.mxu0 0.0
        %1775 = vmatmul.mubr.f32.gmra.mrb[0].mxu0 %v1049
        %v1776 = vpop.f32.mrb[0].mxu0
        %v1777 = vadd.f32 %v1573, %v1776
        %v1778 = vpop.f32.mrb[0].mxu0
        %1779 = vmatprep.mubr.f32.mxu0 0.0
        %1780 = vmatmul.mubr.f32.gmra.mrb[0].mxu0 %v1052
        %v1781 = vpop.f32.mrb[0].mxu0
        %v1782 = vadd.f32 %v1573, %v1781
        %v1783 = vpop.f32.mrb[0].mxu0
        %1784 = vmatprep.mubr.f32.mxu0 0.0
        %1785 = vmatmul.mubr.f32.gmra.mrb[0].mxu0 %v1055
        %v1786 = vpop.f32.mrb[0].mxu0
        %v1787 = vadd.f32 %v1573, %v1786
        %v1788 = vpop.f32.mrb[0].mxu0
        %1789 = vmatprep.mubr.f32.mxu0 0.0
        %1790 = vmatmul.mubr.f32.gmra.mrb[0].mxu0 %v1058
        %v1791 = vpop.f32.mrb[0].mxu0
        %v1792 = vadd.f32 %v1573, %v1791
        %v1793 = vpop.f32.mrb[0].mxu0
        %1794 = vmatprep.mubr.f32.mxu0 0.0
        %1795 = vmatmul.mubr.f32.gmra.mrb[0].mxu0 %v1061
        %v1796 = vpop.f32.mrb[0].mxu0
        %v1797 = vadd.f32 %v1573, %v1796
        %v1798 = vpop.f32.mrb[0].mxu0
        %1799 = vdwg.mxu0
        %1832 = vrot.lane.b32.xlu0 %v1288, 32
        %v1833 = vpop.permute.xlu0 %1832
        %1834 = vrot.lane.b32.xlu0 %v1289, 32
        %v1835 = vpop.permute.xlu0 %1834
        %1836 = vrot.lane.b32.xlu0 %v1290, 32
        %v1837 = vpop.permute.xlu0 %1836
        %1838 = vrot.lane.b32.xlu0 %v1291, 32
        %v1839 = vpop.permute.xlu0 %1838
        %1840 = vrot.lane.b32.xlu0 %v1292, 32
        %v1841 = vpop.permute.xlu0 %1840
        %1842 = vrot.lane.b32.xlu0 %v1293, 32
        %v1843 = vpop.permute.xlu0 %1842
        %1844 = vrot.lane.b32.xlu0 %v1294, 32
        %v1845 = vpop.permute.xlu0 %1844
        %1846 = vrot.lane.b32.xlu0 %v1295, 32
        %v1847 = vpop.permute.xlu0 %1846
        %1848 = vrot.lane.b32.xlu0 %v1296, 32
        %v1849 = vpop.permute.xlu0 %1848
        %1850 = vrot.lane.b32.xlu0 %v1297, 32
        %v1851 = vpop.permute.xlu0 %1850
        %1852 = vrot.lane.b32.xlu0 %v1298, 32
        %v1853 = vpop.permute.xlu0 %1852
        %1854 = vrot.lane.b32.xlu0 %v1299, 32
        %v1855 = vpop.permute.xlu0 %1854
        %1856 = vrot.lane.b32.xlu0 %v1300, 32
        %v1857 = vpop.permute.xlu0 %1856
        %1858 = vrot.lane.b32.xlu0 %v1301, 32
        %v1859 = vpop.permute.xlu0 %1858
        %1860 = vrot.lane.b32.xlu0 %v1302, 32
        %v1861 = vpop.permute.xlu0 %1860
        %1862 = vrot.lane.b32.xlu0 %v1303, 32
        %v1863 = vpop.permute.xlu0 %1862
        %1864 = vrot.lane.b32.xlu0 %v1304, 32
        %v1865 = vpop.permute.xlu0 %1864
        %1866 = vrot.lane.b32.xlu0 %v1305, 32
        %v1867 = vpop.permute.xlu0 %1866
        %1868 = vrot.lane.b32.xlu0 %v1306, 32
        %v1869 = vpop.permute.xlu0 %1868
        %1870 = vrot.lane.b32.xlu0 %v1307, 32
        %v1871 = vpop.permute.xlu0 %1870
        %1872 = vrot.lane.b32.xlu0 %v1308, 32
        %v1873 = vpop.permute.xlu0 %1872
        %1874 = vrot.lane.b32.xlu0 %v1309, 32
        %v1875 = vpop.permute.xlu0 %1874
        %1876 = vrot.lane.b32.xlu0 %v1310, 32
        %v1877 = vpop.permute.xlu0 %1876
        %1878 = vrot.lane.b32.xlu0 %v1311, 32
        %v1879 = vpop.permute.xlu0 %1878
        %1880 = vrot.lane.b32.xlu0 %v1312, 32
        %v1881 = vpop.permute.xlu0 %1880
        %1882 = vrot.lane.b32.xlu0 %v1313, 32
        %v1883 = vpop.permute.xlu0 %1882
        %1884 = vrot.lane.b32.xlu0 %v1314, 32
        %v1885 = vpop.permute.xlu0 %1884
        %1886 = vrot.lane.b32.xlu0 %v1315, 32
        %v1887 = vpop.permute.xlu0 %1886
        %1888 = vrot.lane.b32.xlu0 %v1316, 32
        %v1889 = vpop.permute.xlu0 %1888
        %1890 = vrot.lane.b32.xlu0 %v1317, 32
        %v1891 = vpop.permute.xlu0 %1890
        %1892 = vrot.lane.b32.xlu0 %v1318, 32
        %v1893 = vpop.permute.xlu0 %1892
        %1894 = vrot.lane.b32.xlu0 %v1319, 32
        %v1895 = vpop.permute.xlu0 %1894
        %vm1928 = vcmask 261120
        %v1929 = vsel %vm1928, %v920, %v1833
        %v1930 = vsel %vm1928, %v921, %v1835
        %v1931 = vsel %vm1928, %v922, %v1837
        %v1932 = vsel %vm1928, %v923, %v1839
        %v1933 = vsel %vm1928, %v924, %v1841
        %v1934 = vsel %vm1928, %v925, %v1843
        %v1935 = vsel %vm1928, %v926, %v1845
        %v1936 = vsel %vm1928, %v927, %v1847
        %v1937 = vsel %vm1928, %v928, %v1849
        %v1938 = vsel %vm1928, %v929, %v1851
        %v1939 = vsel %vm1928, %v930, %v1853
        %v1940 = vsel %vm1928, %v931, %v1855
        %v1941 = vsel %vm1928, %v932, %v1857
        %v1942 = vsel %vm1928, %v933, %v1859
        %v1943 = vsel %vm1928, %v934, %v1861
        %v1944 = vsel %vm1928, %v935, %v1863
        %v1945 = vsel %vm1928, %v936, %v1865
        %v1946 = vsel %vm1928, %v937, %v1867
        %v1947 = vsel %vm1928, %v938, %v1869
        %v1948 = vsel %vm1928, %v939, %v1871
        %v1949 = vsel %vm1928, %v940, %v1873
        %v1950 = vsel %vm1928, %v941, %v1875
        %v1951 = vsel %vm1928, %v942, %v1877
        %v1952 = vsel %vm1928, %v943, %v1879
        %v1953 = vsel %vm1928, %v944, %v1881
        %v1954 = vsel %vm1928, %v945, %v1883
        %v1955 = vsel %vm1928, %v946, %v1885
        %v1956 = vsel %vm1928, %v947, %v1887
        %v1957 = vsel %vm1928, %v948, %v1889
        %v1958 = vsel %vm1928, %v949, %v1891
        %v1959 = vsel %vm1928, %v950, %v1893
        %v1960 = vsel %vm1928, %v951, %v1895
        %1993 = vrot.lane.b32.xlu0 %v1642, 64
        %v1994 = vpop.permute.xlu0 %1993
        %1995 = vrot.lane.b32.xlu0 %v1647, 64
        %v1996 = vpop.permute.xlu0 %1995
        %1997 = vrot.lane.b32.xlu0 %v1652, 64
        %v1998 = vpop.permute.xlu0 %1997
        %1999 = vrot.lane.b32.xlu0 %v1657, 64
        %v2000 = vpop.permute.xlu0 %1999
        %2001 = vrot.lane.b32.xlu0 %v1662, 64
        %v2002 = vpop.permute.xlu0 %2001
        %2003 = vrot.lane.b32.xlu0 %v1667, 64
        %v2004 = vpop.permute.xlu0 %2003
        %2005 = vrot.lane.b32.xlu0 %v1672, 64
        %v2006 = vpop.permute.xlu0 %2005
        %2007 = vrot.lane.b32.xlu0 %v1677, 64
        %v2008 = vpop.permute.xlu0 %2007
        %2009 = vrot.lane.b32.xlu0 %v1682, 64
        %v2010 = vpop.permute.xlu0 %2009
        %2011 = vrot.lane.b32.xlu0 %v1687, 64
        %v2012 = vpop.permute.xlu0 %2011
        %2013 = vrot.lane.b32.xlu0 %v1692, 64
        %v2014 = vpop.permute.xlu0 %2013
        %2015 = vrot.lane.b32.xlu0 %v1697, 64
        %v2016 = vpop.permute.xlu0 %2015
        %2017 = vrot.lane.b32.xlu0 %v1702, 64
        %v2018 = vpop.permute.xlu0 %2017
        %2019 = vrot.lane.b32.xlu0 %v1707, 64
        %v2020 = vpop.permute.xlu0 %2019
        %2021 = vrot.lane.b32.xlu0 %v1712, 64
        %v2022 = vpop.permute.xlu0 %2021
        %2023 = vrot.lane.b32.xlu0 %v1717, 64
        %v2024 = vpop.permute.xlu0 %2023
        %2025 = vrot.lane.b32.xlu0 %v1722, 64
        %v2026 = vpop.permute.xlu0 %2025
        %2027 = vrot.lane.b32.xlu0 %v1727, 64
        %v2028 = vpop.permute.xlu0 %2027
        %2029 = vrot.lane.b32.xlu0 %v1732, 64
        %v2030 = vpop.permute.xlu0 %2029
        %2031 = vrot.lane.b32.xlu0 %v1737, 64
        %v2032 = vpop.permute.xlu0 %2031
        %2033 = vrot.lane.b32.xlu0 %v1742, 64
        %v2034 = vpop.permute.xlu0 %2033
        %2035 = vrot.lane.b32.xlu0 %v1747, 64
        %v2036 = vpop.permute.xlu0 %2035
        %2037 = vrot.lane.b32.xlu0 %v1752, 64
        %v2038 = vpop.permute.xlu0 %2037
        %2039 = vrot.lane.b32.xlu0 %v1757, 64
        %v2040 = vpop.permute.xlu0 %2039
        %2041 = vrot.lane.b32.xlu0 %v1762, 64
        %v2042 = vpop.permute.xlu0 %2041
        %2043 = vrot.lane.b32.xlu0 %v1767, 64
        %v2044 = vpop.permute.xlu0 %2043
        %2045 = vrot.lane.b32.xlu0 %v1772, 64
        %v2046 = vpop.permute.xlu0 %2045
        %2047 = vrot.lane.b32.xlu0 %v1777, 64
        %v2048 = vpop.permute.xlu0 %2047
        %2049 = vrot.lane.b32.xlu0 %v1782, 64
        %v2050 = vpop.permute.xlu0 %2049
        %2051 = vrot.lane.b32.xlu0 %v1787, 64
        %v2052 = vpop.permute.xlu0 %2051
        %2053 = vrot.lane.b32.xlu0 %v1792, 64
        %v2054 = vpop.permute.xlu0 %2053
        %2055 = vrot.lane.b32.xlu0 %v1797, 64
        %v2056 = vpop.permute.xlu0 %2055
        %v2089 = vsel %vm598, %v1402, %v1994
        %v2090 = vsel %vm598, %v1407, %v1996
        %v2091 = vsel %vm598, %v1412, %v1998
        %v2092 = vsel %vm598, %v1417, %v2000
        %v2093 = vsel %vm598, %v1422, %v2002
        %v2094 = vsel %vm598, %v1427, %v2004
        %v2095 = vsel %vm598, %v1432, %v2006
        %v2096 = vsel %vm598, %v1437, %v2008
        %v2097 = vsel %vm598, %v1442, %v2010
        %v2098 = vsel %vm598, %v1447, %v2012
        %v2099 = vsel %vm598, %v1452, %v2014
        %v2100 = vsel %vm598, %v1457, %v2016
        %v2101 = vsel %vm598, %v1462, %v2018
        %v2102 = vsel %vm598, %v1467, %v2020
        %v2103 = vsel %vm598, %v1472, %v2022
        %v2104 = vsel %vm598, %v1477, %v2024
        %v2105 = vsel %vm598, %v1482, %v2026
        %v2106 = vsel %vm598, %v1487, %v2028
        %v2107 = vsel %vm598, %v1492, %v2030
        %v2108 = vsel %vm598, %v1497, %v2032
        %v2109 = vsel %vm598, %v1502, %v2034
        %v2110 = vsel %vm598, %v1507, %v2036
        %v2111 = vsel %vm598, %v1512, %v2038
        %v2112 = vsel %vm598, %v1517, %v2040
        %v2113 = vsel %vm598, %v1522, %v2042
        %v2114 = vsel %vm598, %v1527, %v2044
        %v2115 = vsel %vm598, %v1532, %v2046
        %v2116 = vsel %vm598, %v1537, %v2048
        %v2117 = vsel %vm598, %v1542, %v2050
        %v2118 = vsel %vm598, %v1547, %v2052
        %v2119 = vsel %vm598, %v1552, %v2054
        %v2120 = vsel %vm598, %v1557, %v2056
        %2121 = vmatprep.subr.mxu0 0.0
        %2122 = vmatpush1.msra.mxu0 %v1929
        %2123 = vmatprep.subr.mxu0 0.0
        %2124 = vmatpush1.msra.mxu0 %v1930
        %2125 = vmatprep.subr.mxu0 0.0
        %2126 = vmatpush1.msra.mxu0 %v1931
        %2127 = vmatprep.subr.mxu0 0.0
        %2128 = vmatpush1.msra.mxu0 %v1932
        %2129 = vmatprep.subr.mxu0 0.0
        %2130 = vmatpush1.msra.mxu0 %v1933
        %2131 = vmatprep.subr.mxu0 0.0
        %2132 = vmatpush1.msra.mxu0 %v1934
        %2133 = vmatprep.subr.mxu0 0.0
        %2134 = vmatpush1.msra.mxu0 %v1935
        %2135 = vmatprep.subr.mxu0 0.0
        %2136 = vmatpush1.msra.mxu0 %v1936
        %2137 = vmatprep.subr.mxu0 0.0
        %2138 = vmatpush1.msra.mxu0 %v1937
        %2139 = vmatprep.subr.mxu0 0.0
        %2140 = vmatpush1.msra.mxu0 %v1938
        %2141 = vmatprep.subr.mxu0 0.0
        %2142 = vmatpush1.msra.mxu0 %v1939
        %2143 = vmatprep.subr.mxu0 0.0
        %2144 = vmatpush1.msra.mxu0 %v1940
        %2145 = vmatprep.subr.mxu0 0.0
        %2146 = vmatpush1.msra.mxu0 %v1941
        %2147 = vmatprep.subr.mxu0 0.0
        %2148 = vmatpush1.msra.mxu0 %v1942
        %2149 = vmatprep.subr.mxu0 0.0
        %2150 = vmatpush1.msra.mxu0 %v1943
        %2151 = vmatprep.subr.mxu0 0.0
        %2152 = vmatpush1.msra.mxu0 %v1944
        %2153 = vmatprep.subr.mxu0 0.0
        %2154 = vmatpush1.msra.mxu0 %v1945
        %2155 = vmatprep.subr.mxu0 0.0
        %2156 = vmatpush1.msra.mxu0 %v1946
        %2157 = vmatprep.subr.mxu0 0.0
        %2158 = vmatpush1.msra.mxu0 %v1947
        %2159 = vmatprep.subr.mxu0 0.0
        %2160 = vmatpush1.msra.mxu0 %v1948
        %2161 = vmatprep.subr.mxu0 0.0
        %2162 = vmatpush1.msra.mxu0 %v1949
        %2163 = vmatprep.subr.mxu0 0.0
        %2164 = vmatpush1.msra.mxu0 %v1950
        %2165 = vmatprep.subr.mxu0 0.0
        %2166 = vmatpush1.msra.mxu0 %v1951
        %2167 = vmatprep.subr.mxu0 0.0
        %2168 = vmatpush1.msra.mxu0 %v1952
        %2169 = vmatprep.subr.mxu0 0.0
        %2170 = vmatpush1.msra.mxu0 %v1953
        %2171 = vmatprep.subr.mxu0 0.0
        %2172 = vmatpush1.msra.mxu0 %v1954
        %2173 = vmatprep.subr.mxu0 0.0
        %2174 = vmatpush1.msra.mxu0 %v1955
        %2175 = vmatprep.subr.mxu0 0.0
        %2176 = vmatpush1.msra.mxu0 %v1956
        %2177 = vmatprep.subr.mxu0 0.0
        %2178 = vmatpush1.msra.mxu0 %v1957
        %2179 = vmatprep.subr.mxu0 0.0
        %2180 = vmatpush1.msra.mxu0 %v1958
        %2181 = vmatprep.subr.mxu0 0.0
        %2182 = vmatpush1.msra.mxu0 %v1959
        %2183 = vmatprep.subr.mxu0 0.0
        %2184 = vmatpush1.msra.mxu0 %v1960
        %2185 = vmatprep.mubr.f32.mxu0 %v552
        %2186 = vmatmul.mubr.f32.gmra.mrb[0].mxu0 %v551
        %v2187 = vpop.f32.mrb[0].mxu0
        %v2188 = vadd.f32 0.0, %v2187
        %v2189 = vpop.f32.mrb[0].mxu0
        %2190 = vmatprep.mubr.f32.mxu0 %v554
        %2191 = vmatmul.mubr.f32.gmra.mrb[0].mxu0 %v553
        %v2192 = vpop.f32.mrb[0].mxu0
        %v2193 = vadd.f32 0.0, %v2192
        %v2194 = vpop.f32.mrb[0].mxu0
        %2195 = vmatprep.mubr.f32.mxu0 %v556
        %2196 = vmatmul.mubr.f32.gmra.mrb[0].mxu0 %v555
        %v2197 = vpop.f32.mrb[0].mxu0
        %v2198 = vadd.f32 0.0, %v2197
        %v2199 = vpop.f32.mrb[0].mxu0
        %2200 = vmatprep.mubr.f32.mxu0 %v558
        %2201 = vmatmul.mubr.f32.gmra.mrb[0].mxu0 %v557
        %v2202 = vpop.f32.mrb[0].mxu0
        %v2203 = vadd.f32 0.0, %v2202
        %v2204 = vpop.f32.mrb[0].mxu0
        %2205 = vmatprep.mubr.f32.mxu0 %v560
        %2206 = vmatmul.mubr.f32.gmra.mrb[0].mxu0 %v559
        %v2207 = vpop.f32.mrb[0].mxu0
        %v2208 = vadd.f32 0.0, %v2207
        %v2209 = vpop.f32.mrb[0].mxu0
        %2210 = vmatprep.mubr.f32.mxu0 %v562
        %2211 = vmatmul.mubr.f32.gmra.mrb[0].mxu0 %v561
        %v2212 = vpop.f32.mrb[0].mxu0
        %v2213 = vadd.f32 0.0, %v2212
        %v2214 = vpop.f32.mrb[0].mxu0
        %2215 = vmatprep.mubr.f32.mxu0 %v564
        %2216 = vmatmul.mubr.f32.gmra.mrb[0].mxu0 %v563
        %v2217 = vpop.f32.mrb[0].mxu0
        %v2218 = vadd.f32 0.0, %v2217
        %v2219 = vpop.f32.mrb[0].mxu0
        %2220 = vmatprep.mubr.f32.mxu0 %v566
        %2221 = vmatmul.mubr.f32.gmra.mrb[0].mxu0 %v565
        %v2222 = vpop.f32.mrb[0].mxu0
        %v2223 = vadd.f32 0.0, %v2222
        %v2224 = vpop.f32.mrb[0].mxu0
        %2225 = vmatprep.mubr.f32.mxu0 %v568
        %2226 = vmatmul.mubr.f32.gmra.mrb[0].mxu0 %v567
        %v2227 = vpop.f32.mrb[0].mxu0
        %v2228 = vadd.f32 0.0, %v2227
        %v2229 = vpop.f32.mrb[0].mxu0
        %2230 = vmatprep.mubr.f32.mxu0 %v570
        %2231 = vmatmul.mubr.f32.gmra.mrb[0].mxu0 %v569
        %v2232 = vpop.f32.mrb[0].mxu0
        %v2233 = vadd.f32 0.0, %v2232
        %v2234 = vpop.f32.mrb[0].mxu0
        %2235 = vmatprep.mubr.f32.mxu0 %v572
        %2236 = vmatmul.mubr.f32.gmra.mrb[0].mxu0 %v571
        %v2237 = vpop.f32.mrb[0].mxu0
        %v2238 = vadd.f32 0.0, %v2237
        %v2239 = vpop.f32.mrb[0].mxu0
        %2240 = vmatprep.mubr.f32.mxu0 %v574
        %2241 = vmatmul.mubr.f32.gmra.mrb[0].mxu0 %v573
        %v2242 = vpop.f32.mrb[0].mxu0
        %v2243 = vadd.f32 0.0, %v2242
        %v2244 = vpop.f32.mrb[0].mxu0
        %2245 = vmatprep.mubr.f32.mxu0 %v576
        %2246 = vmatmul.mubr.f32.gmra.mrb[0].mxu0 %v575
        %v2247 = vpop.f32.mrb[0].mxu0
        %v2248 = vadd.f32 0.0, %v2247
        %v2249 = vpop.f32.mrb[0].mxu0
        %2250 = vmatprep.mubr.f32.mxu0 %v578
        %2251 = vmatmul.mubr.f32.gmra.mrb[0].mxu0 %v577
        %v2252 = vpop.f32.mrb[0].mxu0
        %v2253 = vadd.f32 0.0, %v2252
        %v2254 = vpop.f32.mrb[0].mxu0
        %2255 = vmatprep.mubr.f32.mxu0 %v580
        %2256 = vmatmul.mubr.f32.gmra.mrb[0].mxu0 %v579
        %v2257 = vpop.f32.mrb[0].mxu0
        %v2258 = vadd.f32 0.0, %v2257
        %v2259 = vpop.f32.mrb[0].mxu0
        %2260 = vmatprep.mubr.f32.mxu0 %v582
        %2261 = vmatmul.mubr.f32.gmra.mrb[0].mxu0 %v581
        %v2262 = vpop.f32.mrb[0].mxu0
        %v2263 = vadd.f32 0.0, %v2262
        %v2264 = vpop.f32.mrb[0].mxu0
        %2265 = vdwg.mxu0
        %v2266 = vpack.c.bf16 %v2193, %v2188
        %v2267 = vpack.c.bf16 %v2203, %v2198
        %v2268 = vpack.c.bf16 %v2213, %v2208
        %v2269 = vpack.c.bf16 %v2223, %v2218
        %v2270 = vpack.c.bf16 %v2233, %v2228
        %v2271 = vpack.c.bf16 %v2243, %v2238
        %v2272 = vpack.c.bf16 %v2253, %v2248
        %v2273 = vpack.c.bf16 %v2263, %v2258
        %v2282 = vunpack.c.l.b16 %v2266
        %v2283 = vunpack.c.h.b16 %v2266
        %v2284 = vunpack.c.l.b16 %v2267
        %v2285 = vunpack.c.h.b16 %v2267
        %v2286 = vunpack.c.l.b16 %v2268
        %v2287 = vunpack.c.h.b16 %v2268
        %v2288 = vunpack.c.l.b16 %v2269
        %v2289 = vunpack.c.h.b16 %v2269
        %v2290 = vunpack.c.l.b16 %v2270
        %v2291 = vunpack.c.h.b16 %v2270
        %v2292 = vunpack.c.l.b16 %v2271
        %v2293 = vunpack.c.h.b16 %v2271
        %v2294 = vunpack.c.l.b16 %v2272
        %v2295 = vunpack.c.h.b16 %v2272
        %v2296 = vunpack.c.l.b16 %v2273
        %v2297 = vunpack.c.h.b16 %v2273
        %v2298 = vpack.c.b16 %v2282, %v2282
        %v2299 = vpack.c.b16 %v2283, %v2283
        %v2300 = vpack.c.b16 %v2284, %v2284
        %v2301 = vpack.c.b16 %v2285, %v2285
        %v2302 = vpack.c.b16 %v2286, %v2286
        %v2303 = vpack.c.b16 %v2287, %v2287
        %v2304 = vpack.c.b16 %v2288, %v2288
        %v2305 = vpack.c.b16 %v2289, %v2289
        %v2306 = vpack.c.b16 %v2290, %v2290
        %v2307 = vpack.c.b16 %v2291, %v2291
        %v2308 = vpack.c.b16 %v2292, %v2292
        %v2309 = vpack.c.b16 %v2293, %v2293
        %v2310 = vpack.c.b16 %v2294, %v2294
        %v2311 = vpack.c.b16 %v2295, %v2295
        %v2312 = vpack.c.b16 %v2296, %v2296
        %v2313 = vpack.c.b16 %v2297, %v2297
        %vm2330 = vcmask 519168
        %2331 = vst.msk [vmem:[%s481] sm:$0xf] %vm2330, %v2298
        %2332 = vst.msk [vmem:[%s481 + $0x4] sm:$0xf] %vm2330, %v2299
        %2333 = vst.msk [vmem:[%s481 + $0x8] sm:$0xf] %vm2330, %v2300
        %2334 = vst.msk [vmem:[%s481 + $0xc] sm:$0xf] %vm2330, %v2301
        %2335 = vst.msk [vmem:[%s481 + $0x10] sm:$0xf] %vm2330, %v2302
        %2336 = vst.msk [vmem:[%s481 + $0x14] sm:$0xf] %vm2330, %v2303
        %2337 = vst.msk [vmem:[%s481 + $0x18] sm:$0xf] %vm2330, %v2304
        %2338 = vst.msk [vmem:[%s481 + $0x1c] sm:$0xf] %vm2330, %v2305
        %2339 = vst.msk [vmem:[%s481 + $0x20] sm:$0xf] %vm2330, %v2306
        %2340 = vst.msk [vmem:[%s481 + $0x24] sm:$0xf] %vm2330, %v2307
        %2341 = vst.msk [vmem:[%s481 + $0x28] sm:$0xf] %vm2330, %v2308
        %2342 = vst.msk [vmem:[%s481 + $0x2c] sm:$0xf] %vm2330, %v2309
        %2343 = vst.msk [vmem:[%s481 + $0x30] sm:$0xf] %vm2330, %v2310
        %2344 = vst.msk [vmem:[%s481 + $0x34] sm:$0xf] %vm2330, %v2311
        %2345 = vst.msk [vmem:[%s481 + $0x38] sm:$0xf] %vm2330, %v2312
        %2346 = vst.msk [vmem:[%s481 + $0x3c] sm:$0xf] %vm2330, %v2313
        %2347 = vmatprep.subr.mxu0 0.0
        %2348 = vmatpush1.msra.mxu0 %v2089
        %2349 = vmatprep.subr.mxu0 0.0
        %2350 = vmatpush1.msra.mxu0 %v2090
        %2351 = vmatprep.subr.mxu0 0.0
        %2352 = vmatpush1.msra.mxu0 %v2091
        %2353 = vmatprep.subr.mxu0 0.0
        %2354 = vmatpush1.msra.mxu0 %v2092
        %2355 = vmatprep.subr.mxu0 0.0
        %2356 = vmatpush1.msra.mxu0 %v2093
        %2357 = vmatprep.subr.mxu0 0.0
        %2358 = vmatpush1.msra.mxu0 %v2094
        %2359 = vmatprep.subr.mxu0 0.0
        %2360 = vmatpush1.msra.mxu0 %v2095
        %2361 = vmatprep.subr.mxu0 0.0
        %2362 = vmatpush1.msra.mxu0 %v2096
        %2363 = vmatprep.subr.mxu0 0.0
        %2364 = vmatpush1.msra.mxu0 %v2097
        %2365 = vmatprep.subr.mxu0 0.0
        %2366 = vmatpush1.msra.mxu0 %v2098
        %2367 = vmatprep.subr.mxu0 0.0
        %2368 = vmatpush1.msra.mxu0 %v2099
        %2369 = vmatprep.subr.mxu0 0.0
        %2370 = vmatpush1.msra.mxu0 %v2100
        %2371 = vmatprep.subr.mxu0 0.0
        %2372 = vmatpush1.msra.mxu0 %v2101
        %2373 = vmatprep.subr.mxu0 0.0
        %2374 = vmatpush1.msra.mxu0 %v2102
        %2375 = vmatprep.subr.mxu0 0.0
        %2376 = vmatpush1.msra.mxu0 %v2103
        %2377 = vmatprep.subr.mxu0 0.0
        %2378 = vmatpush1.msra.mxu0 %v2104
        %2379 = vmatprep.subr.mxu0 0.0
        %2380 = vmatpush1.msra.mxu0 %v2105
        %2381 = vmatprep.subr.mxu0 0.0
        %2382 = vmatpush1.msra.mxu0 %v2106
        %2383 = vmatprep.subr.mxu0 0.0
        %2384 = vmatpush1.msra.mxu0 %v2107
        %2385 = vmatprep.subr.mxu0 0.0
        %2386 = vmatpush1.msra.mxu0 %v2108
        %2387 = vmatprep.subr.mxu0 0.0
        %2388 = vmatpush1.msra.mxu0 %v2109
        %2389 = vmatprep.subr.mxu0 0.0
        %2390 = vmatpush1.msra.mxu0 %v2110
        %2391 = vmatprep.subr.mxu0 0.0
        %2392 = vmatpush1.msra.mxu0 %v2111
        %2393 = vmatprep.subr.mxu0 0.0
        %2394 = vmatpush1.msra.mxu0 %v2112
        %2395 = vmatprep.subr.mxu0 0.0
        %2396 = vmatpush1.msra.mxu0 %v2113
        %2397 = vmatprep.subr.mxu0 0.0
        %2398 = vmatpush1.msra.mxu0 %v2114
        %2399 = vmatprep.subr.mxu0 0.0
        %2400 = vmatpush1.msra.mxu0 %v2115
        %2401 = vmatprep.subr.mxu0 0.0
        %2402 = vmatpush1.msra.mxu0 %v2116
        %2403 = vmatprep.subr.mxu0 0.0
        %2404 = vmatpush1.msra.mxu0 %v2117
        %2405 = vmatprep.subr.mxu0 0.0
        %2406 = vmatpush1.msra.mxu0 %v2118
        %2407 = vmatprep.subr.mxu0 0.0
        %2408 = vmatpush1.msra.mxu0 %v2119
        %2409 = vmatprep.subr.mxu0 0.0
        %2410 = vmatpush1.msra.mxu0 %v2120
        %2411 = vmatprep.mubr.f32.mxu0 %v552
        %2412 = vmatmul.mubr.f32.gmra.mrb[0].mxu0 %v551
        %v2413 = vpop.f32.mrb[0].mxu0
        %v2414 = vadd.f32 0.0, %v2413
        %v2415 = vpop.f32.mrb[0].mxu0
        %2416 = vmatprep.mubr.f32.mxu0 %v554
        %2417 = vmatmul.mubr.f32.gmra.mrb[0].mxu0 %v553
        %v2418 = vpop.f32.mrb[0].mxu0
        %v2419 = vadd.f32 0.0, %v2418
        %v2420 = vpop.f32.mrb[0].mxu0
        %2421 = vmatprep.mubr.f32.mxu0 %v556
        %2422 = vmatmul.mubr.f32.gmra.mrb[0].mxu0 %v555
        %v2423 = vpop.f32.mrb[0].mxu0
        %v2424 = vadd.f32 0.0, %v2423
        %v2425 = vpop.f32.mrb[0].mxu0
        %2426 = vmatprep.mubr.f32.mxu0 %v558
        %2427 = vmatmul.mubr.f32.gmra.mrb[0].mxu0 %v557
        %v2428 = vpop.f32.mrb[0].mxu0
        %v2429 = vadd.f32 0.0, %v2428
        %v2430 = vpop.f32.mrb[0].mxu0
        %2431 = vmatprep.mubr.f32.mxu0 %v560
        %2432 = vmatmul.mubr.f32.gmra.mrb[0].mxu0 %v559
        %v2433 = vpop.f32.mrb[0].mxu0
        %v2434 = vadd.f32 0.0, %v2433
        %v2435 = vpop.f32.mrb[0].mxu0
        %2436 = vmatprep.mubr.f32.mxu0 %v562
        %2437 = vmatmul.mubr.f32.gmra.mrb[0].mxu0 %v561
        %v2438 = vpop.f32.mrb[0].mxu0
        %v2439 = vadd.f32 0.0, %v2438
        %v2440 = vpop.f32.mrb[0].mxu0
        %2441 = vmatprep.mubr.f32.mxu0 %v564
        %2442 = vmatmul.mubr.f32.gmra.mrb[0].mxu0 %v563
        %v2443 = vpop.f32.mrb[0].mxu0
        %v2444 = vadd.f32 0.0, %v2443
        %v2445 = vpop.f32.mrb[0].mxu0
        %2446 = vmatprep.mubr.f32.mxu0 %v566
        %2447 = vmatmul.mubr.f32.gmra.mrb[0].mxu0 %v565
        %v2448 = vpop.f32.mrb[0].mxu0
        %v2449 = vadd.f32 0.0, %v2448
        %v2450 = vpop.f32.mrb[0].mxu0
        %2451 = vmatprep.mubr.f32.mxu0 %v568
        %2452 = vmatmul.mubr.f32.gmra.mrb[0].mxu0 %v567
        %v2453 = vpop.f32.mrb[0].mxu0
        %v2454 = vadd.f32 0.0, %v2453
        %v2455 = vpop.f32.mrb[0].mxu0
        %2456 = vmatprep.mubr.f32.mxu0 %v570
        %2457 = vmatmul.mubr.f32.gmra.mrb[0].mxu0 %v569
        %v2458 = vpop.f32.mrb[0].mxu0
        %v2459 = vadd.f32 0.0, %v2458
        %v2460 = vpop.f32.mrb[0].mxu0
        %2461 = vmatprep.mubr.f32.mxu0 %v572
        %2462 = vmatmul.mubr.f32.gmra.mrb[0].mxu0 %v571
        %v2463 = vpop.f32.mrb[0].mxu0
        %v2464 = vadd.f32 0.0, %v2463
        %v2465 = vpop.f32.mrb[0].mxu0
        %2466 = vmatprep.mubr.f32.mxu0 %v574
        %2467 = vmatmul.mubr.f32.gmra.mrb[0].mxu0 %v573
        %v2468 = vpop.f32.mrb[0].mxu0
        %v2469 = vadd.f32 0.0, %v2468
        %v2470 = vpop.f32.mrb[0].mxu0
        %2471 = vmatprep.mubr.f32.mxu0 %v576
        %2472 = vmatmul.mubr.f32.gmra.mrb[0].mxu0 %v575
        %v2473 = vpop.f32.mrb[0].mxu0
        %v2474 = vadd.f32 0.0, %v2473
        %v2475 = vpop.f32.mrb[0].mxu0
        %2476 = vmatprep.mubr.f32.mxu0 %v578
        %2477 = vmatmul.mubr.f32.gmra.mrb[0].mxu0 %v577
        %v2478 = vpop.f32.mrb[0].mxu0
        %v2479 = vadd.f32 0.0, %v2478
        %v2480 = vpop.f32.mrb[0].mxu0
        %2481 = vmatprep.mubr.f32.mxu0 %v580
        %2482 = vmatmul.mubr.f32.gmra.mrb[0].mxu0 %v579
        %v2483 = vpop.f32.mrb[0].mxu0
        %v2484 = vadd.f32 0.0, %v2483
        %v2485 = vpop.f32.mrb[0].mxu0
        %2486 = vmatprep.mubr.f32.mxu0 %v582
        %2487 = vmatmul.mubr.f32.gmra.mrb[0].mxu0 %v581
        %v2488 = vpop.f32.mrb[0].mxu0
        %v2489 = vadd.f32 0.0, %v2488
        %v2490 = vpop.f32.mrb[0].mxu0
        %2491 = vdwg.mxu0
        %v2492 = vpack.c.bf16 %v2419, %v2414
        %v2493 = vpack.c.bf16 %v2429, %v2424
        %v2494 = vpack.c.bf16 %v2439, %v2434
        %v2495 = vpack.c.bf16 %v2449, %v2444
        %v2496 = vpack.c.bf16 %v2459, %v2454
        %v2497 = vpack.c.bf16 %v2469, %v2464
        %v2498 = vpack.c.bf16 %v2479, %v2474
        %v2499 = vpack.c.bf16 %v2489, %v2484
        %v2508 = vunpack.c.l.b16 %v2492
        %v2509 = vunpack.c.h.b16 %v2492
        %v2510 = vunpack.c.l.b16 %v2493
        %v2511 = vunpack.c.h.b16 %v2493
        %v2512 = vunpack.c.l.b16 %v2494
        %v2513 = vunpack.c.h.b16 %v2494
        %v2514 = vunpack.c.l.b16 %v2495
        %v2515 = vunpack.c.h.b16 %v2495
        %v2516 = vunpack.c.l.b16 %v2496
        %v2517 = vunpack.c.h.b16 %v2496
        %v2518 = vunpack.c.l.b16 %v2497
        %v2519 = vunpack.c.h.b16 %v2497
        %v2520 = vunpack.c.l.b16 %v2498
        %v2521 = vunpack.c.h.b16 %v2498
        %v2522 = vunpack.c.l.b16 %v2499
        %v2523 = vunpack.c.h.b16 %v2499
        %v2524 = vpack.c.b16 %v2508, %v2508
        %v2525 = vpack.c.b16 %v2509, %v2509
        %v2526 = vpack.c.b16 %v2510, %v2510
        %v2527 = vpack.c.b16 %v2511, %v2511
        %v2528 = vpack.c.b16 %v2512, %v2512
        %v2529 = vpack.c.b16 %v2513, %v2513
        %v2530 = vpack.c.b16 %v2514, %v2514
        %v2531 = vpack.c.b16 %v2515, %v2515
        %v2532 = vpack.c.b16 %v2516, %v2516
        %v2533 = vpack.c.b16 %v2517, %v2517
        %v2534 = vpack.c.b16 %v2518, %v2518
        %v2535 = vpack.c.b16 %v2519, %v2519
        %v2536 = vpack.c.b16 %v2520, %v2520
        %v2537 = vpack.c.b16 %v2521, %v2521
        %v2538 = vpack.c.b16 %v2522, %v2522
        %v2539 = vpack.c.b16 %v2523, %v2523
        %2556 = vst [vmem:[%s486] sm:$0xf] %v2524
        %2557 = vst [vmem:[%s486 + $0x4] sm:$0xf] %v2525
        %2558 = vst [vmem:[%s486 + $0x8] sm:$0xf] %v2526
        %2559 = vst [vmem:[%s486 + $0xc] sm:$0xf] %v2527
        %2560 = vst [vmem:[%s486 + $0x10] sm:$0xf] %v2528
        %2561 = vst [vmem:[%s486 + $0x14] sm:$0xf] %v2529
        %2562 = vst [vmem:[%s486 + $0x18] sm:$0xf] %v2530
        %2563 = vst [vmem:[%s486 + $0x1c] sm:$0xf] %v2531
        %2564 = vst [vmem:[%s486 + $0x20] sm:$0xf] %v2532
        %2565 = vst [vmem:[%s486 + $0x24] sm:$0xf] %v2533
        %2566 = vst [vmem:[%s486 + $0x28] sm:$0xf] %v2534
        %2567 = vst [vmem:[%s486 + $0x2c] sm:$0xf] %v2535
        %2568 = vst [vmem:[%s486 + $0x30] sm:$0xf] %v2536
        %2569 = vst [vmem:[%s486 + $0x34] sm:$0xf] %v2537
        %2570 = vst [vmem:[%s486 + $0x38] sm:$0xf] %v2538
        %2571 = vst [vmem:[%s486 + $0x3c] sm:$0xf] %v2539
        %p2572 = scmp.lt.s32.totalorder %s30, 1
        %s2573 = scalar_select %p2572, %s30, 1
        %s2574 = smul.addr %s2573, 16
        %s2575 = smul.addr %s2574, 4
        %s2576 = scalar_lea.vmem %s11, %s2575
        %p2577 = scmp.lt.s32.totalorder %s30, 1
        %s2578 = scalar_select %p2577, %s30, 1
        %s2579 = smul.addr %s2578, 16
        %s2580 = smul.addr %s2579, 4
        %s2581 = scalar_lea.vmem %s12, %s2580
        // Predicated region
        $region73: #{acm_forward.2} parent=63 // pred_check
          %p2582 = pneg %p289
        $region74: #{acm_forward.2} parent=63 // pred_check_branch
          %2584 = sbr.rel (%p2582) target = $region76
        $region75: #{acm_forward.2} parent=63 // pred_region
          _
        $region76: #{acm_forward.2} parent=63 // pred_fallthru
          _
        // Predicated region
        $region77: #{acm_forward.2} parent=63 // pred_check
          %p2585 = pneg %p315
        $region78: #{acm_forward.2} parent=63 // pred_check_branch
          %2587 = sbr.rel (%p2585) target = $region80
        $region79: #{acm_forward.2} parent=63 // pred_region
          _
        $region80: #{acm_forward.2} parent=63 // pred_fallthru
          _
      $region64: #{acm_forward.2} parent=5 // pred_fallthru
        _
      %p2588 = scmp.le.s32.totalorder 2, %s25
      // Predicated region
      $region81: #{acm_forward.2} parent=5 // pred_check
        %p2589 = pneg %p2588
      $region82: #{acm_forward.2} parent=5 // pred_check_branch
        %2591 = sbr.rel (%p2589) target = $region84
      $region83: #{acm_forward.2} parent=5 // pred_region
        %s2592 = ssub.s32 %s25, 2
        // Predicated region
        $region85: #{acm_forward.2} parent=83 // pred_check
          %p2593 = pneg %p295
        $region86: #{acm_forward.2} parent=83 // pred_check_branch
          %2595 = sbr.rel (%p2593) target = $region88
        $region87: #{acm_forward.2} parent=83 // pred_region
          %p2596 = scmp.lt.s32.totalorder %s31, 1
          %s2597 = scalar_select %p2596, %s31, 1
          %s2598 = smul.addr %s2597, 16
          %s2599 = smul.addr %s2598, 4
          %s2600 = scalar_lea.vmem %s11, %s2599
        $region88: #{acm_forward.2} parent=83 // pred_fallthru
          _
        // Predicated region
        $region89: #{acm_forward.2} parent=83 // pred_check
          %p2601 = pneg %p321
        $region90: #{acm_forward.2} parent=83 // pred_check_branch
          %2603 = sbr.rel (%p2601) target = $region92
        $region91: #{acm_forward.2} parent=83 // pred_region
          %p2604 = scmp.lt.s32.totalorder %s31, 1
          %s2605 = scalar_select %p2604, %s31, 1
          %s2606 = smul.addr %s2605, 16
          %s2607 = smul.addr %s2606, 4
          %s2608 = scalar_lea.vmem %s12, %s2607
        $region92: #{acm_forward.2} parent=83 // pred_fallthru
          _
      $region84: #{acm_forward.2} parent=5 // pred_fallthru
        _
    $region6: #{acm_forward.2} parent=1 // loop_footer
      %s29 = sadd.s32 1, %s25
    $region7: #{acm_forward.2} parent=1 // loop_footer_branch
      %24 = sbr.rel target = $region3
    $region8: #{acm_forward.2} parent=1 // loop_exit
      _
    %2609 = vsyncpa [#allocation3], 1
    %s2610 = scalar_lea.sflag [#allocation3], 1
    %2611 = vsyncpa %s2610, 1
    %2612 = vsyncpa [#allocation5], 1
    %s2613 = scalar_lea.sflag [#allocation5], 1
    %2614 = vsyncpa %s2613, 1

// kernel: acm_forward.3
$region0: #{acm_forward.3}
  #allocation0 [shape = 'u32[]', space=smem, size = 0x4, offset = 0x4, fixed_abs, tag = 'smem constant byte address 0x4 - core index']
  #allocation1 [shape = 'u32[144,128]{1,0:T(1,128)}', space=vmem, size = 0x12000, scoped, tag = 'internal scratch']
  %s0 = inlined_call_operand.vmem [shape: f32[2,256,64], index: 0, kind: input, shape index: {}]
  %s1 = inlined_call_operand.vmem [shape: f32[2,256,64], index: 1, kind: input, shape index: {}]
  %s2 = inlined_call_operand.vmem [shape: bf16[2,128,64], index: 2, kind: input, shape index: {}]
  %s3 = inlined_call_operand.vmem [shape: bf16[2,128,128], index: 3, kind: input, shape index: {}]
  %s4 = inlined_call_operand.vmem [shape: f32[64,32], index: 4, kind: input, shape index: {}]
  %s5 = inlined_call_operand.vmem [shape: f32[1,32], index: 5, kind: input, shape index: {}]
  %s6 = inlined_call_operand.vmem [shape: f32[64,32], index: 6, kind: input, shape index: {}]
  %s7 = inlined_call_operand.vmem [shape: f32[1,32], index: 7, kind: input, shape index: {}]
  %s8 = inlined_call_operand.vmem [shape: f32[64,64], index: 8, kind: input, shape index: {}]
  %s9 = inlined_call_operand.vmem [shape: f32[1,64], index: 9, kind: input, shape index: {}]
  %s10 = inlined_call_operand.vmem [shape: f32[64,64], index: 10, kind: input, shape index: {}]
  %s11 = inlined_call_operand.vmem [shape: f32[1,64], index: 11, kind: input, shape index: {}]
  %s12 = inlined_call_operand.vmem [shape: f32[2,256,128], index: 12, kind: output, shape index: {}]
  %s13 = sld [smem:[#allocation0]]
  $region81: #{acm_forward.3} parent=0
    _
  %s15 = ssub.s32 1, %s13
  %s16 = scalar_select 0, %s15, %s13
  loop: start=0, step=1, limit=6
  $region2: #{acm_forward.3} parent=0 // loop_pre_header
    _
  $region3: #{acm_forward.3} parent=0 // loop_header
    %s18 = sphi 0, %s22
    %p19 = scmp.ge.s32.totalorder %s18, 6
    %s25 = sphi 0, %s37
    %s26 = sphi 0, %s33
    %s27 = sphi 0, %s25
    %s28 = sphi 0, %s26
    %s29 = sphi 0, %s27
    %s30 = sphi 0, %s28
    %s42 = sphi 0, %s44
    %s45 = sphi 0, %s42
    %s46 = sphi 0, %s45
    %s62 = sphi 0, %s46
    %s70 = sphi 0, %s72
    %s73 = sphi 0, %s70
    %s74 = sphi 0, %s73
    %s90 = sphi 0, %s74
    %s96 = sphi 0, %s98
    %s99 = sphi 0, %s96
    %s100 = sphi 0, %s99
    %s116 = sphi 0, %s100
    %s122 = sphi 0, %s124
    %s125 = sphi 0, %s122
    %s126 = sphi 0, %s125
    %s142 = sphi 0, %s126
    %s146 = sphi 0, %s146
    %s148 = sphi 0, %s146
    %s149 = sphi 0, %s148
    %s163 = sphi 0, %s149
    %s167 = sphi 0, %s167
    %s169 = sphi 0, %s167
    %s170 = sphi 0, %s169
    %s184 = sphi 0, %s170
    %s188 = sphi 0, %s188
    %s190 = sphi 0, %s188
    %s191 = sphi 0, %s190
    %s205 = sphi 0, %s191
    %s209 = sphi 0, %s209
    %s211 = sphi 0, %s209
    %s212 = sphi 0, %s211
    %s226 = sphi 0, %s212
    %s230 = sphi 0, %s230
    %s232 = sphi 0, %s230
    %s233 = sphi 0, %s232
    %s247 = sphi 0, %s233
    %s251 = sphi 0, %s251
    %s253 = sphi 0, %s251
    %s254 = sphi 0, %s253
    %s268 = sphi 0, %s254
    %s272 = sphi 0, %s272
    %s274 = sphi 0, %s272
    %s275 = sphi 0, %s274
    %s289 = sphi 0, %s275
    %s293 = sphi 0, %s293
    %s295 = sphi 0, %s293
    %s296 = sphi 0, %s295
    %s310 = sphi 0, %s296
    %s318 = sphi 0, %s320
    %s321 = sphi 0, %s318
    %s322 = sphi 0, %s321
    %s338 = sphi 0, %s322
  $region4: #{acm_forward.3} parent=0 // loop_header_branch
    %21 = sbr.rel (%p19) target = $region8
  $region5: #{acm_forward.3} parent=0 // loop_body
    %s23 = ssub.s32 %s18, 1
    %s24 = ssub.s32 %s18, 2
    %s31 = sadd.s32 1, %s26
    %p32 = scmp.ge.s32.totalorder %s31, 2
    %s33 = scalar_select %p32, 0, %s31
    %s34 = sadd.s32 1, %s25
    %s35 = scalar_select %p32, %s34, %s25
    %p36 = scmp.ge.s32.totalorder %s35, 2
    %s37 = scalar_select %p36, 0, %s35
    %s38 = ssub.s32 %s25, %s37
    %s39 = ssub.s32 %s26, %s33
    %s40 = sor.u32 %s38, %s39
    %p41 = scmp.eq.s32.totalorder %s40, 0
    %s43 = sadd.s32 %s42, 1
    %s44 = scalar_select %p41, %s42, %s43
    %p47 = pneg %p41
    %p48 = scmp.eq.s32.totalorder %s18, 3
    %p49 = por %p47, %p48
    %p50 = scmp.ne.s32.totalorder %s42, %s45
    %p51 = scmp.eq.s32.totalorder %s18, 0
    %p52 = por %p50, %p51
    %p53 = scmp.ne.s32.totalorder %s42, %s45
    %p54 = scmp.eq.s32.totalorder %s23, 3
    %p55 = por %p53, %p54
    %p56 = scmp.ne.s32.totalorder %s45, %s46
    %p57 = scmp.eq.s32.totalorder %s23, 0
    %p58 = por %p56, %p57
    %p59 = scmp.ne.s32.totalorder %s45, %s46
    %p60 = scmp.eq.s32.totalorder %s24, 3
    %p61 = por %p59, %p60
    %p63 = scmp.ne.s32.totalorder %s46, %s62
    %p64 = scmp.eq.s32.totalorder %s24, 0
    %p65 = por %p63, %p64
    %s66 = ssub.s32 %s25, %s37
    %s67 = ssub.s32 %s26, %s33
    %s68 = sor.u32 %s66, %s67
    %p69 = scmp.eq.s32.totalorder %s68, 0
    %s71 = sadd.s32 %s70, 1
    %s72 = scalar_select %p69, %s70, %s71
    %p75 = pneg %p69
    %p76 = scmp.eq.s32.totalorder %s18, 3
    %p77 = por %p75, %p76
    %p78 = scmp.ne.s32.totalorder %s70, %s73
    %p79 = scmp.eq.s32.totalorder %s18, 0
    %p80 = por %p78, %p79
    %p81 = scmp.ne.s32.totalorder %s70, %s73
    %p82 = scmp.eq.s32.totalorder %s23, 3
    %p83 = por %p81, %p82
    %p84 = scmp.ne.s32.totalorder %s73, %s74
    %p85 = scmp.eq.s32.totalorder %s23, 0
    %p86 = por %p84, %p85
    %p87 = scmp.ne.s32.totalorder %s73, %s74
    %p88 = scmp.eq.s32.totalorder %s24, 3
    %p89 = por %p87, %p88
    %p91 = scmp.ne.s32.totalorder %s74, %s90
    %p92 = scmp.eq.s32.totalorder %s24, 0
    %p93 = por %p91, %p92
    %s94 = ssub.s32 %s25, %s37
    %p95 = scmp.eq.s32.totalorder %s94, 0
    %s97 = sadd.s32 %s96, 1
    %s98 = scalar_select %p95, %s96, %s97
    %p101 = pneg %p95
    %p102 = scmp.eq.s32.totalorder %s18, 3
    %p103 = por %p101, %p102
    %p104 = scmp.ne.s32.totalorder %s96, %s99
    %p105 = scmp.eq.s32.totalorder %s18, 0
    %p106 = por %p104, %p105
    %p107 = scmp.ne.s32.totalorder %s96, %s99
    %p108 = scmp.eq.s32.totalorder %s23, 3
    %p109 = por %p107, %p108
    %p110 = scmp.ne.s32.totalorder %s99, %s100
    %p111 = scmp.eq.s32.totalorder %s23, 0
    %p112 = por %p110, %p111
    %p113 = scmp.ne.s32.totalorder %s99, %s100
    %p114 = scmp.eq.s32.totalorder %s24, 3
    %p115 = por %p113, %p114
    %p117 = scmp.ne.s32.totalorder %s100, %s116
    %p118 = scmp.eq.s32.totalorder %s24, 0
    %p119 = por %p117, %p118
    %s120 = ssub.s32 %s25, %s37
    %p121 = scmp.eq.s32.totalorder %s120, 0
    %s123 = sadd.s32 %s122, 1
    %s124 = scalar_select %p121, %s122, %s123
    %p127 = pneg %p121
    %p128 = scmp.eq.s32.totalorder %s18, 3
    %p129 = por %p127, %p128
    %p130 = scmp.ne.s32.totalorder %s122, %s125
    %p131 = scmp.eq.s32.totalorder %s18, 0
    %p132 = por %p130, %p131
    %p133 = scmp.ne.s32.totalorder %s122, %s125
    %p134 = scmp.eq.s32.totalorder %s23, 3
    %p135 = por %p133, %p134
    %p136 = scmp.ne.s32.totalorder %s125, %s126
    %p137 = scmp.eq.s32.totalorder %s23, 0
    %p138 = por %p136, %p137
    %p139 = scmp.ne.s32.totalorder %s125, %s126
    %p140 = scmp.eq.s32.totalorder %s24, 3
    %p141 = por %p139, %p140
    %p143 = scmp.ne.s32.totalorder %s126, %s142
    %p144 = scmp.eq.s32.totalorder %s24, 0
    %p145 = por %p143, %p144
    %s147 = sadd.s32 %s146, 1
    %p150 = scmp.eq.s32.totalorder %s18, 3
    %p151 = scmp.ne.s32.totalorder %s146, %s148
    %p152 = scmp.eq.s32.totalorder %s18, 0
    %p153 = por %p151, %p152
    %p154 = scmp.ne.s32.totalorder %s146, %s148
    %p155 = scmp.eq.s32.totalorder %s23, 3
    %p156 = por %p154, %p155
    %p157 = scmp.ne.s32.totalorder %s148, %s149
    %p158 = scmp.eq.s32.totalorder %s23, 0
    %p159 = por %p157, %p158
    %p160 = scmp.ne.s32.totalorder %s148, %s149
    %p161 = scmp.eq.s32.totalorder %s24, 3
    %p162 = por %p160, %p161
    %p164 = scmp.ne.s32.totalorder %s149, %s163
    %p165 = scmp.eq.s32.totalorder %s24, 0
    %p166 = por %p164, %p165
    %s168 = sadd.s32 %s167, 1
    %p171 = scmp.eq.s32.totalorder %s18, 3
    %p172 = scmp.ne.s32.totalorder %s167, %s169
    %p173 = scmp.eq.s32.totalorder %s18, 0
    %p174 = por %p172, %p173
    %p175 = scmp.ne.s32.totalorder %s167, %s169
    %p176 = scmp.eq.s32.totalorder %s23, 3
    %p177 = por %p175, %p176
    %p178 = scmp.ne.s32.totalorder %s169, %s170
    %p179 = scmp.eq.s32.totalorder %s23, 0
    %p180 = por %p178, %p179
    %p181 = scmp.ne.s32.totalorder %s169, %s170
    %p182 = scmp.eq.s32.totalorder %s24, 3
    %p183 = por %p181, %p182
    %p185 = scmp.ne.s32.totalorder %s170, %s184
    %p186 = scmp.eq.s32.totalorder %s24, 0
    %p187 = por %p185, %p186
    %s189 = sadd.s32 %s188, 1
    %p192 = scmp.eq.s32.totalorder %s18, 3
    %p193 = scmp.ne.s32.totalorder %s188, %s190
    %p194 = scmp.eq.s32.totalorder %s18, 0
    %p195 = por %p193, %p194
    %p196 = scmp.ne.s32.totalorder %s188, %s190
    %p197 = scmp.eq.s32.totalorder %s23, 3
    %p198 = por %p196, %p197
    %p199 = scmp.ne.s32.totalorder %s190, %s191
    %p200 = scmp.eq.s32.totalorder %s23, 0
    %p201 = por %p199, %p200
    %p202 = scmp.ne.s32.totalorder %s190, %s191
    %p203 = scmp.eq.s32.totalorder %s24, 3
    %p204 = por %p202, %p203
    %p206 = scmp.ne.s32.totalorder %s191, %s205
    %p207 = scmp.eq.s32.totalorder %s24, 0
    %p208 = por %p206, %p207
    %s210 = sadd.s32 %s209, 1
    %p213 = scmp.eq.s32.totalorder %s18, 3
    %p214 = scmp.ne.s32.totalorder %s209, %s211
    %p215 = scmp.eq.s32.totalorder %s18, 0
    %p216 = por %p214, %p215
    %p217 = scmp.ne.s32.totalorder %s209, %s211
    %p218 = scmp.eq.s32.totalorder %s23, 3
    %p219 = por %p217, %p218
    %p220 = scmp.ne.s32.totalorder %s211, %s212
    %p221 = scmp.eq.s32.totalorder %s23, 0
    %p222 = por %p220, %p221
    %p223 = scmp.ne.s32.totalorder %s211, %s212
    %p224 = scmp.eq.s32.totalorder %s24, 3
    %p225 = por %p223, %p224
    %p227 = scmp.ne.s32.totalorder %s212, %s226
    %p228 = scmp.eq.s32.totalorder %s24, 0
    %p229 = por %p227, %p228
    %s231 = sadd.s32 %s230, 1
    %p234 = scmp.eq.s32.totalorder %s18, 3
    %p235 = scmp.ne.s32.totalorder %s230, %s232
    %p236 = scmp.eq.s32.totalorder %s18, 0
    %p237 = por %p235, %p236
    %p238 = scmp.ne.s32.totalorder %s230, %s232
    %p239 = scmp.eq.s32.totalorder %s23, 3
    %p240 = por %p238, %p239
    %p241 = scmp.ne.s32.totalorder %s232, %s233
    %p242 = scmp.eq.s32.totalorder %s23, 0
    %p243 = por %p241, %p242
    %p244 = scmp.ne.s32.totalorder %s232, %s233
    %p245 = scmp.eq.s32.totalorder %s24, 3
    %p246 = por %p244, %p245
    %p248 = scmp.ne.s32.totalorder %s233, %s247
    %p249 = scmp.eq.s32.totalorder %s24, 0
    %p250 = por %p248, %p249
    %s252 = sadd.s32 %s251, 1
    %p255 = scmp.eq.s32.totalorder %s18, 3
    %p256 = scmp.ne.s32.totalorder %s251, %s253
    %p257 = scmp.eq.s32.totalorder %s18, 0
    %p258 = por %p256, %p257
    %p259 = scmp.ne.s32.totalorder %s251, %s253
    %p260 = scmp.eq.s32.totalorder %s23, 3
    %p261 = por %p259, %p260
    %p262 = scmp.ne.s32.totalorder %s253, %s254
    %p263 = scmp.eq.s32.totalorder %s23, 0
    %p264 = por %p262, %p263
    %p265 = scmp.ne.s32.totalorder %s253, %s254
    %p266 = scmp.eq.s32.totalorder %s24, 3
    %p267 = por %p265, %p266
    %p269 = scmp.ne.s32.totalorder %s254, %s268
    %p270 = scmp.eq.s32.totalorder %s24, 0
    %p271 = por %p269, %p270
    %s273 = sadd.s32 %s272, 1
    %p276 = scmp.eq.s32.totalorder %s18, 3
    %p277 = scmp.ne.s32.totalorder %s272, %s274
    %p278 = scmp.eq.s32.totalorder %s18, 0
    %p279 = por %p277, %p278
    %p280 = scmp.ne.s32.totalorder %s272, %s274
    %p281 = scmp.eq.s32.totalorder %s23, 3
    %p282 = por %p280, %p281
    %p283 = scmp.ne.s32.totalorder %s274, %s275
    %p284 = scmp.eq.s32.totalorder %s23, 0
    %p285 = por %p283, %p284
    %p286 = scmp.ne.s32.totalorder %s274, %s275
    %p287 = scmp.eq.s32.totalorder %s24, 3
    %p288 = por %p286, %p287
    %p290 = scmp.ne.s32.totalorder %s275, %s289
    %p291 = scmp.eq.s32.totalorder %s24, 0
    %p292 = por %p290, %p291
    %s294 = sadd.s32 %s293, 1
    %p297 = scmp.eq.s32.totalorder %s18, 3
    %p298 = scmp.ne.s32.totalorder %s293, %s295
    %p299 = scmp.eq.s32.totalorder %s18, 0
    %p300 = por %p298, %p299
    %p301 = scmp.ne.s32.totalorder %s293, %s295
    %p302 = scmp.eq.s32.totalorder %s23, 3
    %p303 = por %p301, %p302
    %p304 = scmp.ne.s32.totalorder %s295, %s296
    %p305 = scmp.eq.s32.totalorder %s23, 0
    %p306 = por %p304, %p305
    %p307 = scmp.ne.s32.totalorder %s295, %s296
    %p308 = scmp.eq.s32.totalorder %s24, 3
    %p309 = por %p307, %p308
    %p311 = scmp.ne.s32.totalorder %s296, %s310
    %p312 = scmp.eq.s32.totalorder %s24, 0
    %p313 = por %p311, %p312
    %s314 = ssub.s32 %s25, %s37
    %s315 = ssub.s32 %s26, %s33
    %s316 = sor.u32 %s314, %s315
    %p317 = scmp.eq.s32.totalorder %s316, 0
    %s319 = sadd.s32 %s318, 1
    %s320 = scalar_select %p317, %s318, %s319
    %p323 = pneg %p317
    %p324 = scmp.eq.s32.totalorder %s18, 3
    %p325 = por %p323, %p324
    %p326 = scmp.ne.s32.totalorder %s318, %s321
    %p327 = scmp.eq.s32.totalorder %s18, 0
    %p328 = por %p326, %p327
    %p329 = scmp.ne.s32.totalorder %s318, %s321
    %p330 = scmp.eq.s32.totalorder %s23, 3
    %p331 = por %p329, %p330
    %p332 = scmp.ne.s32.totalorder %s321, %s322
    %p333 = scmp.eq.s32.totalorder %s23, 0
    %p334 = por %p332, %p333
    %p335 = scmp.ne.s32.totalorder %s321, %s322
    %p336 = scmp.eq.s32.totalorder %s24, 3
    %p337 = por %p335, %p336
    %p339 = scmp.ne.s32.totalorder %s322, %s338
    %p340 = scmp.eq.s32.totalorder %s24, 0
    %p341 = por %p339, %p340
    %p342 = scmp.le.s32.totalorder 1, %s18
    %p343 = scmp.lt.s32.totalorder %s18, 5
    %p344 = pnand %p342, %p343
    %p345 = pneg %p344
    // Predicated region
    $region9: #{acm_forward.3} parent=5 // pred_check
      _
    $region10: #{acm_forward.3} parent=5 // pred_check_branch
      %347 = sbr.rel (%p344) target = $region12
    $region11: #{acm_forward.3} parent=5 // pred_region
      %s348 = ssub.s32 %s18, 1
      // Predicated region
      $region13: #{acm_forward.3} parent=11 // pred_check
        %p349 = pneg %p159
      $region14: #{acm_forward.3} parent=11 // pred_check_branch
        %351 = sbr.rel (%p349) target = $region16
      $region15: #{acm_forward.3} parent=11 // pred_region
        _
      $region16: #{acm_forward.3} parent=11 // pred_fallthru
        _
      // Predicated region
      $region17: #{acm_forward.3} parent=11 // pred_check
        %p352 = pneg %p180
      $region18: #{acm_forward.3} parent=11 // pred_check_branch
        %354 = sbr.rel (%p352) target = $region20
      $region19: #{acm_forward.3} parent=11 // pred_region
        _
      $region20: #{acm_forward.3} parent=11 // pred_fallthru
        _
      // Predicated region
      $region21: #{acm_forward.3} parent=11 // pred_check
        %p355 = pneg %p201
      $region22: #{acm_forward.3} parent=11 // pred_check_branch
        %357 = sbr.rel (%p355) target = $region24
      $region23: #{acm_forward.3} parent=11 // pred_region
        _
      $region24: #{acm_forward.3} parent=11 // pred_fallthru
        _
      // Predicated region
      $region25: #{acm_forward.3} parent=11 // pred_check
        %p358 = pneg %p222
      $region26: #{acm_forward.3} parent=11 // pred_check_branch
        %360 = sbr.rel (%p358) target = $region28
      $region27: #{acm_forward.3} parent=11 // pred_region
        _
      $region28: #{acm_forward.3} parent=11 // pred_fallthru
        _
      // Predicated region
      $region29: #{acm_forward.3} parent=11 // pred_check
        %p361 = pneg %p243
      $region30: #{acm_forward.3} parent=11 // pred_check_branch
        %363 = sbr.rel (%p361) target = $region32
      $region31: #{acm_forward.3} parent=11 // pred_region
        _
      $region32: #{acm_forward.3} parent=11 // pred_fallthru
        _
      // Predicated region
      $region33: #{acm_forward.3} parent=11 // pred_check
        %p364 = pneg %p264
      $region34: #{acm_forward.3} parent=11 // pred_check_branch
        %366 = sbr.rel (%p364) target = $region36
      $region35: #{acm_forward.3} parent=11 // pred_region
        _
      $region36: #{acm_forward.3} parent=11 // pred_fallthru
        _
      // Predicated region
      $region37: #{acm_forward.3} parent=11 // pred_check
        %p367 = pneg %p285
      $region38: #{acm_forward.3} parent=11 // pred_check_branch
        %369 = sbr.rel (%p367) target = $region40
      $region39: #{acm_forward.3} parent=11 // pred_region
        _
      $region40: #{acm_forward.3} parent=11 // pred_fallthru
        _
      // Predicated region
      $region41: #{acm_forward.3} parent=11 // pred_check
        %p370 = pneg %p306
      $region42: #{acm_forward.3} parent=11 // pred_check_branch
        %372 = sbr.rel (%p370) target = $region44
      $region43: #{acm_forward.3} parent=11 // pred_region
        _
      $region44: #{acm_forward.3} parent=11 // pred_fallthru
        _
    $region12: #{acm_forward.3} parent=5 // pred_fallthru
      _
    %p373 = scmp.lt.s32.totalorder %s18, 4
    // Predicated region
    $region45: #{acm_forward.3} parent=5 // pred_check
      %p374 = pneg %p373
    $region46: #{acm_forward.3} parent=5 // pred_check_branch
      %376 = sbr.rel (%p374) target = $region48
    $region47: #{acm_forward.3} parent=5 // pred_region
      // Predicated region
      $region49: #{acm_forward.3} parent=47 // pred_check
        %p377 = pneg %p52
      $region50: #{acm_forward.3} parent=47 // pred_check_branch
        %379 = sbr.rel (%p377) target = $region52
      $region51: #{acm_forward.3} parent=47 // pred_region
        %s380 = smul.u32 16, %s26
        %p381 = scmp.lt.s32.totalorder %s25, 1
        %s382 = scalar_select %p381, %s25, 1
        %p383 = scmp.lt.s32.totalorder %s380, 31
        %s384 = scalar_select %p383, %s380, 31
        %s385 = smul.addr %s382, 32
        %s386 = sadd.s32 %s384, %s385
        %s387 = smul.addr %s386, 8
        %s388 = scalar_lea.vmem %s0, %s387
        %s389 = smul.u32 16, %s26
      $region52: #{acm_forward.3} parent=47 // pred_fallthru
        _
      // Predicated region
      $region53: #{acm_forward.3} parent=47 // pred_check
        %p390 = pneg %p80
      $region54: #{acm_forward.3} parent=47 // pred_check_branch
        %392 = sbr.rel (%p390) target = $region56
      $region55: #{acm_forward.3} parent=47 // pred_region
        %s393 = smul.u32 16, %s26
        %p394 = scmp.lt.s32.totalorder %s25, 1
        %s395 = scalar_select %p394, %s25, 1
        %p396 = scmp.lt.s32.totalorder %s393, 31
        %s397 = scalar_select %p396, %s393, 31
        %s398 = smul.addr %s395, 32
        %s399 = sadd.s32 %s397, %s398
        %s400 = smul.addr %s399, 8
        %s401 = scalar_lea.vmem %s1, %s400
        %s402 = smul.u32 16, %s26
      $region56: #{acm_forward.3} parent=47 // pred_fallthru
        _
      // Predicated region
      $region57: #{acm_forward.3} parent=47 // pred_check
        %p403 = pneg %p106
      $region58: #{acm_forward.3} parent=47 // pred_check_branch
        %405 = sbr.rel (%p403) target = $region60
      $region59: #{acm_forward.3} parent=47 // pred_region
        %p406 = scmp.lt.s32.totalorder %s25, 1
        %s407 = scalar_select %p406, %s25, 1
        %s408 = smul.addr %s407, 16
        %s409 = smul.addr %s408, 4
        %s410 = scalar_lea.vmem %s2, %s409
      $region60: #{acm_forward.3} parent=47 // pred_fallthru
        _
      // Predicated region
      $region61: #{acm_forward.3} parent=47 // pred_check
        %p411 = pneg %p132
      $region62: #{acm_forward.3} parent=47 // pred_check_branch
        %413 = sbr.rel (%p411) target = $region64
      $region63: #{acm_forward.3} parent=47 // pred_region
        %p414 = scmp.lt.s32.totalorder %s25, 1
        %s415 = scalar_select %p414, %s25, 1
        %s416 = smul.addr %s415, 16
        %s417 = smul.addr %s416, 4
        %s418 = scalar_lea.vmem %s3, %s417
      $region64: #{acm_forward.3} parent=47 // pred_fallthru
        _
    $region48: #{acm_forward.3} parent=5 // pred_fallthru
      _
    %p419 = scmp.le.s32.totalorder 1, %s18
    %p420 = scmp.lt.s32.totalorder %s18, 5
    %p421 = pnand %p419, %p420
    %p422 = pneg %p421
    // Predicated region
    $region65: #{acm_forward.3} parent=5 // pred_check
      _
    $region66: #{acm_forward.3} parent=5 // pred_check_branch
      %424 = sbr.rel (%p421) target = $region68
    $region67: #{acm_forward.3} parent=5 // pred_region
      %s425 = ssub.s32 %s18, 1
      %s426 = smul.u32 16, %s28
      %p427 = scmp.lt.s32.totalorder %s27, 1
      %s428 = scalar_select %p427, %s27, 1
      %p429 = scmp.lt.s32.totalorder %s426, 31
      %s430 = scalar_select %p429, %s426, 31
      %s431 = smul.addr %s428, 32
      %s432 = sadd.s32 %s430, %s431
      %s433 = smul.addr %s432, 8
      %s434 = scalar_lea.vmem %s0, %s433
      %p435 = pneg %p58
      %p436 = pneg %p55
      %s437 = smul.u32 16, %s28
      %p438 = scmp.lt.s32.totalorder %s27, 1
      %s439 = scalar_select %p438, %s27, 1
      %p440 = scmp.lt.s32.totalorder %s437, 31
      %s441 = scalar_select %p440, %s437, 31
      %s442 = smul.addr %s439, 32
      %s443 = sadd.s32 %s441, %s442
      %s444 = smul.addr %s443, 8
      %s445 = scalar_lea.vmem %s1, %s444
      %p446 = pneg %p86
      %p447 = pneg %p83
      %p448 = scmp.lt.s32.totalorder %s27, 1
      %s449 = scalar_select %p448, %s27, 1
      %s450 = smul.addr %s449, 16
      %s451 = smul.addr %s450, 4
      %s452 = scalar_lea.vmem %s2, %s451
      %p453 = pneg %p112
      %p454 = pneg %p109
      %p455 = scmp.lt.s32.totalorder %s27, 1
      %s456 = scalar_select %p455, %s27, 1
      %s457 = smul.addr %s456, 16
      %s458 = smul.addr %s457, 4
      %s459 = scalar_lea.vmem %s3, %s458
      %p460 = pneg %p138
      %p461 = pneg %p135
      %p462 = pneg %p159
      %p463 = pneg %p156
      %p464 = pneg %p180
      %p465 = pneg %p177
      %p466 = pneg %p201
      %p467 = pneg %p198
      %p468 = pneg %p222
      %p469 = pneg %p219
      %p470 = pneg %p243
      %p471 = pneg %p240
      %p472 = pneg %p264
      %p473 = pneg %p261
      %p474 = pneg %p285
      %p475 = pneg %p282
      %p476 = pneg %p306
      %p477 = pneg %p303
      %p478 = pneg %p334
      %p479 = pneg %p331
      %s480 = smul.u32 16, %s28
      %p481 = scmp.lt.s32.totalorder %s27, 1
      %s482 = scalar_select %p481, %s27, 1
      %p483 = scmp.lt.s32.totalorder %s480, 31
      %s484 = scalar_select %p483, %s480, 31
      %s485 = smul.addr %s482, 32
      %s486 = sadd.s32 %s484, %s485
      %s487 = smul.addr %s486, 8
      %s488 = scalar_lea.vmem %s12, %s487
      %s489 = smul.u32 16, %s28
      %p490 = scmp.lt.s32.totalorder %s27, 1
      %s491 = scalar_select %p490, %s27, 1
      %p492 = scmp.lt.s32.totalorder %s489, 31
      %s493 = scalar_select %p492, %s489, 31
      %s494 = smul.addr %s491, 32
      %s495 = sadd.s32 %s493, %s494
      %s496 = smul.addr %s495, 8
      %s497 = scalar_lea.vmem %s0, %s496
      %s498 = smul.u32 16, %s28
      %s499 = smul.u32 16, %s28
      %p500 = scmp.lt.s32.totalorder %s27, 1
      %s501 = scalar_select %p500, %s27, 1
      %p502 = scmp.lt.s32.totalorder %s499, 31
      %s503 = scalar_select %p502, %s499, 31
      %s504 = smul.addr %s501, 32
      %s505 = sadd.s32 %s503, %s504
      %s506 = smul.addr %s505, 8
      %s507 = scalar_lea.vmem %s1, %s506
      %s508 = smul.u32 16, %s28
      %p509 = scmp.lt.s32.totalorder %s27, 1
      %s510 = scalar_select %p509, %s27, 1
      %s511 = smul.addr %s510, 16
      %s512 = smul.addr %s511, 4
      %s513 = scalar_lea.vmem %s2, %s512
      %p514 = scmp.lt.s32.totalorder %s27, 1
      %s515 = scalar_select %p514, %s27, 1
      %s516 = smul.addr %s515, 16
      %s517 = smul.addr %s516, 4
      %s518 = scalar_lea.vmem %s3, %s517
      %s519 = smul.u32 16, %s28
      %p520 = scmp.lt.s32.totalorder %s27, 1
      %s521 = scalar_select %p520, %s27, 1
      %p522 = scmp.lt.s32.totalorder %s519, 31
      %s523 = scalar_select %p522, %s519, 31
      %s524 = smul.addr %s521, 32
      %s525 = sadd.s32 %s523, %s524
      %s526 = smul.addr %s525, 8
      %s527 = scalar_lea.vmem %s12, %s526
      %s528 = smul.u32 16, %s28
      %v530 = vld [vmem:[%s497] sm:$0xff]
      %v531 = vld [vmem:[%s497 + $0x8] sm:$0xff]
      %v532 = vld [vmem:[%s497 + $0x10] sm:$0xff]
      %v533 = vld [vmem:[%s497 + $0x18] sm:$0xff]
      %v534 = vld [vmem:[%s497 + $0x20] sm:$0xff]
      %v535 = vld [vmem:[%s497 + $0x28] sm:$0xff]
      %v536 = vld [vmem:[%s497 + $0x30] sm:$0xff]
      %v537 = vld [vmem:[%s497 + $0x38] sm:$0xff]
      %v538 = vld [vmem:[%s497 + $0x40] sm:$0xff]
      %v539 = vld [vmem:[%s497 + $0x48] sm:$0xff]
      %v540 = vld [vmem:[%s497 + $0x50] sm:$0xff]
      %v541 = vld [vmem:[%s497 + $0x58] sm:$0xff]
      %v542 = vld [vmem:[%s497 + $0x60] sm:$0xff]
      %v543 = vld [vmem:[%s497 + $0x68] sm:$0xff]
      %v544 = vld [vmem:[%s497 + $0x70] sm:$0xff]
      %v545 = vld [vmem:[%s497 + $0x78] sm:$0xff]
      %v546 = vld [vmem:[%s507] sm:$0xff]
      %v547 = vld [vmem:[%s507 + $0x8] sm:$0xff]
      %v548 = vld [vmem:[%s507 + $0x10] sm:$0xff]
      %v549 = vld [vmem:[%s507 + $0x18] sm:$0xff]
      %v550 = vld [vmem:[%s507 + $0x20] sm:$0xff]
      %v551 = vld [vmem:[%s507 + $0x28] sm:$0xff]
      %v552 = vld [vmem:[%s507 + $0x30] sm:$0xff]
      %v553 = vld [vmem:[%s507 + $0x38] sm:$0xff]
      %v554 = vld [vmem:[%s507 + $0x40] sm:$0xff]
      %v555 = vld [vmem:[%s507 + $0x48] sm:$0xff]
      %v556 = vld [vmem:[%s507 + $0x50] sm:$0xff]
      %v557 = vld [vmem:[%s507 + $0x58] sm:$0xff]
      %v558 = vld [vmem:[%s507 + $0x60] sm:$0xff]
      %v559 = vld [vmem:[%s507 + $0x68] sm:$0xff]
      %v560 = vld [vmem:[%s507 + $0x70] sm:$0xff]
      %v561 = vld [vmem:[%s507 + $0x78] sm:$0xff]
      %v562 = vld [vmem:[%s4] sm:$0xff]
      %v563 = vld [vmem:[%s4 + $0x8] sm:$0xff]
      %v564 = vld [vmem:[%s4 + $0x10] sm:$0xff]
      %v565 = vld [vmem:[%s4 + $0x18] sm:$0xff]
      %v566 = vld [vmem:[%s4 + $0x20] sm:$0xff]
      %v567 = vld [vmem:[%s4 + $0x28] sm:$0xff]
      %v568 = vld [vmem:[%s4 + $0x30] sm:$0xff]
      %v569 = vld [vmem:[%s4 + $0x38] sm:$0xff]
      %v570 = vld [vmem:[%s5] sm:$0x1]
      %v572 = vlaneseq
      %v573 = vshrl.u32 %v572, 7
      %v574 = vsub.s32 0, %v573
      %v575 = vrot.slane %v570, %v574
      %vm577 = vcmask 523264
      %v579 = vsel %vm577, %v530, 0
      %v582 = vsel %vm577, %v531, 0
      %v585 = vsel %vm577, %v532, 0
      %v588 = vsel %vm577, %v533, 0
      %v591 = vsel %vm577, %v534, 0
      %v594 = vsel %vm577, %v535, 0
      %v597 = vsel %vm577, %v536, 0
      %v600 = vsel %vm577, %v537, 0
      %v603 = vsel %vm577, %v538, 0
      %v606 = vsel %vm577, %v539, 0
      %v609 = vsel %vm577, %v540, 0
      %v612 = vsel %vm577, %v541, 0
      %v615 = vsel %vm577, %v542, 0
      %v618 = vsel %vm577, %v543, 0
      %v621 = vsel %vm577, %v544, 0
      %v624 = vsel %vm577, %v545, 0
      %626 = vmatprep.subr.mxu0 0.0
      %627 = vmatpush1.msra.mxu0 %v562
      %628 = vmatprep.subr.mxu0 0.0
      %629 = vmatpush1.msra.mxu0 %v563
      %630 = vmatprep.subr.mxu0 0.0
      %631 = vmatpush1.msra.mxu0 %v564
      %632 = vmatprep.subr.mxu0 0.0
      %633 = vmatpush1.msra.mxu0 %v565
      %634 = vmatprep.subr.mxu0 0.0
      %635 = vmatpush1.msra.mxu0 %v566
      %636 = vmatprep.subr.mxu0 0.0
      %637 = vmatpush1.msra.mxu0 %v567
      %638 = vmatprep.subr.mxu0 0.0
      %639 = vmatpush1.msra.mxu0 %v568
      %640 = vmatprep.subr.mxu0 0.0
      %641 = vmatpush1.msra.mxu0 %v569
      %642 = vmatprep.subr.mxu0 0.0
      %643 = vmatpush1.msra.mxu0 0.0
      %644 = vmatprep.subr.mxu0 0.0
      %645 = vmatpush1.msra.mxu0 0.0
      %646 = vmatprep.subr.mxu0 0.0
      %647 = vmatpush1.msra.mxu0 0.0
      %648 = vmatprep.subr.mxu0 0.0
      %649 = vmatpush1.msra.mxu0 0.0
      %650 = vmatprep.subr.mxu0 0.0
      %651 = vmatpush1.msra.mxu0 0.0
      %652 = vmatprep.subr.mxu0 0.0
      %653 = vmatpush1.msra.mxu0 0.0
      %654 = vmatprep.subr.mxu0 0.0
      %655 = vmatpush1.msra.mxu0 0.0
      %656 = vmatprep.subr.mxu0 0.0
      %657 = vmatpush1.msra.mxu0 0.0
      %658 = vmatprep.subr.mxu0 0.0
      %659 = vmatpush1.msra.mxu0 0.0
      %660 = vmatprep.subr.mxu0 0.0
      %661 = vmatpush1.msra.mxu0 0.0
      %662 = vmatprep.subr.mxu0 0.0
      %663 = vmatpush1.msra.mxu0 0.0
      %664 = vmatprep.subr.mxu0 0.0
      %665 = vmatpush1.msra.mxu0 0.0
      %666 = vmatprep.subr.mxu0 0.0
      %667 = vmatpush1.msra.mxu0 0.0
      %668 = vmatprep.subr.mxu0 0.0
      %669 = vmatpush1.msra.mxu0 0.0
      %670 = vmatprep.subr.mxu0 0.0
      %671 = vmatpush1.msra.mxu0 0.0
      %672 = vmatprep.subr.mxu0 0.0
      %673 = vmatpush1.msra.mxu0 0.0
      %674 = vmatprep.subr.mxu0 0.0
      %675 = vmatpush1.msra.mxu0 0.0
      %676 = vmatprep.subr.mxu0 0.0
      %677 = vmatpush1.msra.mxu0 0.0
      %678 = vmatprep.subr.mxu0 0.0
      %679 = vmatpush1.msra.mxu0 0.0
      %680 = vmatprep.subr.mxu0 0.0
      %681 = vmatpush1.msra.mxu0 0.0
      %682 = vmatprep.subr.mxu0 0.0
      %683 = vmatpush1.msra.mxu0 0.0
      %684 = vmatprep.subr.mxu0 0.0
      %685 = vmatpush1.msra.mxu0 0.0
      %686 = vmatprep.subr.mxu0 0.0
      %687 = vmatpush1.msra.mxu0 0.0
      %688 = vmatprep.subr.mxu0 0.0
      %689 = vmatpush1.msra.mxu0 0.0
      %690 = vmatprep.mubr.f32.mxu0 0.0
      %691 = vmatmul.mubr.f32.gmra.mrb[0].mxu0 %v579
      %v692 = vpop.f32.mrb[0].mxu0
      %v693 = vadd.f32 %v575, %v692
      %v694 = vpop.f32.mrb[0].mxu0
      %695 = vmatprep.mubr.f32.mxu0 0.0
      %696 = vmatmul.mubr.f32.gmra.mrb[0].mxu0 %v582
      %v697 = vpop.f32.mrb[0].mxu0
      %v698 = vadd.f32 %v575, %v697
      %v699 = vpop.f32.mrb[0].mxu0
      %700 = vmatprep.mubr.f32.mxu0 0.0
      %701 = vmatmul.mubr.f32.gmra.mrb[0].mxu0 %v585
      %v702 = vpop.f32.mrb[0].mxu0
      %v703 = vadd.f32 %v575, %v702
      %v704 = vpop.f32.mrb[0].mxu0
      %705 = vmatprep.mubr.f32.mxu0 0.0
      %706 = vmatmul.mubr.f32.gmra.mrb[0].mxu0 %v588
      %v707 = vpop.f32.mrb[0].mxu0
      %v708 = vadd.f32 %v575, %v707
      %v709 = vpop.f32.mrb[0].mxu0
      %710 = vmatprep.mubr.f32.mxu0 0.0
      %711 = vmatmul.mubr.f32.gmra.mrb[0].mxu0 %v591
      %v712 = vpop.f32.mrb[0].mxu0
      %v713 = vadd.f32 %v575, %v712
      %v714 = vpop.f32.mrb[0].mxu0
      %715 = vmatprep.mubr.f32.mxu0 0.0
      %716 = vmatmul.mubr.f32.gmra.mrb[0].mxu0 %v594
      %v717 = vpop.f32.mrb[0].mxu0
      %v718 = vadd.f32 %v575, %v717
      %v719 = vpop.f32.mrb[0].mxu0
      %720 = vmatprep.mubr.f32.mxu0 0.0
      %721 = vmatmul.mubr.f32.gmra.mrb[0].mxu0 %v597
      %v722 = vpop.f32.mrb[0].mxu0
      %v723 = vadd.f32 %v575, %v722
      %v724 = vpop.f32.mrb[0].mxu0
      %725 = vmatprep.mubr.f32.mxu0 0.0
      %726 = vmatmul.mubr.f32.gmra.mrb[0].mxu0 %v600
      %v727 = vpop.f32.mrb[0].mxu0
      %v728 = vadd.f32 %v575, %v727
      %v729 = vpop.f32.mrb[0].mxu0
      %730 = vmatprep.mubr.f32.mxu0 0.0
      %731 = vmatmul.mubr.f32.gmra.mrb[0].mxu0 %v603
      %v732 = vpop.f32.mrb[0].mxu0
      %v733 = vadd.f32 %v575, %v732
      %v734 = vpop.f32.mrb[0].mxu0
      %735 = vmatprep.mubr.f32.mxu0 0.0
      %736 = vmatmul.mubr.f32.gmra.mrb[0].mxu0 %v606
      %v737 = vpop.f32.mrb[0].mxu0
      %v738 = vadd.f32 %v575, %v737
      %v739 = vpop.f32.mrb[0].mxu0
      %740 = vmatprep.mubr.f32.mxu0 0.0
      %741 = vmatmul.mubr.f32.gmra.mrb[0].mxu0 %v609
      %v742 = vpop.f32.mrb[0].mxu0
      %v743 = vadd.f32 %v575, %v742
      %v744 = vpop.f32.mrb[0].mxu0
      %745 = vmatprep.mubr.f32.mxu0 0.0
      %746 = vmatmul.mubr.f32.gmra.mrb[0].mxu0 %v612
      %v747 = vpop.f32.mrb[0].mxu0
      %v748 = vadd.f32 %v575, %v747
      %v749 = vpop.f32.mrb[0].mxu0
      %750 = vmatprep.mubr.f32.mxu0 0.0
      %751 = vmatmul.mubr.f32.gmra.mrb[0].mxu0 %v615
      %v752 = vpop.f32.mrb[0].mxu0
      %v753 = vadd.f32 %v575, %v752
      %v754 = vpop.f32.mrb[0].mxu0
      %755 = vmatprep.mubr.f32.mxu0 0.0
      %756 = vmatmul.mubr.f32.gmra.mrb[0].mxu0 %v618
      %v757 = vpop.f32.mrb[0].mxu0
      %v758 = vadd.f32 %v575, %v757
      %v759 = vpop.f32.mrb[0].mxu0
      %760 = vmatprep.mubr.f32.mxu0 0.0
      %761 = vmatmul.mubr.f32.gmra.mrb[0].mxu0 %v621
      %v762 = vpop.f32.mrb[0].mxu0
      %v763 = vadd.f32 %v575, %v762
      %v764 = vpop.f32.mrb[0].mxu0
      %765 = vmatprep.mubr.f32.mxu0 0.0
      %766 = vmatmul.mubr.f32.gmra.mrb[0].mxu0 %v624
      %v767 = vpop.f32.mrb[0].mxu0
      %v768 = vadd.f32 %v575, %v767
      %v769 = vpop.f32.mrb[0].mxu0
      %770 = vdwg.mxu0
      %v771 = vmax.f32 %v693, 0.0
      %v772 = vmax.f32 %v698, 0.0
      %v773 = vmax.f32 %v703, 0.0
      %v774 = vmax.f32 %v708, 0.0
      %v775 = vmax.f32 %v713, 0.0
      %v776 = vmax.f32 %v718, 0.0
      %v777 = vmax.f32 %v723, 0.0
      %v778 = vmax.f32 %v728, 0.0
      %v779 = vmax.f32 %v733, 0.0
      %v780 = vmax.f32 %v738, 0.0
      %v781 = vmax.f32 %v743, 0.0
      %v782 = vmax.f32 %v748, 0.0
      %v783 = vmax.f32 %v753, 0.0
      %v784 = vmax.f32 %v758, 0.0
      %v785 = vmax.f32 %v763, 0.0
      %v786 = vmax.f32 %v768, 0.0
      %v787 = vld [vmem:[%s6] sm:$0xff]
      %v788 = vld [vmem:[%s6 + $0x8] sm:$0xff]
      %v789 = vld [vmem:[%s6 + $0x10] sm:$0xff]
      %v790 = vld [vmem:[%s6 + $0x18] sm:$0xff]
      %v791 = vld [vmem:[%s6 + $0x20] sm:$0xff]
      %v792 = vld [vmem:[%s6 + $0x28] sm:$0xff]
      %v793 = vld [vmem:[%s6 + $0x30] sm:$0xff]
      %v794 = vld [vmem:[%s6 + $0x38] sm:$0xff]
      %v795 = vld [vmem:[%s7] sm:$0x1]
      %v797 = vlaneseq
      %v798 = vshrl.u32 %v797, 7
      %v799 = vsub.s32 0, %v798
      %v800 = vrot.slane %v795, %v799
      %v803 = vsel %vm577, %v546, 0
      %v806 = vsel %vm577, %v547, 0
      %v809 = vsel %vm577, %v548, 0
      %v812 = vsel %vm577, %v549, 0
      %v815 = vsel %vm577, %v550, 0
      %v818 = vsel %vm577, %v551, 0
      %v821 = vsel %vm577, %v552, 0
      %v824 = vsel %vm577, %v553, 0
      %v827 = vsel %vm577, %v554, 0
      %v830 = vsel %vm577, %v555, 0
      %v833 = vsel %vm577, %v556, 0
      %v836 = vsel %vm577, %v557, 0
      %v839 = vsel %vm577, %v558, 0
      %v842 = vsel %vm577, %v559, 0
      %v845 = vsel %vm577, %v560, 0
      %v848 = vsel %vm577, %v561, 0
      %850 = vmatprep.subr.mxu0 0.0
      %851 = vmatpush1.msra.mxu0 %v787
      %852 = vmatprep.subr.mxu0 0.0
      %853 = vmatpush1.msra.mxu0 %v788
      %854 = vmatprep.subr.mxu0 0.0
      %855 = vmatpush1.msra.mxu0 %v789
      %856 = vmatprep.subr.mxu0 0.0
      %857 = vmatpush1.msra.mxu0 %v790
      %858 = vmatprep.subr.mxu0 0.0
      %859 = vmatpush1.msra.mxu0 %v791
      %860 = vmatprep.subr.mxu0 0.0
      %861 = vmatpush1.msra.mxu0 %v792
      %862 = vmatprep.subr.mxu0 0.0
      %863 = vmatpush1.msra.mxu0 %v793
      %864 = vmatprep.subr.mxu0 0.0
      %865 = vmatpush1.msra.mxu0 %v794
      %866 = vmatprep.subr.mxu0 0.0
      %867 = vmatpush1.msra.mxu0 0.0
      %868 = vmatprep.subr.mxu0 0.0
      %869 = vmatpush1.msra.mxu0 0.0
      %870 = vmatprep.subr.mxu0 0.0
      %871 = vmatpush1.msra.mxu0 0.0
      %872 = vmatprep.subr.mxu0 0.0
      %873 = vmatpush1.msra.mxu0 0.0
      %874 = vmatprep.subr.mxu0 0.0
      %875 = vmatpush1.msra.mxu0 0.0
      %876 = vmatprep.subr.mxu0 0.0
      %877 = vmatpush1.msra.mxu0 0.0
      %878 = vmatprep.subr.mxu0 0.0
      %879 = vmatpush1.msra.mxu0 0.0
      %880 = vmatprep.subr.mxu0 0.0
      %881 = vmatpush1.msra.mxu0 0.0
      %882 = vmatprep.subr.mxu0 0.0
      %883 = vmatpush1.msra.mxu0 0.0
      %884 = vmatprep.subr.mxu0 0.0
      %885 = vmatpush1.msra.mxu0 0.0
      %886 = vmatprep.subr.mxu0 0.0
      %887 = vmatpush1.msra.mxu0 0.0
      %888 = vmatprep.subr.mxu0 0.0
      %889 = vmatpush1.msra.mxu0 0.0
      %890 = vmatprep.subr.mxu0 0.0
      %891 = vmatpush1.msra.mxu0 0.0
      %892 = vmatprep.subr.mxu0 0.0
      %893 = vmatpush1.msra.mxu0 0.0
      %894 = vmatprep.subr.mxu0 0.0
      %895 = vmatpush1.msra.mxu0 0.0
      %896 = vmatprep.subr.mxu0 0.0
      %897 = vmatpush1.msra.mxu0 0.0
      %898 = vmatprep.subr.mxu0 0.0
      %899 = vmatpush1.msra.mxu0 0.0
      %900 = vmatprep.subr.mxu0 0.0
      %901 = vmatpush1.msra.mxu0 0.0
      %902 = vmatprep.subr.mxu0 0.0
      %903 = vmatpush1.msra.mxu0 0.0
      %904 = vmatprep.subr.mxu0 0.0
      %905 = vmatpush1.msra.mxu0 0.0
      %906 = vmatprep.subr.mxu0 0.0
      %907 = vmatpush1.msra.mxu0 0.0
      %908 = vmatprep.subr.mxu0 0.0
      %909 = vmatpush1.msra.mxu0 0.0
      %910 = vmatprep.subr.mxu0 0.0
      %911 = vmatpush1.msra.mxu0 0.0
      %912 = vmatprep.subr.mxu0 0.0
      %913 = vmatpush1.msra.mxu0 0.0
      %914 = vmatprep.mubr.f32.mxu0 0.0
      %915 = vmatmul.mubr.f32.gmra.mrb[0].mxu0 %v803
      %v916 = vpop.f32.mrb[0].mxu0
      %v917 = vadd.f32 %v800, %v916
      %v918 = vpop.f32.mrb[0].mxu0
      %919 = vmatprep.mubr.f32.mxu0 0.0
      %920 = vmatmul.mubr.f32.gmra.mrb[0].mxu0 %v806
      %v921 = vpop.f32.mrb[0].mxu0
      %v922 = vadd.f32 %v800, %v921
      %v923 = vpop.f32.mrb[0].mxu0
      %924 = vmatprep.mubr.f32.mxu0 0.0
      %925 = vmatmul.mubr.f32.gmra.mrb[0].mxu0 %v809
      %v926 = vpop.f32.mrb[0].mxu0
      %v927 = vadd.f32 %v800, %v926
      %v928 = vpop.f32.mrb[0].mxu0
      %929 = vmatprep.mubr.f32.mxu0 0.0
      %930 = vmatmul.mubr.f32.gmra.mrb[0].mxu0 %v812
      %v931 = vpop.f32.mrb[0].mxu0
      %v932 = vadd.f32 %v800, %v931
      %v933 = vpop.f32.mrb[0].mxu0
      %934 = vmatprep.mubr.f32.mxu0 0.0
      %935 = vmatmul.mubr.f32.gmra.mrb[0].mxu0 %v815
      %v936 = vpop.f32.mrb[0].mxu0
      %v937 = vadd.f32 %v800, %v936
      %v938 = vpop.f32.mrb[0].mxu0
      %939 = vmatprep.mubr.f32.mxu0 0.0
      %940 = vmatmul.mubr.f32.gmra.mrb[0].mxu0 %v818
      %v941 = vpop.f32.mrb[0].mxu0
      %v942 = vadd.f32 %v800, %v941
      %v943 = vpop.f32.mrb[0].mxu0
      %944 = vmatprep.mubr.f32.mxu0 0.0
      %945 = vmatmul.mubr.f32.gmra.mrb[0].mxu0 %v821
      %v946 = vpop.f32.mrb[0].mxu0
      %v947 = vadd.f32 %v800, %v946
      %v948 = vpop.f32.mrb[0].mxu0
      %949 = vmatprep.mubr.f32.mxu0 0.0
      %950 = vmatmul.mubr.f32.gmra.mrb[0].mxu0 %v824
      %v951 = vpop.f32.mrb[0].mxu0
      %v952 = vadd.f32 %v800, %v951
      %v953 = vpop.f32.mrb[0].mxu0
      %954 = vmatprep.mubr.f32.mxu0 0.0
      %955 = vmatmul.mubr.f32.gmra.mrb[0].mxu0 %v827
      %v956 = vpop.f32.mrb[0].mxu0
      %v957 = vadd.f32 %v800, %v956
      %v958 = vpop.f32.mrb[0].mxu0
      %959 = vmatprep.mubr.f32.mxu0 0.0
      %960 = vmatmul.mubr.f32.gmra.mrb[0].mxu0 %v830
      %v961 = vpop.f32.mrb[0].mxu0
      %v962 = vadd.f32 %v800, %v961
      %v963 = vpop.f32.mrb[0].mxu0
      %964 = vmatprep.mubr.f32.mxu0 0.0
      %965 = vmatmul.mubr.f32.gmra.mrb[0].mxu0 %v833
      %v966 = vpop.f32.mrb[0].mxu0
      %v967 = vadd.f32 %v800, %v966
      %v968 = vpop.f32.mrb[0].mxu0
      %969 = vmatprep.mubr.f32.mxu0 0.0
      %970 = vmatmul.mubr.f32.gmra.mrb[0].mxu0 %v836
      %v971 = vpop.f32.mrb[0].mxu0
      %v972 = vadd.f32 %v800, %v971
      %v973 = vpop.f32.mrb[0].mxu0
      %974 = vmatprep.mubr.f32.mxu0 0.0
      %975 = vmatmul.mubr.f32.gmra.mrb[0].mxu0 %v839
      %v976 = vpop.f32.mrb[0].mxu0
      %v977 = vadd.f32 %v800, %v976
      %v978 = vpop.f32.mrb[0].mxu0
      %979 = vmatprep.mubr.f32.mxu0 0.0
      %980 = vmatmul.mubr.f32.gmra.mrb[0].mxu0 %v842
      %v981 = vpop.f32.mrb[0].mxu0
      %v982 = vadd.f32 %v800, %v981
      %v983 = vpop.f32.mrb[0].mxu0
      %984 = vmatprep.mubr.f32.mxu0 0.0
      %985 = vmatmul.mubr.f32.gmra.mrb[0].mxu0 %v845
      %v986 = vpop.f32.mrb[0].mxu0
      %v987 = vadd.f32 %v800, %v986
      %v988 = vpop.f32.mrb[0].mxu0
      %989 = vmatprep.mubr.f32.mxu0 0.0
      %990 = vmatmul.mubr.f32.gmra.mrb[0].mxu0 %v848
      %v991 = vpop.f32.mrb[0].mxu0
      %v992 = vadd.f32 %v800, %v991
      %v993 = vpop.f32.mrb[0].mxu0
      %994 = vdwg.mxu0
      %v995 = vmax.f32 %v917, 0.0
      %v996 = vmax.f32 %v922, 0.0
      %v997 = vmax.f32 %v927, 0.0
      %v998 = vmax.f32 %v932, 0.0
      %v999 = vmax.f32 %v937, 0.0
      %v1000 = vmax.f32 %v942, 0.0
      %v1001 = vmax.f32 %v947, 0.0
      %v1002 = vmax.f32 %v952, 0.0
      %v1003 = vmax.f32 %v957, 0.0
      %v1004 = vmax.f32 %v962, 0.0
      %v1005 = vmax.f32 %v967, 0.0
      %v1006 = vmax.f32 %v972, 0.0
      %v1007 = vmax.f32 %v977, 0.0
      %v1008 = vmax.f32 %v982, 0.0
      %v1009 = vmax.f32 %v987, 0.0
      %v1010 = vmax.f32 %v992, 0.0
      %1027 = vrot.lane.b32.xlu0 %v995, 32
      %v1028 = vpop.permute.xlu0 %1027
      %1029 = vrot.lane.b32.xlu0 %v996, 32
      %v1030 = vpop.permute.xlu0 %1029
      %1031 = vrot.lane.b32.xlu0 %v997, 32
      %v1032 = vpop.permute.xlu0 %1031
      %1033 = vrot.lane.b32.xlu0 %v998, 32
      %v1034 = vpop.permute.xlu0 %1033
      %1035 = vrot.lane.b32.xlu0 %v999, 32
      %v1036 = vpop.permute.xlu0 %1035
      %1037 = vrot.lane.b32.xlu0 %v1000, 32
      %v1038 = vpop.permute.xlu0 %1037
      %1039 = vrot.lane.b32.xlu0 %v1001, 32
      %v1040 = vpop.permute.xlu0 %1039
      %1041 = vrot.lane.b32.xlu0 %v1002, 32
      %v1042 = vpop.permute.xlu0 %1041
      %1043 = vrot.lane.b32.xlu0 %v1003, 32
      %v1044 = vpop.permute.xlu0 %1043
      %1045 = vrot.lane.b32.xlu0 %v1004, 32
      %v1046 = vpop.permute.xlu0 %1045
      %1047 = vrot.lane.b32.xlu0 %v1005, 32
      %v1048 = vpop.permute.xlu0 %1047
      %1049 = vrot.lane.b32.xlu0 %v1006, 32
      %v1050 = vpop.permute.xlu0 %1049
      %1051 = vrot.lane.b32.xlu0 %v1007, 32
      %v1052 = vpop.permute.xlu0 %1051
      %1053 = vrot.lane.b32.xlu0 %v1008, 32
      %v1054 = vpop.permute.xlu0 %1053
      %1055 = vrot.lane.b32.xlu0 %v1009, 32
      %v1056 = vpop.permute.xlu0 %1055
      %1057 = vrot.lane.b32.xlu0 %v1010, 32
      %v1058 = vpop.permute.xlu0 %1057
      %vm1075 = vcmask 261120
      %v1076 = vsel %vm1075, %v771, %v1028
      %v1077 = vsel %vm1075, %v772, %v1030
      %v1078 = vsel %vm1075, %v773, %v1032
      %v1079 = vsel %vm1075, %v774, %v1034
      %v1080 = vsel %vm1075, %v775, %v1036
      %v1081 = vsel %vm1075, %v776, %v1038
      %v1082 = vsel %vm1075, %v777, %v1040
      %v1083 = vsel %vm1075, %v778, %v1042
      %v1084 = vsel %vm1075, %v779, %v1044
      %v1085 = vsel %vm1075, %v780, %v1046
      %v1086 = vsel %vm1075, %v781, %v1048
      %v1087 = vsel %vm1075, %v782, %v1050
      %v1088 = vsel %vm1075, %v783, %v1052
      %v1089 = vsel %vm1075, %v784, %v1054
      %v1090 = vsel %vm1075, %v785, %v1056
      %v1091 = vsel %vm1075, %v786, %v1058
      %v1092 = vpack.c.bf16 %v1077, %v1076
      %v1093 = vpack.c.bf16 %v1079, %v1078
      %v1094 = vpack.c.bf16 %v1081, %v1080
      %v1095 = vpack.c.bf16 %v1083, %v1082
      %v1096 = vpack.c.bf16 %v1085, %v1084
      %v1097 = vpack.c.bf16 %v1087, %v1086
      %v1098 = vpack.c.bf16 %v1089, %v1088
      %v1099 = vpack.c.bf16 %v1091, %v1090
      %v1100 = vld [vmem:[%s513] sm:$0xf]
      %v1101 = vld [vmem:[%s513 + $0x4] sm:$0xf]
      %v1102 = vld [vmem:[%s513 + $0x8] sm:$0xf]
      %v1103 = vld [vmem:[%s513 + $0xc] sm:$0xf]
      %v1104 = vld [vmem:[%s513 + $0x10] sm:$0xf]
      %v1105 = vld [vmem:[%s513 + $0x14] sm:$0xf]
      %v1106 = vld [vmem:[%s513 + $0x18] sm:$0xf]
      %v1107 = vld [vmem:[%s513 + $0x1c] sm:$0xf]
      %v1108 = vld [vmem:[%s513 + $0x20] sm:$0xf]
      %v1109 = vld [vmem:[%s513 + $0x24] sm:$0xf]
      %v1110 = vld [vmem:[%s513 + $0x28] sm:$0xf]
      %v1111 = vld [vmem:[%s513 + $0x2c] sm:$0xf]
      %v1112 = vld [vmem:[%s513 + $0x30] sm:$0xf]
      %v1113 = vld [vmem:[%s513 + $0x34] sm:$0xf]
      %v1114 = vld [vmem:[%s513 + $0x38] sm:$0xf]
      %v1115 = vld [vmem:[%s513 + $0x3c] sm:$0xf]
      %v1132 = vunpack.c.l.b16 %v1100
      %v1133 = vunpack.c.l.b16 %v1101
      %v1134 = vunpack.c.l.b16 %v1102
      %v1135 = vunpack.c.l.b16 %v1103
      %v1136 = vunpack.c.l.b16 %v1104
      %v1137 = vunpack.c.l.b16 %v1105
      %v1138 = vunpack.c.l.b16 %v1106
      %v1139 = vunpack.c.l.b16 %v1107
      %v1140 = vunpack.c.l.b16 %v1108
      %v1141 = vunpack.c.l.b16 %v1109
      %v1142 = vunpack.c.l.b16 %v1110
      %v1143 = vunpack.c.l.b16 %v1111
      %v1144 = vunpack.c.l.b16 %v1112
      %v1145 = vunpack.c.l.b16 %v1113
      %v1146 = vunpack.c.l.b16 %v1114
      %v1147 = vunpack.c.l.b16 %v1115
      %v1148 = vpack.c.b16 %v1133, %v1132
      %v1149 = vpack.c.b16 %v1135, %v1134
      %v1150 = vpack.c.b16 %v1137, %v1136
      %v1151 = vpack.c.b16 %v1139, %v1138
      %v1152 = vpack.c.b16 %v1141, %v1140
      %v1153 = vpack.c.b16 %v1143, %v1142
      %v1154 = vpack.c.b16 %v1145, %v1144
      %v1155 = vpack.c.b16 %v1147, %v1146
      %v1157 = vsel %vm577, %v1092, 0
      %v1160 = vsel %vm577, %v1093, 0
      %v1163 = vsel %vm577, %v1094, 0
      %v1166 = vsel %vm577, %v1095, 0
      %v1169 = vsel %vm577, %v1096, 0
      %v1172 = vsel %vm577, %v1097, 0
      %v1175 = vsel %vm577, %v1098, 0
      %v1178 = vsel %vm577, %v1099, 0
      %v1181 = vsel %vm577, %v1148, 0
      %v1184 = vsel %vm577, %v1149, 0
      %v1187 = vsel %vm577, %v1150, 0
      %v1190 = vsel %vm577, %v1151, 0
      %v1193 = vsel %vm577, %v1152, 0
      %v1196 = vsel %vm577, %v1153, 0
      %v1199 = vsel %vm577, %v1154, 0
      %v1202 = vsel %vm577, %v1155, 0
      %1204 = vmatprep.subr.bf16.mxu0 0
      %1205 = vmatpush1.bf16.xpose.msra.mxu0 %v1181
      %1206 = vmatprep.subr.bf16.mxu0 0
      %1207 = vmatpush1.bf16.xpose.msra.mxu0 %v1184
      %1208 = vmatprep.subr.bf16.mxu0 0
      %1209 = vmatpush1.bf16.xpose.msra.mxu0 %v1187
      %1210 = vmatprep.subr.bf16.mxu0 0
      %1211 = vmatpush1.bf16.xpose.msra.mxu0 %v1190
      %1212 = vmatprep.subr.bf16.mxu0 0
      %1213 = vmatpush1.bf16.xpose.msra.mxu0 %v1193
      %1214 = vmatprep.subr.bf16.mxu0 0
      %1215 = vmatpush1.bf16.xpose.msra.mxu0 %v1196
      %1216 = vmatprep.subr.bf16.mxu0 0
      %1217 = vmatpush1.bf16.xpose.msra.mxu0 %v1199
      %1218 = vmatprep.subr.bf16.mxu0 0
      %1219 = vmatpush1.bf16.xpose.msra.mxu0 %v1202
      %1220 = vmatprep.subr.bf16.mxu0 0
      %1221 = vmatpush1.bf16.xpose.msra.mxu0 0
      %1222 = vmatprep.subr.bf16.mxu0 0
      %1223 = vmatpush1.bf16.xpose.msra.mxu0 0
      %1224 = vmatprep.subr.bf16.mxu0 0
      %1225 = vmatpush1.bf16.xpose.msra.mxu0 0
      %1226 = vmatprep.subr.bf16.mxu0 0
      %1227 = vmatpush1.bf16.xpose.msra.mxu0 0
      %1228 = vmatprep.subr.bf16.mxu0 0
      %1229 = vmatpush1.bf16.xpose.msra.mxu0 0
      %1230 = vmatprep.subr.bf16.mxu0 0
      %1231 = vmatpush1.bf16.xpose.msra.mxu0 0
      %1232 = vmatprep.subr.bf16.mxu0 0
      %1233 = vmatpush1.bf16.xpose.msra.mxu0 0
      %1234 = vmatprep.subr.bf16.mxu0 0
      %1235 = vmatpush1.bf16.xpose.msra.mxu0 0
      %1236 = vmatprep.mubr.bf16.mxu0 0
      %1237 = vmatmul.mubr.bf16.gmra.mrb[0].mxu0 %v1157
      %v1238 = vpop.f32.mrb[0].mxu0
      %v1239 = vadd.f32 0.0, %v1238
      %v1240 = vpop.f32.mrb[0].mxu0
      %v1241 = vpop.f32.mrb[0].mxu0
      %v1242 = vadd.f32 0.0, %v1241
      %v1243 = vpop.f32.mrb[0].mxu0
      %1244 = vmatprep.mubr.bf16.mxu0 0
      %1245 = vmatmul.mubr.bf16.gmra.mrb[0].mxu0 %v1160
      %v1246 = vpop.f32.mrb[0].mxu0
      %v1247 = vadd.f32 0.0, %v1246
      %v1248 = vpop.f32.mrb[0].mxu0
      %v1249 = vpop.f32.mrb[0].mxu0
      %v1250 = vadd.f32 0.0, %v1249
      %v1251 = vpop.f32.mrb[0].mxu0
      %1252 = vmatprep.mubr.bf16.mxu0 0
      %1253 = vmatmul.mubr.bf16.gmra.mrb[0].mxu0 %v1163
      %v1254 = vpop.f32.mrb[0].mxu0
      %v1255 = vadd.f32 0.0, %v1254
      %v1256 = vpop.f32.mrb[0].mxu0
      %v1257 = vpop.f32.mrb[0].mxu0
      %v1258 = vadd.f32 0.0, %v1257
      %v1259 = vpop.f32.mrb[0].mxu0
      %1260 = vmatprep.mubr.bf16.mxu0 0
      %1261 = vmatmul.mubr.bf16.gmra.mrb[0].mxu0 %v1166
      %v1262 = vpop.f32.mrb[0].mxu0
      %v1263 = vadd.f32 0.0, %v1262
      %v1264 = vpop.f32.mrb[0].mxu0
      %v1265 = vpop.f32.mrb[0].mxu0
      %v1266 = vadd.f32 0.0, %v1265
      %v1267 = vpop.f32.mrb[0].mxu0
      %1268 = vmatprep.mubr.bf16.mxu0 0
      %1269 = vmatmul.mubr.bf16.gmra.mrb[0].mxu0 %v1169
      %v1270 = vpop.f32.mrb[0].mxu0
      %v1271 = vadd.f32 0.0, %v1270
      %v1272 = vpop.f32.mrb[0].mxu0
      %v1273 = vpop.f32.mrb[0].mxu0
      %v1274 = vadd.f32 0.0, %v1273
      %v1275 = vpop.f32.mrb[0].mxu0
      %1276 = vmatprep.mubr.bf16.mxu0 0
      %1277 = vmatmul.mubr.bf16.gmra.mrb[0].mxu0 %v1172
      %v1278 = vpop.f32.mrb[0].mxu0
      %v1279 = vadd.f32 0.0, %v1278
      %v1280 = vpop.f32.mrb[0].mxu0
      %v1281 = vpop.f32.mrb[0].mxu0
      %v1282 = vadd.f32 0.0, %v1281
      %v1283 = vpop.f32.mrb[0].mxu0
      %1284 = vmatprep.mubr.bf16.mxu0 0
      %1285 = vmatmul.mubr.bf16.gmra.mrb[0].mxu0 %v1175
      %v1286 = vpop.f32.mrb[0].mxu0
      %v1287 = vadd.f32 0.0, %v1286
      %v1288 = vpop.f32.mrb[0].mxu0
      %v1289 = vpop.f32.mrb[0].mxu0
      %v1290 = vadd.f32 0.0, %v1289
      %v1291 = vpop.f32.mrb[0].mxu0
      %1292 = vmatprep.mubr.bf16.mxu0 0
      %1293 = vmatmul.mubr.bf16.gmra.mrb[0].mxu0 %v1178
      %v1294 = vpop.f32.mrb[0].mxu0
      %v1295 = vadd.f32 0.0, %v1294
      %v1296 = vpop.f32.mrb[0].mxu0
      %v1297 = vpop.f32.mrb[0].mxu0
      %v1298 = vadd.f32 0.0, %v1297
      %v1299 = vpop.f32.mrb[0].mxu0
      %1300 = vdwg.mxu0
      %v1301 = vmul.f32 %v1239, 0.17677669
      %v1302 = vmul.f32 %v1242, 0.17677669
      %v1303 = vmul.f32 %v1247, 0.17677669
      %v1304 = vmul.f32 %v1250, 0.17677669
      %v1305 = vmul.f32 %v1255, 0.17677669
      %v1306 = vmul.f32 %v1258, 0.17677669
      %v1307 = vmul.f32 %v1263, 0.17677669
      %v1308 = vmul.f32 %v1266, 0.17677669
      %v1309 = vmul.f32 %v1271, 0.17677669
      %v1310 = vmul.f32 %v1274, 0.17677669
      %v1311 = vmul.f32 %v1279, 0.17677669
      %v1312 = vmul.f32 %v1282, 0.17677669
      %v1313 = vmul.f32 %v1287, 0.17677669
      %v1314 = vmul.f32 %v1290, 0.17677669
      %v1315 = vmul.f32 %v1295, 0.17677669
      %v1316 = vmul.f32 %v1298, 0.17677669
      %v1317 = vlaneseq
      %v1318 = vand.u32 %v1317, 127
      %vm1319 = vcmp.lt.s32.totalorder %v1318, 110
      %v1320 = vsel %vm1319, %v1301, -1e+30
      %v1321 = vsel %vm1319, %v1302, -1e+30
      %v1322 = vsel %vm1319, %v1303, -1e+30
      %v1323 = vsel %vm1319, %v1304, -1e+30
      %v1324 = vsel %vm1319, %v1305, -1e+30
      %v1325 = vsel %vm1319, %v1306, -1e+30
      %v1326 = vsel %vm1319, %v1307, -1e+30
      %v1327 = vsel %vm1319, %v1308, -1e+30
      %v1328 = vsel %vm1319, %v1309, -1e+30
      %v1329 = vsel %vm1319, %v1310, -1e+30
      %v1330 = vsel %vm1319, %v1311, -1e+30
      %v1331 = vsel %vm1319, %v1312, -1e+30
      %v1332 = vsel %vm1319, %v1313, -1e+30
      %v1333 = vsel %vm1319, %v1314, -1e+30
      %v1334 = vsel %vm1319, %v1315, -1e+30
      %v1335 = vsel %vm1319, %v1316, -1e+30
      %1336 = vmax.xlane.f32.xlu0 %v1320
      %v1337 = vpop.xlane.xlu0 %1336
      %1338 = vmax.xlane.f32.xlu0 %v1321
      %v1339 = vpop.xlane.xlu0 %1338
      %1340 = vmax.xlane.f32.xlu0 %v1322
      %v1341 = vpop.xlane.xlu0 %1340
      %1342 = vmax.xlane.f32.xlu0 %v1323
      %v1343 = vpop.xlane.xlu0 %1342
      %1344 = vmax.xlane.f32.xlu0 %v1324
      %v1345 = vpop.xlane.xlu0 %1344
      %1346 = vmax.xlane.f32.xlu0 %v1325
      %v1347 = vpop.xlane.xlu0 %1346
      %1348 = vmax.xlane.f32.xlu0 %v1326
      %v1349 = vpop.xlane.xlu0 %1348
      %1350 = vmax.xlane.f32.xlu0 %v1327
      %v1351 = vpop.xlane.xlu0 %1350
      %1352 = vmax.xlane.f32.xlu0 %v1328
      %v1353 = vpop.xlane.xlu0 %1352
      %1354 = vmax.xlane.f32.xlu0 %v1329
      %v1355 = vpop.xlane.xlu0 %1354
      %1356 = vmax.xlane.f32.xlu0 %v1330
      %v1357 = vpop.xlane.xlu0 %1356
      %1358 = vmax.xlane.f32.xlu0 %v1331
      %v1359 = vpop.xlane.xlu0 %1358
      %1360 = vmax.xlane.f32.xlu0 %v1332
      %v1361 = vpop.xlane.xlu0 %1360
      %1362 = vmax.xlane.f32.xlu0 %v1333
      %v1363 = vpop.xlane.xlu0 %1362
      %1364 = vmax.xlane.f32.xlu0 %v1334
      %v1365 = vpop.xlane.xlu0 %1364
      %1366 = vmax.xlane.f32.xlu0 %v1335
      %v1367 = vpop.xlane.xlu0 %1366
      %v1368 = vsub.f32 %v1320, %v1337
      %v1369 = vsub.f32 %v1321, %v1339
      %v1370 = vsub.f32 %v1322, %v1341
      %v1371 = vsub.f32 %v1323, %v1343
      %v1372 = vsub.f32 %v1324, %v1345
      %v1373 = vsub.f32 %v1325, %v1347
      %v1374 = vsub.f32 %v1326, %v1349
      %v1375 = vsub.f32 %v1327, %v1351
      %v1376 = vsub.f32 %v1328, %v1353
      %v1377 = vsub.f32 %v1329, %v1355
      %v1378 = vsub.f32 %v1330, %v1357
      %v1379 = vsub.f32 %v1331, %v1359
      %v1380 = vsub.f32 %v1332, %v1361
      %v1381 = vsub.f32 %v1333, %v1363
      %v1382 = vsub.f32 %v1334, %v1365
      %v1383 = vsub.f32 %v1335, %v1367
      %v1384 = vmul.f32 %v1368, 1.442695
      %v1385 = vpow.pop %v1384
      %v1386 = vmul.f32 %v1369, 1.442695
      %v1387 = vpow.pop %v1386
      %v1388 = vmul.f32 %v1370, 1.442695
      %v1389 = vpow.pop %v1388
      %v1390 = vmul.f32 %v1371, 1.442695
      %v1391 = vpow.pop %v1390
      %v1392 = vmul.f32 %v1372, 1.442695
      %v1393 = vpow.pop %v1392
      %v1394 = vmul.f32 %v1373, 1.442695
      %v1395 = vpow.pop %v1394
      %v1396 = vmul.f32 %v1374, 1.442695
      %v1397 = vpow.pop %v1396
      %v1398 = vmul.f32 %v1375, 1.442695
      %v1399 = vpow.pop %v1398
      %v1400 = vmul.f32 %v1376, 1.442695
      %v1401 = vpow.pop %v1400
      %v1402 = vmul.f32 %v1377, 1.442695
      %v1403 = vpow.pop %v1402
      %v1404 = vmul.f32 %v1378, 1.442695
      %v1405 = vpow.pop %v1404
      %v1406 = vmul.f32 %v1379, 1.442695
      %v1407 = vpow.pop %v1406
      %v1408 = vmul.f32 %v1380, 1.442695
      %v1409 = vpow.pop %v1408
      %v1410 = vmul.f32 %v1381, 1.442695
      %v1411 = vpow.pop %v1410
      %v1412 = vmul.f32 %v1382, 1.442695
      %v1413 = vpow.pop %v1412
      %v1414 = vmul.f32 %v1383, 1.442695
      %v1415 = vpow.pop %v1414
      %1416 = vadd.xlane.f32.xlu0 %v1385
      %v1417 = vpop.xlane.xlu0 %1416
      %1418 = vadd.xlane.f32.xlu0 %v1387
      %v1419 = vpop.xlane.xlu0 %1418
      %1420 = vadd.xlane.f32.xlu0 %v1389
      %v1421 = vpop.xlane.xlu0 %1420
      %1422 = vadd.xlane.f32.xlu0 %v1391
      %v1423 = vpop.xlane.xlu0 %1422
      %1424 = vadd.xlane.f32.xlu0 %v1393
      %v1425 = vpop.xlane.xlu0 %1424
      %1426 = vadd.xlane.f32.xlu0 %v1395
      %v1427 = vpop.xlane.xlu0 %1426
      %1428 = vadd.xlane.f32.xlu0 %v1397
      %v1429 = vpop.xlane.xlu0 %1428
      %1430 = vadd.xlane.f32.xlu0 %v1399
      %v1431 = vpop.xlane.xlu0 %1430
      %1432 = vadd.xlane.f32.xlu0 %v1401
      %v1433 = vpop.xlane.xlu0 %1432
      %1434 = vadd.xlane.f32.xlu0 %v1403
      %v1435 = vpop.xlane.xlu0 %1434
      %1436 = vadd.xlane.f32.xlu0 %v1405
      %v1437 = vpop.xlane.xlu0 %1436
      %1438 = vadd.xlane.f32.xlu0 %v1407
      %v1439 = vpop.xlane.xlu0 %1438
      %1440 = vadd.xlane.f32.xlu0 %v1409
      %v1441 = vpop.xlane.xlu0 %1440
      %1442 = vadd.xlane.f32.xlu0 %v1411
      %v1443 = vpop.xlane.xlu0 %1442
      %1444 = vadd.xlane.f32.xlu0 %v1413
      %v1445 = vpop.xlane.xlu0 %1444
      %1446 = vadd.xlane.f32.xlu0 %v1415
      %v1447 = vpop.xlane.xlu0 %1446
      %v1448 = vrcp.pop %v1417
      %v1449 = vrcp.pop %v1419
      %v1450 = vrcp.pop %v1421
      %v1451 = vrcp.pop %v1423
      %v1452 = vrcp.pop %v1425
      %v1453 = vrcp.pop %v1427
      %v1454 = vrcp.pop %v1429
      %v1455 = vrcp.pop %v1431
      %v1456 = vrcp.pop %v1433
      %v1457 = vrcp.pop %v1435
      %v1458 = vrcp.pop %v1437
      %v1459 = vrcp.pop %v1439
      %v1460 = vrcp.pop %v1441
      %v1461 = vrcp.pop %v1443
      %v1462 = vrcp.pop %v1445
      %v1463 = vrcp.pop %v1447
      %v1464 = vmul.f32 %v1385, %v1448
      %v1465 = vmul.f32 %v1387, %v1449
      %v1466 = vmul.f32 %v1389, %v1450
      %v1467 = vmul.f32 %v1391, %v1451
      %v1468 = vmul.f32 %v1393, %v1452
      %v1469 = vmul.f32 %v1395, %v1453
      %v1470 = vmul.f32 %v1397, %v1454
      %v1471 = vmul.f32 %v1399, %v1455
      %v1472 = vmul.f32 %v1401, %v1456
      %v1473 = vmul.f32 %v1403, %v1457
      %v1474 = vmul.f32 %v1405, %v1458
      %v1475 = vmul.f32 %v1407, %v1459
      %v1476 = vmul.f32 %v1409, %v1460
      %v1477 = vmul.f32 %v1411, %v1461
      %v1478 = vmul.f32 %v1413, %v1462
      %v1479 = vmul.f32 %v1415, %v1463
      %v1480 = vpack.c.bf16 %v1465, %v1464
      %v1481 = vpack.c.bf16 %v1467, %v1466
      %v1482 = vpack.c.bf16 %v1469, %v1468
      %v1483 = vpack.c.bf16 %v1471, %v1470
      %v1484 = vpack.c.bf16 %v1473, %v1472
      %v1485 = vpack.c.bf16 %v1475, %v1474
      %v1486 = vpack.c.bf16 %v1477, %v1476
      %v1487 = vpack.c.bf16 %v1479, %v1478
      %v1488 = vld [vmem:[%s518] sm:$0xf]
      %v1489 = vld [vmem:[%s518 + $0x4] sm:$0xf]
      %v1490 = vld [vmem:[%s518 + $0x8] sm:$0xf]
      %v1491 = vld [vmem:[%s518 + $0xc] sm:$0xf]
      %v1492 = vld [vmem:[%s518 + $0x10] sm:$0xf]
      %v1493 = vld [vmem:[%s518 + $0x14] sm:$0xf]
      %v1494 = vld [vmem:[%s518 + $0x18] sm:$0xf]
      %v1495 = vld [vmem:[%s518 + $0x1c] sm:$0xf]
      %v1496 = vld [vmem:[%s518 + $0x20] sm:$0xf]
      %v1497 = vld [vmem:[%s518 + $0x24] sm:$0xf]
      %v1498 = vld [vmem:[%s518 + $0x28] sm:$0xf]
      %v1499 = vld [vmem:[%s518 + $0x2c] sm:$0xf]
      %v1500 = vld [vmem:[%s518 + $0x30] sm:$0xf]
      %v1501 = vld [vmem:[%s518 + $0x34] sm:$0xf]
      %v1502 = vld [vmem:[%s518 + $0x38] sm:$0xf]
      %v1503 = vld [vmem:[%s518 + $0x3c] sm:$0xf]
      %v1520 = vunpack.c.l.b16 %v1488
      %v1521 = vunpack.c.l.b16 %v1489
      %v1522 = vunpack.c.l.b16 %v1490
      %v1523 = vunpack.c.l.b16 %v1491
      %v1524 = vunpack.c.l.b16 %v1492
      %v1525 = vunpack.c.l.b16 %v1493
      %v1526 = vunpack.c.l.b16 %v1494
      %v1527 = vunpack.c.l.b16 %v1495
      %v1528 = vunpack.c.l.b16 %v1496
      %v1529 = vunpack.c.l.b16 %v1497
      %v1530 = vunpack.c.l.b16 %v1498
      %v1531 = vunpack.c.l.b16 %v1499
      %v1532 = vunpack.c.l.b16 %v1500
      %v1533 = vunpack.c.l.b16 %v1501
      %v1534 = vunpack.c.l.b16 %v1502
      %v1535 = vunpack.c.l.b16 %v1503
      %v1536 = vpack.c.b16 %v1521, %v1520
      %v1537 = vpack.c.b16 %v1523, %v1522
      %v1538 = vpack.c.b16 %v1525, %v1524
      %v1539 = vpack.c.b16 %v1527, %v1526
      %v1540 = vpack.c.b16 %v1529, %v1528
      %v1541 = vpack.c.b16 %v1531, %v1530
      %v1542 = vpack.c.b16 %v1533, %v1532
      %v1543 = vpack.c.b16 %v1535, %v1534
      %1552 = vmatprep.subr.bf16.mxu0 0
      %1553 = vmatpush1.bf16.msra.mxu0 %v1536
      %1554 = vmatprep.subr.bf16.mxu0 0
      %1555 = vmatpush1.bf16.msra.mxu0 %v1537
      %1556 = vmatprep.subr.bf16.mxu0 0
      %1557 = vmatpush1.bf16.msra.mxu0 %v1538
      %1558 = vmatprep.subr.bf16.mxu0 0
      %1559 = vmatpush1.bf16.msra.mxu0 %v1539
      %1560 = vmatprep.subr.bf16.mxu0 0
      %1561 = vmatpush1.bf16.msra.mxu0 %v1540
      %1562 = vmatprep.subr.bf16.mxu0 0
      %1563 = vmatpush1.bf16.msra.mxu0 %v1541
      %1564 = vmatprep.subr.bf16.mxu0 0
      %1565 = vmatpush1.bf16.msra.mxu0 %v1542
      %1566 = vmatprep.subr.bf16.mxu0 0
      %1567 = vmatpush1.bf16.msra.mxu0 %v1543
      %1568 = vmatprep.subr.bf16.mxu0 0
      %1569 = vmatpush1.bf16.msra.mxu0 0
      %1570 = vmatprep.subr.bf16.mxu0 0
      %1571 = vmatpush1.bf16.msra.mxu0 0
      %1572 = vmatprep.subr.bf16.mxu0 0
      %1573 = vmatpush1.bf16.msra.mxu0 0
      %1574 = vmatprep.subr.bf16.mxu0 0
      %1575 = vmatpush1.bf16.msra.mxu0 0
      %1576 = vmatprep.subr.bf16.mxu0 0
      %1577 = vmatpush1.bf16.msra.mxu0 0
      %1578 = vmatprep.subr.bf16.mxu0 0
      %1579 = vmatpush1.bf16.msra.mxu0 0
      %1580 = vmatprep.subr.bf16.mxu0 0
      %1581 = vmatpush1.bf16.msra.mxu0 0
      %1582 = vmatprep.subr.bf16.mxu0 0
      %1583 = vmatpush1.bf16.msra.mxu0 0
      %1584 = vmatprep.mubr.bf16.mxu0 0
      %1585 = vmatmul.mubr.bf16.gmra.mrb[0].mxu0 %v1480
      %v1586 = vpop.f32.mrb[0].mxu0
      %v1587 = vadd.f32 0.0, %v1586
      %v1588 = vpop.f32.mrb[0].mxu0
      %v1589 = vpop.f32.mrb[0].mxu0
      %v1590 = vadd.f32 0.0, %v1589
      %v1591 = vpop.f32.mrb[0].mxu0
      %1592 = vmatprep.mubr.bf16.mxu0 0
      %1593 = vmatmul.mubr.bf16.gmra.mrb[0].mxu0 %v1481
      %v1594 = vpop.f32.mrb[0].mxu0
      %v1595 = vadd.f32 0.0, %v1594
      %v1596 = vpop.f32.mrb[0].mxu0
      %v1597 = vpop.f32.mrb[0].mxu0
      %v1598 = vadd.f32 0.0, %v1597
      %v1599 = vpop.f32.mrb[0].mxu0
      %1600 = vmatprep.mubr.bf16.mxu0 0
      %1601 = vmatmul.mubr.bf16.gmra.mrb[0].mxu0 %v1482
      %v1602 = vpop.f32.mrb[0].mxu0
      %v1603 = vadd.f32 0.0, %v1602
      %v1604 = vpop.f32.mrb[0].mxu0
      %v1605 = vpop.f32.mrb[0].mxu0
      %v1606 = vadd.f32 0.0, %v1605
      %v1607 = vpop.f32.mrb[0].mxu0
      %1608 = vmatprep.mubr.bf16.mxu0 0
      %1609 = vmatmul.mubr.bf16.gmra.mrb[0].mxu0 %v1483
      %v1610 = vpop.f32.mrb[0].mxu0
      %v1611 = vadd.f32 0.0, %v1610
      %v1612 = vpop.f32.mrb[0].mxu0
      %v1613 = vpop.f32.mrb[0].mxu0
      %v1614 = vadd.f32 0.0, %v1613
      %v1615 = vpop.f32.mrb[0].mxu0
      %1616 = vmatprep.mubr.bf16.mxu0 0
      %1617 = vmatmul.mubr.bf16.gmra.mrb[0].mxu0 %v1484
      %v1618 = vpop.f32.mrb[0].mxu0
      %v1619 = vadd.f32 0.0, %v1618
      %v1620 = vpop.f32.mrb[0].mxu0
      %v1621 = vpop.f32.mrb[0].mxu0
      %v1622 = vadd.f32 0.0, %v1621
      %v1623 = vpop.f32.mrb[0].mxu0
      %1624 = vmatprep.mubr.bf16.mxu0 0
      %1625 = vmatmul.mubr.bf16.gmra.mrb[0].mxu0 %v1485
      %v1626 = vpop.f32.mrb[0].mxu0
      %v1627 = vadd.f32 0.0, %v1626
      %v1628 = vpop.f32.mrb[0].mxu0
      %v1629 = vpop.f32.mrb[0].mxu0
      %v1630 = vadd.f32 0.0, %v1629
      %v1631 = vpop.f32.mrb[0].mxu0
      %1632 = vmatprep.mubr.bf16.mxu0 0
      %1633 = vmatmul.mubr.bf16.gmra.mrb[0].mxu0 %v1486
      %v1634 = vpop.f32.mrb[0].mxu0
      %v1635 = vadd.f32 0.0, %v1634
      %v1636 = vpop.f32.mrb[0].mxu0
      %v1637 = vpop.f32.mrb[0].mxu0
      %v1638 = vadd.f32 0.0, %v1637
      %v1639 = vpop.f32.mrb[0].mxu0
      %1640 = vmatprep.mubr.bf16.mxu0 0
      %1641 = vmatmul.mubr.bf16.gmra.mrb[0].mxu0 %v1487
      %v1642 = vpop.f32.mrb[0].mxu0
      %v1643 = vadd.f32 0.0, %v1642
      %v1644 = vpop.f32.mrb[0].mxu0
      %v1645 = vpop.f32.mrb[0].mxu0
      %v1646 = vadd.f32 0.0, %v1645
      %v1647 = vpop.f32.mrb[0].mxu0
      %1648 = vdwg.mxu0
      %v1649 = vld [vmem:[%s8] sm:$0xff]
      %v1650 = vld [vmem:[%s8 + $0x8] sm:$0xff]
      %v1651 = vld [vmem:[%s8 + $0x10] sm:$0xff]
      %v1652 = vld [vmem:[%s8 + $0x18] sm:$0xff]
      %v1653 = vld [vmem:[%s8 + $0x20] sm:$0xff]
      %v1654 = vld [vmem:[%s8 + $0x28] sm:$0xff]
      %v1655 = vld [vmem:[%s8 + $0x30] sm:$0xff]
      %v1656 = vld [vmem:[%s8 + $0x38] sm:$0xff]
      %v1657 = vld [vmem:[%s9] sm:$0x1]
      %v1659 = vlaneseq
      %v1660 = vshrl.u32 %v1659, 7
      %v1661 = vsub.s32 0, %v1660
      %v1662 = vrot.slane %v1657, %v1661
      %v1665 = vsel %vm577, %v1587, 0
      %v1668 = vsel %vm577, %v1590, 0
      %v1671 = vsel %vm577, %v1595, 0
      %v1674 = vsel %vm577, %v1598, 0
      %v1677 = vsel %vm577, %v1603, 0
      %v1680 = vsel %vm577, %v1606, 0
      %v1683 = vsel %vm577, %v1611, 0
      %v1686 = vsel %vm577, %v1614, 0
      %v1689 = vsel %vm577, %v1619, 0
      %v1692 = vsel %vm577, %v1622, 0
      %v1695 = vsel %vm577, %v1627, 0
      %v1698 = vsel %vm577, %v1630, 0
      %v1701 = vsel %vm577, %v1635, 0
      %v1704 = vsel %vm577, %v1638, 0
      %v1707 = vsel %vm577, %v1643, 0
      %v1710 = vsel %vm577, %v1646, 0
      %1712 = vmatprep.subr.mxu0 0.0
      %1713 = vmatpush1.msra.mxu0 %v1649
      %1714 = vmatprep.subr.mxu0 0.0
      %1715 = vmatpush1.msra.mxu0 %v1650
      %1716 = vmatprep.subr.mxu0 0.0
      %1717 = vmatpush1.msra.mxu0 %v1651
      %1718 = vmatprep.subr.mxu0 0.0
      %1719 = vmatpush1.msra.mxu0 %v1652
      %1720 = vmatprep.subr.mxu0 0.0
      %1721 = vmatpush1.msra.mxu0 %v1653
      %1722 = vmatprep.subr.mxu0 0.0
      %1723 = vmatpush1.msra.mxu0 %v1654
      %1724 = vmatprep.subr.mxu0 0.0
      %1725 = vmatpush1.msra.mxu0 %v1655
      %1726 = vmatprep.subr.mxu0 0.0
      %1727 = vmatpush1.msra.mxu0 %v1656
      %1728 = vmatprep.subr.mxu0 0.0
      %1729 = vmatpush1.msra.mxu0 0.0
      %1730 = vmatprep.subr.mxu0 0.0
      %1731 = vmatpush1.msra.mxu0 0.0
      %1732 = vmatprep.subr.mxu0 0.0
      %1733 = vmatpush1.msra.mxu0 0.0
      %1734 = vmatprep.subr.mxu0 0.0
      %1735 = vmatpush1.msra.mxu0 0.0
      %1736 = vmatprep.subr.mxu0 0.0
      %1737 = vmatpush1.msra.mxu0 0.0
      %1738 = vmatprep.subr.mxu0 0.0
      %1739 = vmatpush1.msra.mxu0 0.0
      %1740 = vmatprep.subr.mxu0 0.0
      %1741 = vmatpush1.msra.mxu0 0.0
      %1742 = vmatprep.subr.mxu0 0.0
      %1743 = vmatpush1.msra.mxu0 0.0
      %1744 = vmatprep.subr.mxu0 0.0
      %1745 = vmatpush1.msra.mxu0 0.0
      %1746 = vmatprep.subr.mxu0 0.0
      %1747 = vmatpush1.msra.mxu0 0.0
      %1748 = vmatprep.subr.mxu0 0.0
      %1749 = vmatpush1.msra.mxu0 0.0
      %1750 = vmatprep.subr.mxu0 0.0
      %1751 = vmatpush1.msra.mxu0 0.0
      %1752 = vmatprep.subr.mxu0 0.0
      %1753 = vmatpush1.msra.mxu0 0.0
      %1754 = vmatprep.subr.mxu0 0.0
      %1755 = vmatpush1.msra.mxu0 0.0
      %1756 = vmatprep.subr.mxu0 0.0
      %1757 = vmatpush1.msra.mxu0 0.0
      %1758 = vmatprep.subr.mxu0 0.0
      %1759 = vmatpush1.msra.mxu0 0.0
      %1760 = vmatprep.subr.mxu0 0.0
      %1761 = vmatpush1.msra.mxu0 0.0
      %1762 = vmatprep.subr.mxu0 0.0
      %1763 = vmatpush1.msra.mxu0 0.0
      %1764 = vmatprep.subr.mxu0 0.0
      %1765 = vmatpush1.msra.mxu0 0.0
      %1766 = vmatprep.subr.mxu0 0.0
      %1767 = vmatpush1.msra.mxu0 0.0
      %1768 = vmatprep.subr.mxu0 0.0
      %1769 = vmatpush1.msra.mxu0 0.0
      %1770 = vmatprep.subr.mxu0 0.0
      %1771 = vmatpush1.msra.mxu0 0.0
      %1772 = vmatprep.subr.mxu0 0.0
      %1773 = vmatpush1.msra.mxu0 0.0
      %1774 = vmatprep.subr.mxu0 0.0
      %1775 = vmatpush1.msra.mxu0 0.0
      %1776 = vmatprep.mubr.f32.mxu0 0.0
      %1777 = vmatmul.mubr.f32.gmra.mrb[0].mxu0 %v1665
      %v1778 = vpop.f32.mrb[0].mxu0
      %v1779 = vadd.f32 %v1662, %v1778
      %v1780 = vpop.f32.mrb[0].mxu0
      %1781 = vmatprep.mubr.f32.mxu0 0.0
      %1782 = vmatmul.mubr.f32.gmra.mrb[0].mxu0 %v1668
      %v1783 = vpop.f32.mrb[0].mxu0
      %v1784 = vadd.f32 %v1662, %v1783
      %v1785 = vpop.f32.mrb[0].mxu0
      %1786 = vmatprep.mubr.f32.mxu0 0.0
      %1787 = vmatmul.mubr.f32.gmra.mrb[0].mxu0 %v1671
      %v1788 = vpop.f32.mrb[0].mxu0
      %v1789 = vadd.f32 %v1662, %v1788
      %v1790 = vpop.f32.mrb[0].mxu0
      %1791 = vmatprep.mubr.f32.mxu0 0.0
      %1792 = vmatmul.mubr.f32.gmra.mrb[0].mxu0 %v1674
      %v1793 = vpop.f32.mrb[0].mxu0
      %v1794 = vadd.f32 %v1662, %v1793
      %v1795 = vpop.f32.mrb[0].mxu0
      %1796 = vmatprep.mubr.f32.mxu0 0.0
      %1797 = vmatmul.mubr.f32.gmra.mrb[0].mxu0 %v1677
      %v1798 = vpop.f32.mrb[0].mxu0
      %v1799 = vadd.f32 %v1662, %v1798
      %v1800 = vpop.f32.mrb[0].mxu0
      %1801 = vmatprep.mubr.f32.mxu0 0.0
      %1802 = vmatmul.mubr.f32.gmra.mrb[0].mxu0 %v1680
      %v1803 = vpop.f32.mrb[0].mxu0
      %v1804 = vadd.f32 %v1662, %v1803
      %v1805 = vpop.f32.mrb[0].mxu0
      %1806 = vmatprep.mubr.f32.mxu0 0.0
      %1807 = vmatmul.mubr.f32.gmra.mrb[0].mxu0 %v1683
      %v1808 = vpop.f32.mrb[0].mxu0
      %v1809 = vadd.f32 %v1662, %v1808
      %v1810 = vpop.f32.mrb[0].mxu0
      %1811 = vmatprep.mubr.f32.mxu0 0.0
      %1812 = vmatmul.mubr.f32.gmra.mrb[0].mxu0 %v1686
      %v1813 = vpop.f32.mrb[0].mxu0
      %v1814 = vadd.f32 %v1662, %v1813
      %v1815 = vpop.f32.mrb[0].mxu0
      %1816 = vmatprep.mubr.f32.mxu0 0.0
      %1817 = vmatmul.mubr.f32.gmra.mrb[0].mxu0 %v1689
      %v1818 = vpop.f32.mrb[0].mxu0
      %v1819 = vadd.f32 %v1662, %v1818
      %v1820 = vpop.f32.mrb[0].mxu0
      %1821 = vmatprep.mubr.f32.mxu0 0.0
      %1822 = vmatmul.mubr.f32.gmra.mrb[0].mxu0 %v1692
      %v1823 = vpop.f32.mrb[0].mxu0
      %v1824 = vadd.f32 %v1662, %v1823
      %v1825 = vpop.f32.mrb[0].mxu0
      %1826 = vmatprep.mubr.f32.mxu0 0.0
      %1827 = vmatmul.mubr.f32.gmra.mrb[0].mxu0 %v1695
      %v1828 = vpop.f32.mrb[0].mxu0
      %v1829 = vadd.f32 %v1662, %v1828
      %v1830 = vpop.f32.mrb[0].mxu0
      %1831 = vmatprep.mubr.f32.mxu0 0.0
      %1832 = vmatmul.mubr.f32.gmra.mrb[0].mxu0 %v1698
      %v1833 = vpop.f32.mrb[0].mxu0
      %v1834 = vadd.f32 %v1662, %v1833
      %v1835 = vpop.f32.mrb[0].mxu0
      %1836 = vmatprep.mubr.f32.mxu0 0.0
      %1837 = vmatmul.mubr.f32.gmra.mrb[0].mxu0 %v1701
      %v1838 = vpop.f32.mrb[0].mxu0
      %v1839 = vadd.f32 %v1662, %v1838
      %v1840 = vpop.f32.mrb[0].mxu0
      %1841 = vmatprep.mubr.f32.mxu0 0.0
      %1842 = vmatmul.mubr.f32.gmra.mrb[0].mxu0 %v1704
      %v1843 = vpop.f32.mrb[0].mxu0
      %v1844 = vadd.f32 %v1662, %v1843
      %v1845 = vpop.f32.mrb[0].mxu0
      %1846 = vmatprep.mubr.f32.mxu0 0.0
      %1847 = vmatmul.mubr.f32.gmra.mrb[0].mxu0 %v1707
      %v1848 = vpop.f32.mrb[0].mxu0
      %v1849 = vadd.f32 %v1662, %v1848
      %v1850 = vpop.f32.mrb[0].mxu0
      %1851 = vmatprep.mubr.f32.mxu0 0.0
      %1852 = vmatmul.mubr.f32.gmra.mrb[0].mxu0 %v1710
      %v1853 = vpop.f32.mrb[0].mxu0
      %v1854 = vadd.f32 %v1662, %v1853
      %v1855 = vpop.f32.mrb[0].mxu0
      %1856 = vdwg.mxu0
      %v1857 = vld [vmem:[%s10] sm:$0xff]
      %v1858 = vld [vmem:[%s10 + $0x8] sm:$0xff]
      %v1859 = vld [vmem:[%s10 + $0x10] sm:$0xff]
      %v1860 = vld [vmem:[%s10 + $0x18] sm:$0xff]
      %v1861 = vld [vmem:[%s10 + $0x20] sm:$0xff]
      %v1862 = vld [vmem:[%s10 + $0x28] sm:$0xff]
      %v1863 = vld [vmem:[%s10 + $0x30] sm:$0xff]
      %v1864 = vld [vmem:[%s10 + $0x38] sm:$0xff]
      %v1865 = vld [vmem:[%s11] sm:$0x1]
      %v1867 = vlaneseq
      %v1868 = vshrl.u32 %v1867, 7
      %v1869 = vsub.s32 0, %v1868
      %v1870 = vrot.slane %v1865, %v1869
      %1872 = vrot.lane.b32.xlu0 %v1587, 64
      %v1873 = vpop.permute.xlu0 %1872
      %1874 = vrot.lane.b32.xlu0 %v1590, 64
      %v1875 = vpop.permute.xlu0 %1874
      %1876 = vrot.lane.b32.xlu0 %v1595, 64
      %v1877 = vpop.permute.xlu0 %1876
      %1878 = vrot.lane.b32.xlu0 %v1598, 64
      %v1879 = vpop.permute.xlu0 %1878
      %1880 = vrot.lane.b32.xlu0 %v1603, 64
      %v1881 = vpop.permute.xlu0 %1880
      %1882 = vrot.lane.b32.xlu0 %v1606, 64
      %v1883 = vpop.permute.xlu0 %1882
      %1884 = vrot.lane.b32.xlu0 %v1611, 64
      %v1885 = vpop.permute.xlu0 %1884
      %1886 = vrot.lane.b32.xlu0 %v1614, 64
      %v1887 = vpop.permute.xlu0 %1886
      %1888 = vrot.lane.b32.xlu0 %v1619, 64
      %v1889 = vpop.permute.xlu0 %1888
      %1890 = vrot.lane.b32.xlu0 %v1622, 64
      %v1891 = vpop.permute.xlu0 %1890
      %1892 = vrot.lane.b32.xlu0 %v1627, 64
      %v1893 = vpop.permute.xlu0 %1892
      %1894 = vrot.lane.b32.xlu0 %v1630, 64
      %v1895 = vpop.permute.xlu0 %1894
      %1896 = vrot.lane.b32.xlu0 %v1635, 64
      %v1897 = vpop.permute.xlu0 %1896
      %1898 = vrot.lane.b32.xlu0 %v1638, 64
      %v1899 = vpop.permute.xlu0 %1898
      %1900 = vrot.lane.b32.xlu0 %v1643, 64
      %v1901 = vpop.permute.xlu0 %1900
      %1902 = vrot.lane.b32.xlu0 %v1646, 64
      %v1903 = vpop.permute.xlu0 %1902
      %v1904 = vsel %vm577, %v1873, 0
      %v1906 = vsel %vm577, %v1875, 0
      %v1908 = vsel %vm577, %v1877, 0
      %v1910 = vsel %vm577, %v1879, 0
      %v1912 = vsel %vm577, %v1881, 0
      %v1914 = vsel %vm577, %v1883, 0
      %v1916 = vsel %vm577, %v1885, 0
      %v1918 = vsel %vm577, %v1887, 0
      %v1920 = vsel %vm577, %v1889, 0
      %v1922 = vsel %vm577, %v1891, 0
      %v1924 = vsel %vm577, %v1893, 0
      %v1926 = vsel %vm577, %v1895, 0
      %v1928 = vsel %vm577, %v1897, 0
      %v1930 = vsel %vm577, %v1899, 0
      %v1932 = vsel %vm577, %v1901, 0
      %v1934 = vsel %vm577, %v1903, 0
      %1936 = vmatprep.subr.mxu0 0.0
      %1937 = vmatpush1.msra.mxu0 %v1857
      %1938 = vmatprep.subr.mxu0 0.0
      %1939 = vmatpush1.msra.mxu0 %v1858
      %1940 = vmatprep.subr.mxu0 0.0
      %1941 = vmatpush1.msra.mxu0 %v1859
      %1942 = vmatprep.subr.mxu0 0.0
      %1943 = vmatpush1.msra.mxu0 %v1860
      %1944 = vmatprep.subr.mxu0 0.0
      %1945 = vmatpush1.msra.mxu0 %v1861
      %1946 = vmatprep.subr.mxu0 0.0
      %1947 = vmatpush1.msra.mxu0 %v1862
      %1948 = vmatprep.subr.mxu0 0.0
      %1949 = vmatpush1.msra.mxu0 %v1863
      %1950 = vmatprep.subr.mxu0 0.0
      %1951 = vmatpush1.msra.mxu0 %v1864
      %1952 = vmatprep.subr.mxu0 0.0
      %1953 = vmatpush1.msra.mxu0 0.0
      %1954 = vmatprep.subr.mxu0 0.0
      %1955 = vmatpush1.msra.mxu0 0.0
      %1956 = vmatprep.subr.mxu0 0.0
      %1957 = vmatpush1.msra.mxu0 0.0
      %1958 = vmatprep.subr.mxu0 0.0
      %1959 = vmatpush1.msra.mxu0 0.0
      %1960 = vmatprep.subr.mxu0 0.0
      %1961 = vmatpush1.msra.mxu0 0.0
      %1962 = vmatprep.subr.mxu0 0.0
      %1963 = vmatpush1.msra.mxu0 0.0
      %1964 = vmatprep.subr.mxu0 0.0
      %1965 = vmatpush1.msra.mxu0 0.0
      %1966 = vmatprep.subr.mxu0 0.0
      %1967 = vmatpush1.msra.mxu0 0.0
      %1968 = vmatprep.subr.mxu0 0.0
      %1969 = vmatpush1.msra.mxu0 0.0
      %1970 = vmatprep.subr.mxu0 0.0
      %1971 = vmatpush1.msra.mxu0 0.0
      %1972 = vmatprep.subr.mxu0 0.0
      %1973 = vmatpush1.msra.mxu0 0.0
      %1974 = vmatprep.subr.mxu0 0.0
      %1975 = vmatpush1.msra.mxu0 0.0
      %1976 = vmatprep.subr.mxu0 0.0
      %1977 = vmatpush1.msra.mxu0 0.0
      %1978 = vmatprep.subr.mxu0 0.0
      %1979 = vmatpush1.msra.mxu0 0.0
      %1980 = vmatprep.subr.mxu0 0.0
      %1981 = vmatpush1.msra.mxu0 0.0
      %1982 = vmatprep.subr.mxu0 0.0
      %1983 = vmatpush1.msra.mxu0 0.0
      %1984 = vmatprep.subr.mxu0 0.0
      %1985 = vmatpush1.msra.mxu0 0.0
      %1986 = vmatprep.subr.mxu0 0.0
      %1987 = vmatpush1.msra.mxu0 0.0
      %1988 = vmatprep.subr.mxu0 0.0
      %1989 = vmatpush1.msra.mxu0 0.0
      %1990 = vmatprep.subr.mxu0 0.0
      %1991 = vmatpush1.msra.mxu0 0.0
      %1992 = vmatprep.subr.mxu0 0.0
      %1993 = vmatpush1.msra.mxu0 0.0
      %1994 = vmatprep.subr.mxu0 0.0
      %1995 = vmatpush1.msra.mxu0 0.0
      %1996 = vmatprep.subr.mxu0 0.0
      %1997 = vmatpush1.msra.mxu0 0.0
      %1998 = vmatprep.subr.mxu0 0.0
      %1999 = vmatpush1.msra.mxu0 0.0
      %2000 = vmatprep.mubr.f32.mxu0 0.0
      %2001 = vmatmul.mubr.f32.gmra.mrb[0].mxu0 %v1904
      %v2002 = vpop.f32.mrb[0].mxu0
      %v2003 = vadd.f32 %v1870, %v2002
      %v2004 = vpop.f32.mrb[0].mxu0
      %2005 = vmatprep.mubr.f32.mxu0 0.0
      %2006 = vmatmul.mubr.f32.gmra.mrb[0].mxu0 %v1906
      %v2007 = vpop.f32.mrb[0].mxu0
      %v2008 = vadd.f32 %v1870, %v2007
      %v2009 = vpop.f32.mrb[0].mxu0
      %2010 = vmatprep.mubr.f32.mxu0 0.0
      %2011 = vmatmul.mubr.f32.gmra.mrb[0].mxu0 %v1908
      %v2012 = vpop.f32.mrb[0].mxu0
      %v2013 = vadd.f32 %v1870, %v2012
      %v2014 = vpop.f32.mrb[0].mxu0
      %2015 = vmatprep.mubr.f32.mxu0 0.0
      %2016 = vmatmul.mubr.f32.gmra.mrb[0].mxu0 %v1910
      %v2017 = vpop.f32.mrb[0].mxu0
      %v2018 = vadd.f32 %v1870, %v2017
      %v2019 = vpop.f32.mrb[0].mxu0
      %2020 = vmatprep.mubr.f32.mxu0 0.0
      %2021 = vmatmul.mubr.f32.gmra.mrb[0].mxu0 %v1912
      %v2022 = vpop.f32.mrb[0].mxu0
      %v2023 = vadd.f32 %v1870, %v2022
      %v2024 = vpop.f32.mrb[0].mxu0
      %2025 = vmatprep.mubr.f32.mxu0 0.0
      %2026 = vmatmul.mubr.f32.gmra.mrb[0].mxu0 %v1914
      %v2027 = vpop.f32.mrb[0].mxu0
      %v2028 = vadd.f32 %v1870, %v2027
      %v2029 = vpop.f32.mrb[0].mxu0
      %2030 = vmatprep.mubr.f32.mxu0 0.0
      %2031 = vmatmul.mubr.f32.gmra.mrb[0].mxu0 %v1916
      %v2032 = vpop.f32.mrb[0].mxu0
      %v2033 = vadd.f32 %v1870, %v2032
      %v2034 = vpop.f32.mrb[0].mxu0
      %2035 = vmatprep.mubr.f32.mxu0 0.0
      %2036 = vmatmul.mubr.f32.gmra.mrb[0].mxu0 %v1918
      %v2037 = vpop.f32.mrb[0].mxu0
      %v2038 = vadd.f32 %v1870, %v2037
      %v2039 = vpop.f32.mrb[0].mxu0
      %2040 = vmatprep.mubr.f32.mxu0 0.0
      %2041 = vmatmul.mubr.f32.gmra.mrb[0].mxu0 %v1920
      %v2042 = vpop.f32.mrb[0].mxu0
      %v2043 = vadd.f32 %v1870, %v2042
      %v2044 = vpop.f32.mrb[0].mxu0
      %2045 = vmatprep.mubr.f32.mxu0 0.0
      %2046 = vmatmul.mubr.f32.gmra.mrb[0].mxu0 %v1922
      %v2047 = vpop.f32.mrb[0].mxu0
      %v2048 = vadd.f32 %v1870, %v2047
      %v2049 = vpop.f32.mrb[0].mxu0
      %2050 = vmatprep.mubr.f32.mxu0 0.0
      %2051 = vmatmul.mubr.f32.gmra.mrb[0].mxu0 %v1924
      %v2052 = vpop.f32.mrb[0].mxu0
      %v2053 = vadd.f32 %v1870, %v2052
      %v2054 = vpop.f32.mrb[0].mxu0
      %2055 = vmatprep.mubr.f32.mxu0 0.0
      %2056 = vmatmul.mubr.f32.gmra.mrb[0].mxu0 %v1926
      %v2057 = vpop.f32.mrb[0].mxu0
      %v2058 = vadd.f32 %v1870, %v2057
      %v2059 = vpop.f32.mrb[0].mxu0
      %2060 = vmatprep.mubr.f32.mxu0 0.0
      %2061 = vmatmul.mubr.f32.gmra.mrb[0].mxu0 %v1928
      %v2062 = vpop.f32.mrb[0].mxu0
      %v2063 = vadd.f32 %v1870, %v2062
      %v2064 = vpop.f32.mrb[0].mxu0
      %2065 = vmatprep.mubr.f32.mxu0 0.0
      %2066 = vmatmul.mubr.f32.gmra.mrb[0].mxu0 %v1930
      %v2067 = vpop.f32.mrb[0].mxu0
      %v2068 = vadd.f32 %v1870, %v2067
      %v2069 = vpop.f32.mrb[0].mxu0
      %2070 = vmatprep.mubr.f32.mxu0 0.0
      %2071 = vmatmul.mubr.f32.gmra.mrb[0].mxu0 %v1932
      %v2072 = vpop.f32.mrb[0].mxu0
      %v2073 = vadd.f32 %v1870, %v2072
      %v2074 = vpop.f32.mrb[0].mxu0
      %2075 = vmatprep.mubr.f32.mxu0 0.0
      %2076 = vmatmul.mubr.f32.gmra.mrb[0].mxu0 %v1934
      %v2077 = vpop.f32.mrb[0].mxu0
      %v2078 = vadd.f32 %v1870, %v2077
      %v2079 = vpop.f32.mrb[0].mxu0
      %2080 = vdwg.mxu0
      %2097 = vrot.lane.b32.xlu0 %v2003, 64
      %v2098 = vpop.permute.xlu0 %2097
      %2099 = vrot.lane.b32.xlu0 %v2008, 64
      %v2100 = vpop.permute.xlu0 %2099
      %2101 = vrot.lane.b32.xlu0 %v2013, 64
      %v2102 = vpop.permute.xlu0 %2101
      %2103 = vrot.lane.b32.xlu0 %v2018, 64
      %v2104 = vpop.permute.xlu0 %2103
      %2105 = vrot.lane.b32.xlu0 %v2023, 64
      %v2106 = vpop.permute.xlu0 %2105
      %2107 = vrot.lane.b32.xlu0 %v2028, 64
      %v2108 = vpop.permute.xlu0 %2107
      %2109 = vrot.lane.b32.xlu0 %v2033, 64
      %v2110 = vpop.permute.xlu0 %2109
      %2111 = vrot.lane.b32.xlu0 %v2038, 64
      %v2112 = vpop.permute.xlu0 %2111
      %2113 = vrot.lane.b32.xlu0 %v2043, 64
      %v2114 = vpop.permute.xlu0 %2113
      %2115 = vrot.lane.b32.xlu0 %v2048, 64
      %v2116 = vpop.permute.xlu0 %2115
      %2117 = vrot.lane.b32.xlu0 %v2053, 64
      %v2118 = vpop.permute.xlu0 %2117
      %2119 = vrot.lane.b32.xlu0 %v2058, 64
      %v2120 = vpop.permute.xlu0 %2119
      %2121 = vrot.lane.b32.xlu0 %v2063, 64
      %v2122 = vpop.permute.xlu0 %2121
      %2123 = vrot.lane.b32.xlu0 %v2068, 64
      %v2124 = vpop.permute.xlu0 %2123
      %2125 = vrot.lane.b32.xlu0 %v2073, 64
      %v2126 = vpop.permute.xlu0 %2125
      %2127 = vrot.lane.b32.xlu0 %v2078, 64
      %v2128 = vpop.permute.xlu0 %2127
      %v2145 = vsel %vm577, %v1779, %v2098
      %v2146 = vsel %vm577, %v1784, %v2100
      %v2147 = vsel %vm577, %v1789, %v2102
      %v2148 = vsel %vm577, %v1794, %v2104
      %v2149 = vsel %vm577, %v1799, %v2106
      %v2150 = vsel %vm577, %v1804, %v2108
      %v2151 = vsel %vm577, %v1809, %v2110
      %v2152 = vsel %vm577, %v1814, %v2112
      %v2153 = vsel %vm577, %v1819, %v2114
      %v2154 = vsel %vm577, %v1824, %v2116
      %v2155 = vsel %vm577, %v1829, %v2118
      %v2156 = vsel %vm577, %v1834, %v2120
      %v2157 = vsel %vm577, %v1839, %v2122
      %v2158 = vsel %vm577, %v1844, %v2124
      %v2159 = vsel %vm577, %v1849, %v2126
      %v2160 = vsel %vm577, %v1854, %v2128
      %2161 = vst [vmem:[%s527] sm:$0xff] %v2145
      %2162 = vst [vmem:[%s527 + $0x8] sm:$0xff] %v2146
      %2163 = vst [vmem:[%s527 + $0x10] sm:$0xff] %v2147
      %2164 = vst [vmem:[%s527 + $0x18] sm:$0xff] %v2148
      %2165 = vst [vmem:[%s527 + $0x20] sm:$0xff] %v2149
      %2166 = vst [vmem:[%s527 + $0x28] sm:$0xff] %v2150
      %2167 = vst [vmem:[%s527 + $0x30] sm:$0xff] %v2151
      %2168 = vst [vmem:[%s527 + $0x38] sm:$0xff] %v2152
      %2169 = vst [vmem:[%s527 + $0x40] sm:$0xff] %v2153
      %2170 = vst [vmem:[%s527 + $0x48] sm:$0xff] %v2154
      %2171 = vst [vmem:[%s527 + $0x50] sm:$0xff] %v2155
      %2172 = vst [vmem:[%s527 + $0x58] sm:$0xff] %v2156
      %2173 = vst [vmem:[%s527 + $0x60] sm:$0xff] %v2157
      %2174 = vst [vmem:[%s527 + $0x68] sm:$0xff] %v2158
      %2175 = vst [vmem:[%s527 + $0x70] sm:$0xff] %v2159
      %2176 = vst [vmem:[%s527 + $0x78] sm:$0xff] %v2160
      %s2177 = smul.u32 16, %s28
      %p2178 = scmp.lt.s32.totalorder %s27, 1
      %s2179 = scalar_select %p2178, %s27, 1
      %p2180 = scmp.lt.s32.totalorder %s2177, 31
      %s2181 = scalar_select %p2180, %s2177, 31
      %s2182 = smul.addr %s2179, 32
      %s2183 = sadd.s32 %s2181, %s2182
      %s2184 = smul.addr %s2183, 8
      %s2185 = scalar_lea.vmem %s12, %s2184
      // Predicated region
      $region69: #{acm_forward.3} parent=67 // pred_check
        %p2186 = pneg %p331
      $region70: #{acm_forward.3} parent=67 // pred_check_branch
        %2188 = sbr.rel (%p2186) target = $region72
      $region71: #{acm_forward.3} parent=67 // pred_region
        %s2189 = smul.u32 16, %s28
      $region72: #{acm_forward.3} parent=67 // pred_fallthru
        _
    $region68: #{acm_forward.3} parent=5 // pred_fallthru
      _
    %p2190 = scmp.le.s32.totalorder 2, %s18
    // Predicated region
    $region73: #{acm_forward.3} parent=5 // pred_check
      %p2191 = pneg %p2190
    $region74: #{acm_forward.3} parent=5 // pred_check_branch
      %2193 = sbr.rel (%p2191) target = $region76
    $region75: #{acm_forward.3} parent=5 // pred_region
      %s2194 = ssub.s32 %s18, 2
      // Predicated region
      $region77: #{acm_forward.3} parent=75 // pred_check
        %p2195 = pneg %p337
      $region78: #{acm_forward.3} parent=75 // pred_check_branch
        %2197 = sbr.rel (%p2195) target = $region80
      $region79: #{acm_forward.3} parent=75 // pred_region
        %s2198 = smul.u32 16, %s30
        %p2199 = scmp.lt.s32.totalorder %s29, 1
        %s2200 = scalar_select %p2199, %s29, 1
        %p2201 = scmp.lt.s32.totalorder %s2198, 31
        %s2202 = scalar_select %p2201, %s2198, 31
        %s2203 = smul.addr %s2200, 32
        %s2204 = sadd.s32 %s2202, %s2203
        %s2205 = smul.addr %s2204, 8
        %s2206 = scalar_lea.vmem %s12, %s2205
      $region80: #{acm_forward.3} parent=75 // pred_fallthru
        _
    $region76: #{acm_forward.3} parent=5 // pred_fallthru
      _
  $region6: #{acm_forward.3} parent=0 // loop_footer
    %s22 = sadd.s32 1, %s18
  $region7: #{acm_forward.3} parent=0 // loop_footer_branch
    %17 = sbr.rel target = $region3
  $region8: #{acm_forward.3} parent=0 // loop_exit
    _

</llo_original>
